<compile_context>
chip_gen: v5e
topology: v5e:2x2
jax: 0.10.0
libtpu: 0.0.40
codegen_flags: <defaults>
</compile_context>

<pallas_src>
import jax
import jax.numpy as jnp
from jax.experimental import pallas as pl
from jax.experimental.pallas import tpu as pltpu

FIN_OUT = 16
FEATURE_GROUPS = [("shooting", 2), ("turnover", 2), ("rebounding", 2),
                  ("defense", 3), ("ft_foul", 3), ("game_control", 4)]
TOTAL_IN = sum(n for _, n in FEATURE_GROUPS)   # 16 raw features per team
D_MODEL = FIN_OUT * len(FEATURE_GROUPS)        # 96 (logical d_model)
D_PAD = 128                                    # lane-padded d_model
D_FF = 2048                                    # nn.TransformerEncoderLayer default
N_LAYERS = 2
HIDDEN = (128, 64)
H0 = HIDDEN[0]                                 # 128, already lane aligned
H1P = 128                                      # HIDDEN[1]=64 padded to 128
LN_EPS = 1e-5

# ---- packed-bias row layout: one (16,128) f32 array instead of 15 operands --
_ROW_FIN_B = 0
def _layer_rows(l):            # battn, ln1_g, ln1_b, b2, ln2_g, ln2_b
    return 1 + 6 * l
_ROW_CB1 = 1 + 6 * N_LAYERS    # 13
_ROW_CB2 = _ROW_CB1 + 1        # 14
_ROW_CB3 = _ROW_CB1 + 2        # 15
_N_BIAS_ROWS = _ROW_CB3 + 1    # 16


# ----------------------------- kernel ---------------------------------------
def match_outcome_kernel(xa_ref, xb_ref,
                         fin_w_ref, wattn_ref, w1_ref, w2_ref,
                         cw1a_ref, cw1b_ref, cw2_ref, cw3_ref,
                         bias_ref, b1_ref, out_ref):
    f32, bf16 = jnp.float32, jnp.bfloat16
    tb = xa_ref.shape[0]

    # Lane mask for the 96 real d_model lanes; padded lanes stay exactly zero
    # through FIN / attention / FFN / LayerNorm (weights & biases zero-padded).
    lane = jax.lax.broadcasted_iota(jnp.int32, (1, D_PAD), 1)
    mask = (lane < D_MODEL).astype(f32)
    inv_d = 1.0 / D_MODEL

    def brow(r):                               # (1, 128) f32 bias row
        return bias_ref[r:r + 1, :]

    def mm(x, w):                              # bf16 MXU matmul, f32 accumulate
        return jnp.dot(x.astype(bf16), w, preferred_element_type=f32)

    def layernorm(x, g, b):
        # x is zero in lanes >= D_MODEL; normalize over the 96 real lanes only.
        mu = jnp.sum(x, axis=-1, keepdims=True) * inv_d
        xc = (x - mu) * mask
        var = jnp.sum(xc * xc, axis=-1, keepdims=True) * inv_d
        return xc * jax.lax.rsqrt(var + LN_EPS) * g + b

    # Stack both teams: one pass through FIN + encoder (shared weights).
    # TODO(synk): FIN is not defined in the reference source; modeled as a
    # per-group Linear + ReLU fused into one block-diagonal matmul.
    x = jnp.concatenate([xa_ref[...], xb_ref[...]], axis=0)            # (2tb, 16)
    x = jnp.maximum(mm(x, fin_w_ref[...]) + brow(_ROW_FIN_B), 0.0)     # (2tb, 128)

    # Post-norm TransformerEncoder, inference (dropout = identity).
    for l in range(N_LAYERS):
        r = _layer_rows(l)
        # seq_len == 1 -> softmax over one key == 1; MHA == out_proj(v_proj(x)),
        # with Wv@Wo / bv@Wo+bo pre-fused into wattn / battn.
        sa = mm(x, wattn_ref[l]) + brow(r)
        x = layernorm(x + sa, brow(r + 1), brow(r + 2))
        h = jnp.maximum(mm(x, w1_ref[l]) + b1_ref[l], 0.0)
        ff = mm(h, w2_ref[l]) + brow(r + 3)
        x = layernorm(x + ff, brow(r + 4), brow(r + 5))

    ea, eb = x[:tb], x[tb:]                                            # split teams
    # Classifier: concat([ea, eb]) folded into split first-layer weights;
    # HIDDEN[1] and the 1-wide output are lane-padded to 128 (zeros) so every
    # matmul / store is lane-dense.
    h = jnp.maximum(mm(ea, cw1a_ref[...]) + mm(eb, cw1b_ref[...])
                    + brow(_ROW_CB1), 0.0)
    h = jnp.maximum(mm(h, cw2_ref[...]) + brow(_ROW_CB2), 0.0)
    out_ref[...] = mm(h, cw3_ref[...]) + brow(_ROW_CB3)                # (tb, 128)


# ----------------------------- wrapper ---------------------------------------
def _round_up(n, m):
    return ((n + m - 1) // m) * m


def match_outcome_transformer(xa, xb, kp, *, batch_tile=128):
    """xa, xb: (B, 16) f32 concatenated raw features. Returns (B, 1) f32."""
    B = xa.shape[0]
    tb = min(batch_tile, _round_up(B, 8))
    b_pad = _round_up(B, tb)
    if b_pad != B:
        xa = jnp.pad(xa, ((0, b_pad - B), (0, 0)))
        xb = jnp.pad(xb, ((0, b_pad - B), (0, 0)))

    weights = (kp["fin_w"], kp["wattn"], kp["w1"], kp["w2"],
               kp["cw1a"], kp["cw1b"], kp["cw2"], kp["cw3"],
               kp["bias_pack"], kp["b1_pack"])

    act_spec = pl.BlockSpec((tb, TOTAL_IN), lambda i: (i, 0))

    def resident(arr):   # full weight, constant index_map -> stays VMEM-resident
        return pl.BlockSpec(arr.shape, lambda i, _n=arr.ndim: (0,) * _n)

    rows = 2 * b_pad
    mm_flops = (rows * 2 * (TOTAL_IN * D_PAD
                            + N_LAYERS * (D_PAD * D_PAD + 2 * D_PAD * D_FF))
                + b_pad * 2 * (2 * D_PAD * H0 + H0 * H1P + H1P * D_PAD))
    bytes_accessed = (sum(int(w.nbytes) for w in weights)
                      + int(xa.nbytes) + int(xb.nbytes) + b_pad * D_PAD * 4)
    cost = pl.CostEstimate(flops=int(mm_flops),
                           transcendentals=int(rows * 2 * N_LAYERS),
                           bytes_accessed=int(bytes_accessed))

    out = pl.pallas_call(
        match_outcome_kernel,
        out_shape=jax.ShapeDtypeStruct((b_pad, D_PAD), jnp.float32),
        grid=(b_pad // tb,),
        in_specs=[act_spec, act_spec] + [resident(w) for w in weights],
        out_specs=pl.BlockSpec((tb, D_PAD), lambda i: (i, 0)),
        compiler_params=pltpu.CompilerParams(
            dimension_semantics=("parallel",)),
        cost_estimate=cost,
    )(xa, xb, *weights)
    return out[:B, :1]


# --------------------- parameter construction / prep -------------------------
def init_params(key):
    """Original-layout f32 parameters (source of truth for the reference)."""
    ks = iter(jax.random.split(key, 64))

    def w(shape, scale=0.05):
        return scale * jax.random.normal(next(ks), shape, jnp.float32)

    fin_w = jnp.zeros((TOTAL_IN, D_MODEL), jnp.float32)
    off = 0
    for i, (_, n) in enumerate(FEATURE_GROUPS):
        blk = w((n, FIN_OUT), 0.3)
        fin_w = fin_w.at[off:off + n, i * FIN_OUT:(i + 1) * FIN_OUT].set(blk)
        off += n
    return dict(
        fin_w=fin_w, fin_b=w((1, D_MODEL), 0.1),
        wv=w((N_LAYERS, D_MODEL, D_MODEL)), bv=w((N_LAYERS, 1, D_MODEL), 0.01),
        wo=w((N_LAYERS, D_MODEL, D_MODEL)), bo=w((N_LAYERS, 1, D_MODEL), 0.01),
        ln1_g=jnp.ones((N_LAYERS, 1, D_MODEL), jnp.float32),
        ln1_b=jnp.zeros((N_LAYERS, 1, D_MODEL), jnp.float32),
        w1=w((N_LAYERS, D_MODEL, D_FF)), b1=w((N_LAYERS, 1, D_FF), 0.01),
        w2=w((N_LAYERS, D_FF, D_MODEL), 0.02), b2=w((N_LAYERS, 1, D_MODEL), 0.01),
        ln2_g=jnp.ones((N_LAYERS, 1, D_MODEL), jnp.float32),
        ln2_b=jnp.zeros((N_LAYERS, 1, D_MODEL), jnp.float32),
        cw1a=w((D_MODEL, HIDDEN[0])), cw1b=w((D_MODEL, HIDDEN[0])),
        cb1=w((1, HIDDEN[0]), 0.01),
        cw2=w((HIDDEN[0], HIDDEN[1])), cb2=w((1, HIDDEN[1]), 0.01),
        cw3=w((HIDDEN[1], 1)), cb3=w((1, 1), 0.01),
    )


def prepare_kernel_params(p):
    """Fuse Wv@Wo, zero-pad to lane-dense shapes, cast weights to bf16, and
    pack the small bias / LayerNorm-affine vectors into one array."""
    f32, bf16 = jnp.float32, jnp.bfloat16

    def pad_to(a, shape):
        pads = [(0, t - s) for s, t in zip(a.shape, shape)]
        return jnp.pad(a, pads)

    # attention fusion: (x @ Wv + bv) @ Wo + bo == x @ (Wv@Wo) + (bv@Wo + bo)
    wattn = jnp.einsum("lij,ljk->lik", p["wv"], p["wo"])              # (L,96,96)
    battn = jnp.einsum("lij,ljk->lik", p["bv"], p["wo"]) + p["bo"]    # (L,1,96)

    kp = dict(
        fin_w=pad_to(p["fin_w"], (TOTAL_IN, D_PAD)).astype(bf16),
        wattn=pad_to(wattn, (N_LAYERS, D_PAD, D_PAD)).astype(bf16),
        w1=pad_to(p["w1"], (N_LAYERS, D_PAD, D_FF)).astype(bf16),
        w2=pad_to(p["w2"], (N_LAYERS, D_FF, D_PAD)).astype(bf16),
        cw1a=pad_to(p["cw1a"], (D_PAD, H0)).astype(bf16),
        cw1b=pad_to(p["cw1b"], (D_PAD, H0)).astype(bf16),
        cw2=pad_to(p["cw2"], (H0, H1P)).astype(bf16),
        cw3=pad_to(p["cw3"], (H1P, D_PAD)).astype(bf16),
        b1_pack=p["b1"].astype(f32),                                  # (L,1,2048)
    )

    def row(v):                                       # (1,k) -> (1,128) f32
        return pad_to(v.astype(f32), (1, D_PAD))

    rows = [row(p["fin_b"])]
    for l in range(N_LAYERS):
        rows += [row(battn[l]), row(p["ln1_g"][l]), row(p["ln1_b"][l]),
                 row(p["b2"][l]), row(p["ln2_g"][l]), row(p["ln2_b"][l])]
    rows += [row(p["cb1"]), row(p["cb2"]), row(p["cb3"])]
    kp["bias_pack"] = jnp.concatenate(rows, axis=0)                   # (16,128)
    assert kp["bias_pack"].shape == (_N_BIAS_ROWS, D_PAD)
    return kp


# ----------------------------- reference -------------------------------------
def reference(xa, xb, p):
    """Pure-JAX f32 reference of the original (unfused, unpadded) math."""
    def fin(x):
        return jnp.maximum(x @ p["fin_w"] + p["fin_b"], 0.0)

    def ln(x, g, b):
        mu = x.mean(-1, keepdims=True)
        var = ((x - mu) ** 2).mean(-1, keepdims=True)
        return (x - mu) / jnp.sqrt(var + LN_EPS) * g + b

    def enc(x):
        for l in range(N_LAYERS):
            sa = (x @ p["wv"][l] + p["bv"][l]) @ p["wo"][l] + p["bo"][l]
            x = ln(x + sa, p["ln1_g"][l], p["ln1_b"][l])
            ff = jnp.maximum(x @ p["w1"][l] + p["b1"][l], 0.0) @ p["w2"][l] + p["b2"][l]
            x = ln(x + ff, p["ln2_g"][l], p["ln2_b"][l])
        return x

    ea, eb = enc(fin(xa)), enc(fin(xb))
    h = jnp.maximum(ea @ p["cw1a"] + eb @ p["cw1b"] + p["cb1"], 0.0)
    h = jnp.maximum(h @ p["cw2"] + p["cb2"], 0.0)
    return h @ p["cw3"] + p["cb3"]


# ------------------------------- main -----------------------------------------
if __name__ == "__main__":
    key = jax.random.PRNGKey(0)
    k_par, k_a, k_b = jax.random.split(key, 3)
    params = init_params(k_par)
    kparams = prepare_kernel_params(params)

    B = 8

    def make_inputs(k):
        ks = jax.random.split(k, len(FEATURE_GROUPS))
        return {name: jax.random.normal(kk, (B, n), jnp.float32)
                for (name, n), kk in zip(FEATURE_GROUPS, ks)}

    inputs_team_a = make_inputs(k_a)
    inputs_team_b = make_inputs(k_b)

    # Glue: concatenate per-group raw features (same order as the ModuleDict);
    # the per-group FIN linears are realized as one block-diagonal weight.
    xa = jnp.concatenate([inputs_team_a[n] for n, _ in FEATURE_GROUPS], axis=-1)
    xb = jnp.concatenate([inputs_team_b[n] for n, _ in FEATURE_GROUPS], axis=-1)

    out = match_outcome_transformer(xa, xb, kparams)
    jax.block_until_ready(out)

    ref = reference(xa, xb, params)
    assert out.shape == (B, 1), out.shape
    # bf16 weights + fused Wv@Wo vs. pure-f32 reference: allow ~1-2% mismatch.
    assert jnp.allclose(out, ref, rtol=2e-2, atol=2e-2), (out, ref)
    print("KERNEL_OK")
</pallas_src>

<mosaic_0001>
module attributes {stable_mosaic.version = 11 : i64} {
  func.func @match_outcome_kernel(%arg0: i32, %arg1: memref<8x16xf32, #tpu.memory_space<vmem>>, %arg2: memref<8x16xf32, #tpu.memory_space<vmem>>, %arg3: memref<16x128xbf16, #tpu.memory_space<vmem>>, %arg4: memref<2x128x128xbf16, #tpu.memory_space<vmem>>, %arg5: memref<2x128x2048xbf16, #tpu.memory_space<vmem>>, %arg6: memref<2x2048x128xbf16, #tpu.memory_space<vmem>>, %arg7: memref<128x128xbf16, #tpu.memory_space<vmem>>, %arg8: memref<128x128xbf16, #tpu.memory_space<vmem>>, %arg9: memref<128x128xbf16, #tpu.memory_space<vmem>>, %arg10: memref<128x128xbf16, #tpu.memory_space<vmem>>, %arg11: memref<16x128xf32, #tpu.memory_space<vmem>>, %arg12: memref<2x1x2048xf32, #tpu.memory_space<vmem>>, %arg13: memref<8x128xf32, #tpu.memory_space<vmem>>) attributes {dimension_semantics = [#tpu.dimension_semantics<parallel>], iteration_bounds = array<i64: 1>, scalar_prefetch = 0 : i64, scratch_operands = 0 : i64, tpu.core_type = #tpu.core_type<tc>, window_params = [{transform_indices = @transform_0, window_bounds = array<i64: 8, 16>}, {transform_indices = @transform_1, window_bounds = array<i64: 8, 16>}, {pipeline_mode = #tpu.pipeline_mode<synchronous>, transform_indices = @transform_2, window_bounds = array<i64: 16, 128>}, {pipeline_mode = #tpu.pipeline_mode<synchronous>, transform_indices = @transform_3, window_bounds = array<i64: 2, 128, 128>}, {pipeline_mode = #tpu.pipeline_mode<synchronous>, transform_indices = @transform_4, window_bounds = array<i64: 2, 128, 2048>}, {pipeline_mode = #tpu.pipeline_mode<synchronous>, transform_indices = @transform_5, window_bounds = array<i64: 2, 2048, 128>}, {pipeline_mode = #tpu.pipeline_mode<synchronous>, transform_indices = @transform_6, window_bounds = array<i64: 128, 128>}, {pipeline_mode = #tpu.pipeline_mode<synchronous>, transform_indices = @transform_7, window_bounds = array<i64: 128, 128>}, {pipeline_mode = #tpu.pipeline_mode<synchronous>, transform_indices = @transform_8, window_bounds = array<i64: 128, 128>}, {pipeline_mode = #tpu.pipeline_mode<synchronous>, transform_indices = @transform_9, window_bounds = array<i64: 128, 128>}, {pipeline_mode = #tpu.pipeline_mode<synchronous>, transform_indices = @transform_10, window_bounds = array<i64: 16, 128>}, {pipeline_mode = #tpu.pipeline_mode<synchronous>, transform_indices = @transform_11, window_bounds = array<i64: 2, 1, 2048>}, {transform_indices = @transform_12, window_bounds = array<i64: 8, 128>}]} {
    %0 = tpu.iota {dimensions = array<i32: 1>} : vector<1x128xi32>
    %c96_i32 = arith.constant 96 : i32
    %1 = vector.broadcast %c96_i32 : i32 to vector<1x128xi32>
    %2 = arith.cmpi slt, %0, %1 : vector<1x128xi32>
    %3 = arith.extui %2 : vector<1x128xi1> to vector<1x128xi32>
    %4 = arith.sitofp %3 : vector<1x128xi32> to vector<1x128xf32>
    %c0 = arith.constant 0 : index
    %c0_0 = arith.constant 0 : index
    %5 = vector.load %arg1[%c0, %c0_0] : memref<8x16xf32, #tpu.memory_space<vmem>>, vector<8x16xf32>
    %c0_1 = arith.constant 0 : index
    %c0_2 = arith.constant 0 : index
    %6 = vector.load %arg2[%c0_1, %c0_2] : memref<8x16xf32, #tpu.memory_space<vmem>>, vector<8x16xf32>
    %7 = tpu.concatenate %5, %6 in 0 : vector<8x16xf32>, vector<8x16xf32> -> vector<16x16xf32>
    %c0_3 = arith.constant 0 : index
    %c0_4 = arith.constant 0 : index
    %8 = vector.load %arg3[%c0_3, %c0_4] : memref<16x128xbf16, #tpu.memory_space<vmem>>, vector<16x128xbf16>
    %9 = arith.truncf %7 : vector<16x16xf32> to vector<16x16xbf16>
    %cst = arith.constant dense<0.000000e+00> : vector<16x128xf32>
    %10 = tpu.matmul %9, %8, %cst {dimension_numbers = #tpu.dot_dimension_numbers<[1], [0], [0], [1], [0, 0, 1, 1], [], []>} : vector<16x16xbf16>, vector<16x128xbf16>, vector<16x128xf32> -> vector<16x128xf32>
    %c0_5 = arith.constant 0 : index
    %c0_6 = arith.constant 0 : index
    %11 = vector.load %arg11[%c0_5, %c0_6] : memref<16x128xf32, #tpu.memory_space<vmem>>, vector<1x128xf32>
    %12 = vector.broadcast %11 : vector<1x128xf32> to vector<16x128xf32>
    %13 = arith.addf %10, %12 : vector<16x128xf32>
    %cst_7 = arith.constant 0.000000e+00 : f32
    %14 = vector.broadcast %cst_7 : f32 to vector<16x128xf32>
    %15 = arith.maximumf %13, %14 : vector<16x128xf32>
    %c0_8 = arith.constant 0 : index
    %c0_9 = arith.constant 0 : index
    %c0_10 = arith.constant 0 : index
    %16 = vector.load %arg4[%c0_8, %c0_9, %c0_10] : memref<2x128x128xbf16, #tpu.memory_space<vmem>>, vector<1x128x128xbf16>
    %17 = vector.shape_cast %16 : vector<1x128x128xbf16> to vector<128x128xbf16>
    %18 = arith.truncf %15 : vector<16x128xf32> to vector<16x128xbf16>
    %cst_11 = arith.constant dense<0.000000e+00> : vector<16x128xf32>
    %19 = tpu.matmul %18, %17, %cst_11 {dimension_numbers = #tpu.dot_dimension_numbers<[1], [0], [0], [1], [0, 0, 1, 1], [], []>} : vector<16x128xbf16>, vector<128x128xbf16>, vector<16x128xf32> -> vector<16x128xf32>
    %c1 = arith.constant 1 : index
    %c0_12 = arith.constant 0 : index
    %20 = vector.load %arg11[%c1, %c0_12] : memref<16x128xf32, #tpu.memory_space<vmem>>, vector<1x128xf32>
    %21 = vector.broadcast %20 : vector<1x128xf32> to vector<16x128xf32>
    %22 = arith.addf %19, %21 : vector<16x128xf32>
    %23 = arith.addf %15, %22 : vector<16x128xf32>
    %c2 = arith.constant 2 : index
    %c0_13 = arith.constant 0 : index
    %24 = vector.load %arg11[%c2, %c0_13] : memref<16x128xf32, #tpu.memory_space<vmem>>, vector<1x128xf32>
    %c3 = arith.constant 3 : index
    %c0_14 = arith.constant 0 : index
    %25 = vector.load %arg11[%c3, %c0_14] : memref<16x128xf32, #tpu.memory_space<vmem>>, vector<1x128xf32>
    %cst_15 = arith.constant dense<0.000000e+00> : vector<16xf32>
    %26 = vector.multi_reduction <add>, %23, %cst_15 [1] : vector<16x128xf32> to vector<16xf32>
    %27 = vector.shape_cast %26 : vector<16xf32> to vector<16x1xf32>
    %cst_16 = arith.constant 0.010416667 : f32
    %28 = vector.broadcast %cst_16 : f32 to vector<16x1xf32>
    %29 = arith.mulf %27, %28 : vector<16x1xf32>
    %30 = vector.broadcast %29 : vector<16x1xf32> to vector<16x128xf32>
    %31 = arith.subf %23, %30 : vector<16x128xf32>
    %32 = vector.broadcast %4 : vector<1x128xf32> to vector<16x128xf32>
    %33 = arith.mulf %31, %32 : vector<16x128xf32>
    %34 = arith.mulf %33, %33 : vector<16x128xf32>
    %cst_17 = arith.constant dense<0.000000e+00> : vector<16xf32>
    %35 = vector.multi_reduction <add>, %34, %cst_17 [1] : vector<16x128xf32> to vector<16xf32>
    %36 = vector.shape_cast %35 : vector<16xf32> to vector<16x1xf32>
    %cst_18 = arith.constant 0.010416667 : f32
    %37 = vector.broadcast %cst_18 : f32 to vector<16x1xf32>
    %38 = arith.mulf %36, %37 : vector<16x1xf32>
    %cst_19 = arith.constant 9.99999974E-6 : f32
    %39 = vector.broadcast %cst_19 : f32 to vector<16x1xf32>
    %40 = arith.addf %38, %39 : vector<16x1xf32>
    %41 = math.rsqrt %40 : vector<16x1xf32>
    %42 = vector.broadcast %41 : vector<16x1xf32> to vector<16x128xf32>
    %43 = arith.mulf %33, %42 : vector<16x128xf32>
    %44 = vector.broadcast %24 : vector<1x128xf32> to vector<16x128xf32>
    %45 = arith.mulf %43, %44 : vector<16x128xf32>
    %46 = vector.broadcast %25 : vector<1x128xf32> to vector<16x128xf32>
    %47 = arith.addf %45, %46 : vector<16x128xf32>
    %c0_20 = arith.constant 0 : index
    %c0_21 = arith.constant 0 : index
    %c0_22 = arith.constant 0 : index
    %48 = vector.load %arg5[%c0_20, %c0_21, %c0_22] : memref<2x128x2048xbf16, #tpu.memory_space<vmem>>, vector<1x128x2048xbf16>
    %49 = vector.shape_cast %48 : vector<1x128x2048xbf16> to vector<128x2048xbf16>
    %50 = arith.truncf %47 : vector<16x128xf32> to vector<16x128xbf16>
    %cst_23 = arith.constant dense<0.000000e+00> : vector<16x2048xf32>
    %51 = tpu.matmul %50, %49, %cst_23 {dimension_numbers = #tpu.dot_dimension_numbers<[1], [0], [0], [1], [0, 0, 1, 1], [], []>} : vector<16x128xbf16>, vector<128x2048xbf16>, vector<16x2048xf32> -> vector<16x2048xf32>
    %c0_24 = arith.constant 0 : index
    %c0_25 = arith.constant 0 : index
    %c0_26 = arith.constant 0 : index
    %52 = vector.load %arg12[%c0_24, %c0_25, %c0_26] : memref<2x1x2048xf32, #tpu.memory_space<vmem>>, vector<1x1x2048xf32>
    %53 = vector.shape_cast %52 : vector<1x1x2048xf32> to vector<1x2048xf32>
    %54 = vector.broadcast %53 : vector<1x2048xf32> to vector<16x2048xf32>
    %55 = arith.addf %51, %54 : vector<16x2048xf32>
    %cst_27 = arith.constant 0.000000e+00 : f32
    %56 = vector.broadcast %cst_27 : f32 to vector<16x2048xf32>
    %57 = arith.maximumf %55, %56 : vector<16x2048xf32>
    %c0_28 = arith.constant 0 : index
    %c0_29 = arith.constant 0 : index
    %c0_30 = arith.constant 0 : index
    %58 = vector.load %arg6[%c0_28, %c0_29, %c0_30] : memref<2x2048x128xbf16, #tpu.memory_space<vmem>>, vector<1x2048x128xbf16>
    %59 = vector.shape_cast %58 : vector<1x2048x128xbf16> to vector<2048x128xbf16>
    %60 = arith.truncf %57 : vector<16x2048xf32> to vector<16x2048xbf16>
    %cst_31 = arith.constant dense<0.000000e+00> : vector<16x128xf32>
    %61 = tpu.matmul %60, %59, %cst_31 {dimension_numbers = #tpu.dot_dimension_numbers<[1], [0], [0], [1], [0, 0, 1, 1], [], []>} : vector<16x2048xbf16>, vector<2048x128xbf16>, vector<16x128xf32> -> vector<16x128xf32>
    %c4 = arith.constant 4 : index
    %c0_32 = arith.constant 0 : index
    %62 = vector.load %arg11[%c4, %c0_32] : memref<16x128xf32, #tpu.memory_space<vmem>>, vector<1x128xf32>
    %63 = vector.broadcast %62 : vector<1x128xf32> to vector<16x128xf32>
    %64 = arith.addf %61, %63 : vector<16x128xf32>
    %65 = arith.addf %47, %64 : vector<16x128xf32>
    %c5 = arith.constant 5 : index
    %c0_33 = arith.constant 0 : index
    %66 = vector.load %arg11[%c5, %c0_33] : memref<16x128xf32, #tpu.memory_space<vmem>>, vector<1x128xf32>
    %c6 = arith.constant 6 : index
    %c0_34 = arith.constant 0 : index
    %67 = vector.load %arg11[%c6, %c0_34] : memref<16x128xf32, #tpu.memory_space<vmem>>, vector<1x128xf32>
    %cst_35 = arith.constant dense<0.000000e+00> : vector<16xf32>
    %68 = vector.multi_reduction <add>, %65, %cst_35 [1] : vector<16x128xf32> to vector<16xf32>
    %69 = vector.shape_cast %68 : vector<16xf32> to vector<16x1xf32>
    %cst_36 = arith.constant 0.010416667 : f32
    %70 = vector.broadcast %cst_36 : f32 to vector<16x1xf32>
    %71 = arith.mulf %69, %70 : vector<16x1xf32>
    %72 = vector.broadcast %71 : vector<16x1xf32> to vector<16x128xf32>
    %73 = arith.subf %65, %72 : vector<16x128xf32>
    %74 = vector.broadcast %4 : vector<1x128xf32> to vector<16x128xf32>
    %75 = arith.mulf %73, %74 : vector<16x128xf32>
    %76 = arith.mulf %75, %75 : vector<16x128xf32>
    %cst_37 = arith.constant dense<0.000000e+00> : vector<16xf32>
    %77 = vector.multi_reduction <add>, %76, %cst_37 [1] : vector<16x128xf32> to vector<16xf32>
    %78 = vector.shape_cast %77 : vector<16xf32> to vector<16x1xf32>
    %cst_38 = arith.constant 0.010416667 : f32
    %79 = vector.broadcast %cst_38 : f32 to vector<16x1xf32>
    %80 = arith.mulf %78, %79 : vector<16x1xf32>
    %cst_39 = arith.constant 9.99999974E-6 : f32
    %81 = vector.broadcast %cst_39 : f32 to vector<16x1xf32>
    %82 = arith.addf %80, %81 : vector<16x1xf32>
    %83 = math.rsqrt %82 : vector<16x1xf32>
    %84 = vector.broadcast %83 : vector<16x1xf32> to vector<16x128xf32>
    %85 = arith.mulf %75, %84 : vector<16x128xf32>
    %86 = vector.broadcast %66 : vector<1x128xf32> to vector<16x128xf32>
    %87 = arith.mulf %85, %86 : vector<16x128xf32>
    %88 = vector.broadcast %67 : vector<1x128xf32> to vector<16x128xf32>
    %89 = arith.addf %87, %88 : vector<16x128xf32>
    %c1_40 = arith.constant 1 : index
    %c0_41 = arith.constant 0 : index
    %c0_42 = arith.constant 0 : index
    %90 = vector.load %arg4[%c1_40, %c0_41, %c0_42] : memref<2x128x128xbf16, #tpu.memory_space<vmem>>, vector<1x128x128xbf16>
    %91 = vector.shape_cast %90 : vector<1x128x128xbf16> to vector<128x128xbf16>
    %92 = arith.truncf %89 : vector<16x128xf32> to vector<16x128xbf16>
    %cst_43 = arith.constant dense<0.000000e+00> : vector<16x128xf32>
    %93 = tpu.matmul %92, %91, %cst_43 {dimension_numbers = #tpu.dot_dimension_numbers<[1], [0], [0], [1], [0, 0, 1, 1], [], []>} : vector<16x128xbf16>, vector<128x128xbf16>, vector<16x128xf32> -> vector<16x128xf32>
    %c7 = arith.constant 7 : index
    %c0_44 = arith.constant 0 : index
    %94 = vector.load %arg11[%c7, %c0_44] : memref<16x128xf32, #tpu.memory_space<vmem>>, vector<1x128xf32>
    %95 = vector.broadcast %94 : vector<1x128xf32> to vector<16x128xf32>
    %96 = arith.addf %93, %95 : vector<16x128xf32>
    %97 = arith.addf %89, %96 : vector<16x128xf32>
    %c8 = arith.constant 8 : index
    %c0_45 = arith.constant 0 : index
    %98 = vector.load %arg11[%c8, %c0_45] : memref<16x128xf32, #tpu.memory_space<vmem>>, vector<1x128xf32>
    %c9 = arith.constant 9 : index
    %c0_46 = arith.constant 0 : index
    %99 = vector.load %arg11[%c9, %c0_46] : memref<16x128xf32, #tpu.memory_space<vmem>>, vector<1x128xf32>
    %cst_47 = arith.constant dense<0.000000e+00> : vector<16xf32>
    %100 = vector.multi_reduction <add>, %97, %cst_47 [1] : vector<16x128xf32> to vector<16xf32>
    %101 = vector.shape_cast %100 : vector<16xf32> to vector<16x1xf32>
    %cst_48 = arith.constant 0.010416667 : f32
    %102 = vector.broadcast %cst_48 : f32 to vector<16x1xf32>
    %103 = arith.mulf %101, %102 : vector<16x1xf32>
    %104 = vector.broadcast %103 : vector<16x1xf32> to vector<16x128xf32>
    %105 = arith.subf %97, %104 : vector<16x128xf32>
    %106 = vector.broadcast %4 : vector<1x128xf32> to vector<16x128xf32>
    %107 = arith.mulf %105, %106 : vector<16x128xf32>
    %108 = arith.mulf %107, %107 : vector<16x128xf32>
    %cst_49 = arith.constant dense<0.000000e+00> : vector<16xf32>
    %109 = vector.multi_reduction <add>, %108, %cst_49 [1] : vector<16x128xf32> to vector<16xf32>
    %110 = vector.shape_cast %109 : vector<16xf32> to vector<16x1xf32>
    %cst_50 = arith.constant 0.010416667 : f32
    %111 = vector.broadcast %cst_50 : f32 to vector<16x1xf32>
    %112 = arith.mulf %110, %111 : vector<16x1xf32>
    %cst_51 = arith.constant 9.99999974E-6 : f32
    %113 = vector.broadcast %cst_51 : f32 to vector<16x1xf32>
    %114 = arith.addf %112, %113 : vector<16x1xf32>
    %115 = math.rsqrt %114 : vector<16x1xf32>
    %116 = vector.broadcast %115 : vector<16x1xf32> to vector<16x128xf32>
    %117 = arith.mulf %107, %116 : vector<16x128xf32>
    %118 = vector.broadcast %98 : vector<1x128xf32> to vector<16x128xf32>
    %119 = arith.mulf %117, %118 : vector<16x128xf32>
    %120 = vector.broadcast %99 : vector<1x128xf32> to vector<16x128xf32>
    %121 = arith.addf %119, %120 : vector<16x128xf32>
    %c1_52 = arith.constant 1 : index
    %c0_53 = arith.constant 0 : index
    %c0_54 = arith.constant 0 : index
    %122 = vector.load %arg5[%c1_52, %c0_53, %c0_54] : memref<2x128x2048xbf16, #tpu.memory_space<vmem>>, vector<1x128x2048xbf16>
    %123 = vector.shape_cast %122 : vector<1x128x2048xbf16> to vector<128x2048xbf16>
    %124 = arith.truncf %121 : vector<16x128xf32> to vector<16x128xbf16>
    %cst_55 = arith.constant dense<0.000000e+00> : vector<16x2048xf32>
    %125 = tpu.matmul %124, %123, %cst_55 {dimension_numbers = #tpu.dot_dimension_numbers<[1], [0], [0], [1], [0, 0, 1, 1], [], []>} : vector<16x128xbf16>, vector<128x2048xbf16>, vector<16x2048xf32> -> vector<16x2048xf32>
    %c1_56 = arith.constant 1 : index
    %c0_57 = arith.constant 0 : index
    %c0_58 = arith.constant 0 : index
    %126 = vector.load %arg12[%c1_56, %c0_57, %c0_58] : memref<2x1x2048xf32, #tpu.memory_space<vmem>>, vector<1x1x2048xf32>
    %127 = vector.shape_cast %126 : vector<1x1x2048xf32> to vector<1x2048xf32>
    %128 = vector.broadcast %127 : vector<1x2048xf32> to vector<16x2048xf32>
    %129 = arith.addf %125, %128 : vector<16x2048xf32>
    %cst_59 = arith.constant 0.000000e+00 : f32
    %130 = vector.broadcast %cst_59 : f32 to vector<16x2048xf32>
    %131 = arith.maximumf %129, %130 : vector<16x2048xf32>
    %c1_60 = arith.constant 1 : index
    %c0_61 = arith.constant 0 : index
    %c0_62 = arith.constant 0 : index
    %132 = vector.load %arg6[%c1_60, %c0_61, %c0_62] : memref<2x2048x128xbf16, #tpu.memory_space<vmem>>, vector<1x2048x128xbf16>
    %133 = vector.shape_cast %132 : vector<1x2048x128xbf16> to vector<2048x128xbf16>
    %134 = arith.truncf %131 : vector<16x2048xf32> to vector<16x2048xbf16>
    %cst_63 = arith.constant dense<0.000000e+00> : vector<16x128xf32>
    %135 = tpu.matmul %134, %133, %cst_63 {dimension_numbers = #tpu.dot_dimension_numbers<[1], [0], [0], [1], [0, 0, 1, 1], [], []>} : vector<16x2048xbf16>, vector<2048x128xbf16>, vector<16x128xf32> -> vector<16x128xf32>
    %c10 = arith.constant 10 : index
    %c0_64 = arith.constant 0 : index
    %136 = vector.load %arg11[%c10, %c0_64] : memref<16x128xf32, #tpu.memory_space<vmem>>, vector<1x128xf32>
    %137 = vector.broadcast %136 : vector<1x128xf32> to vector<16x128xf32>
    %138 = arith.addf %135, %137 : vector<16x128xf32>
    %139 = arith.addf %121, %138 : vector<16x128xf32>
    %c11 = arith.constant 11 : index
    %c0_65 = arith.constant 0 : index
    %140 = vector.load %arg11[%c11, %c0_65] : memref<16x128xf32, #tpu.memory_space<vmem>>, vector<1x128xf32>
    %c12 = arith.constant 12 : index
    %c0_66 = arith.constant 0 : index
    %141 = vector.load %arg11[%c12, %c0_66] : memref<16x128xf32, #tpu.memory_space<vmem>>, vector<1x128xf32>
    %cst_67 = arith.constant dense<0.000000e+00> : vector<16xf32>
    %142 = vector.multi_reduction <add>, %139, %cst_67 [1] : vector<16x128xf32> to vector<16xf32>
    %143 = vector.shape_cast %142 : vector<16xf32> to vector<16x1xf32>
    %cst_68 = arith.constant 0.010416667 : f32
    %144 = vector.broadcast %cst_68 : f32 to vector<16x1xf32>
    %145 = arith.mulf %143, %144 : vector<16x1xf32>
    %146 = vector.broadcast %145 : vector<16x1xf32> to vector<16x128xf32>
    %147 = arith.subf %139, %146 : vector<16x128xf32>
    %148 = vector.broadcast %4 : vector<1x128xf32> to vector<16x128xf32>
    %149 = arith.mulf %147, %148 : vector<16x128xf32>
    %150 = arith.mulf %149, %149 : vector<16x128xf32>
    %cst_69 = arith.constant dense<0.000000e+00> : vector<16xf32>
    %151 = vector.multi_reduction <add>, %150, %cst_69 [1] : vector<16x128xf32> to vector<16xf32>
    %152 = vector.shape_cast %151 : vector<16xf32> to vector<16x1xf32>
    %cst_70 = arith.constant 0.010416667 : f32
    %153 = vector.broadcast %cst_70 : f32 to vector<16x1xf32>
    %154 = arith.mulf %152, %153 : vector<16x1xf32>
    %cst_71 = arith.constant 9.99999974E-6 : f32
    %155 = vector.broadcast %cst_71 : f32 to vector<16x1xf32>
    %156 = arith.addf %154, %155 : vector<16x1xf32>
    %157 = math.rsqrt %156 : vector<16x1xf32>
    %158 = vector.broadcast %157 : vector<16x1xf32> to vector<16x128xf32>
    %159 = arith.mulf %149, %158 : vector<16x128xf32>
    %160 = vector.broadcast %140 : vector<1x128xf32> to vector<16x128xf32>
    %161 = arith.mulf %159, %160 : vector<16x128xf32>
    %162 = vector.broadcast %141 : vector<1x128xf32> to vector<16x128xf32>
    %163 = arith.addf %161, %162 : vector<16x128xf32>
    %164 = vector.extract_strided_slice %163 {offsets = [0, 0], sizes = [8, 128], strides = [1, 1]} : vector<16x128xf32> to vector<8x128xf32>
    %165 = vector.extract_strided_slice %163 {offsets = [8, 0], sizes = [8, 128], strides = [1, 1]} : vector<16x128xf32> to vector<8x128xf32>
    %c0_72 = arith.constant 0 : index
    %c0_73 = arith.constant 0 : index
    %166 = vector.load %arg7[%c0_72, %c0_73] : memref<128x128xbf16, #tpu.memory_space<vmem>>, vector<128x128xbf16>
    %167 = arith.truncf %164 : vector<8x128xf32> to vector<8x128xbf16>
    %cst_74 = arith.constant dense<0.000000e+00> : vector<8x128xf32>
    %168 = tpu.matmul %167, %166, %cst_74 {dimension_numbers = #tpu.dot_dimension_numbers<[1], [0], [0], [1], [0, 0, 1, 1], [], []>} : vector<8x128xbf16>, vector<128x128xbf16>, vector<8x128xf32> -> vector<8x128xf32>
    %c0_75 = arith.constant 0 : index
    %c0_76 = arith.constant 0 : index
    %169 = vector.load %arg8[%c0_75, %c0_76] : memref<128x128xbf16, #tpu.memory_space<vmem>>, vector<128x128xbf16>
    %170 = arith.truncf %165 : vector<8x128xf32> to vector<8x128xbf16>
    %cst_77 = arith.constant dense<0.000000e+00> : vector<8x128xf32>
    %171 = tpu.matmul %170, %169, %cst_77 {dimension_numbers = #tpu.dot_dimension_numbers<[1], [0], [0], [1], [0, 0, 1, 1], [], []>} : vector<8x128xbf16>, vector<128x128xbf16>, vector<8x128xf32> -> vector<8x128xf32>
    %172 = arith.addf %168, %171 : vector<8x128xf32>
    %c13 = arith.constant 13 : index
    %c0_78 = arith.constant 0 : index
    %173 = vector.load %arg11[%c13, %c0_78] : memref<16x128xf32, #tpu.memory_space<vmem>>, vector<1x128xf32>
    %174 = vector.broadcast %173 : vector<1x128xf32> to vector<8x128xf32>
    %175 = arith.addf %172, %174 : vector<8x128xf32>
    %cst_79 = arith.constant 0.000000e+00 : f32
    %176 = vector.broadcast %cst_79 : f32 to vector<8x128xf32>
    %177 = arith.maximumf %175, %176 : vector<8x128xf32>
    %c0_80 = arith.constant 0 : index
    %c0_81 = arith.constant 0 : index
    %178 = vector.load %arg9[%c0_80, %c0_81] : memref<128x128xbf16, #tpu.memory_space<vmem>>, vector<128x128xbf16>
    %179 = arith.truncf %177 : vector<8x128xf32> to vector<8x128xbf16>
    %cst_82 = arith.constant dense<0.000000e+00> : vector<8x128xf32>
    %180 = tpu.matmul %179, %178, %cst_82 {dimension_numbers = #tpu.dot_dimension_numbers<[1], [0], [0], [1], [0, 0, 1, 1], [], []>} : vector<8x128xbf16>, vector<128x128xbf16>, vector<8x128xf32> -> vector<8x128xf32>
    %c14 = arith.constant 14 : index
    %c0_83 = arith.constant 0 : index
    %181 = vector.load %arg11[%c14, %c0_83] : memref<16x128xf32, #tpu.memory_space<vmem>>, vector<1x128xf32>
    %182 = vector.broadcast %181 : vector<1x128xf32> to vector<8x128xf32>
    %183 = arith.addf %180, %182 : vector<8x128xf32>
    %cst_84 = arith.constant 0.000000e+00 : f32
    %184 = vector.broadcast %cst_84 : f32 to vector<8x128xf32>
    %185 = arith.maximumf %183, %184 : vector<8x128xf32>
    %c0_85 = arith.constant 0 : index
    %c0_86 = arith.constant 0 : index
    %186 = vector.load %arg10[%c0_85, %c0_86] : memref<128x128xbf16, #tpu.memory_space<vmem>>, vector<128x128xbf16>
    %187 = arith.truncf %185 : vector<8x128xf32> to vector<8x128xbf16>
    %cst_87 = arith.constant dense<0.000000e+00> : vector<8x128xf32>
    %188 = tpu.matmul %187, %186, %cst_87 {dimension_numbers = #tpu.dot_dimension_numbers<[1], [0], [0], [1], [0, 0, 1, 1], [], []>} : vector<8x128xbf16>, vector<128x128xbf16>, vector<8x128xf32> -> vector<8x128xf32>
    %c15 = arith.constant 15 : index
    %c0_88 = arith.constant 0 : index
    %189 = vector.load %arg11[%c15, %c0_88] : memref<16x128xf32, #tpu.memory_space<vmem>>, vector<1x128xf32>
    %190 = vector.broadcast %189 : vector<1x128xf32> to vector<8x128xf32>
    %191 = arith.addf %188, %190 : vector<8x128xf32>
    %c0_89 = arith.constant 0 : index
    %c0_90 = arith.constant 0 : index
    %192 = vector.load %arg13[%c0_89, %c0_90] : memref<8x128xf32, #tpu.memory_space<vmem>>, vector<8x128xf32>
    tpu.vector_store %arg13[%c0_89, %c0_90], %191 {strides = array<i32>} : memref<8x128xf32, #tpu.memory_space<vmem>>, vector<8x128xf32>,
    return
  }
  func.func @transform_0(%arg0: i32) -> (i32, i32) {
    %c0_i32 = arith.constant 0 : i32
    %c0_i32_0 = arith.constant 0 : i32
    return %arg0, %c0_i32 : i32, i32
  }
  func.func @transform_1(%arg0: i32) -> (i32, i32) {
    %c0_i32 = arith.constant 0 : i32
    %c0_i32_0 = arith.constant 0 : i32
    return %arg0, %c0_i32 : i32, i32
  }
  func.func @transform_2(%arg0: i32) -> (i32, i32) {
    %c0_i32 = arith.constant 0 : i32
    %c0_i32_0 = arith.constant 0 : i32
    %c0_i32_1 = arith.constant 0 : i32
    return %c0_i32, %c0_i32_0 : i32, i32
  }
  func.func @transform_3(%arg0: i32) -> (i32, i32, i32) {
    %c0_i32 = arith.constant 0 : i32
    %c0_i32_0 = arith.constant 0 : i32
    %c0_i32_1 = arith.constant 0 : i32
    %c0_i32_2 = arith.constant 0 : i32
    return %c0_i32, %c0_i32_0, %c0_i32_1 : i32, i32, i32
  }
  func.func @transform_4(%arg0: i32) -> (i32, i32, i32) {
    %c0_i32 = arith.constant 0 : i32
    %c0_i32_0 = arith.constant 0 : i32
    %c0_i32_1 = arith.constant 0 : i32
    %c0_i32_2 = arith.constant 0 : i32
    return %c0_i32, %c0_i32_0, %c0_i32_1 : i32, i32, i32
  }
  func.func @transform_5(%arg0: i32) -> (i32, i32, i32) {
    %c0_i32 = arith.constant 0 : i32
    %c0_i32_0 = arith.constant 0 : i32
    %c0_i32_1 = arith.constant 0 : i32
    %c0_i32_2 = arith.constant 0 : i32
    return %c0_i32, %c0_i32_0, %c0_i32_1 : i32, i32, i32
  }
  func.func @transform_6(%arg0: i32) -> (i32, i32) {
    %c0_i32 = arith.constant 0 : i32
    %c0_i32_0 = arith.constant 0 : i32
    %c0_i32_1 = arith.constant 0 : i32
    return %c0_i32, %c0_i32_0 : i32, i32
  }
  func.func @transform_7(%arg0: i32) -> (i32, i32) {
    %c0_i32 = arith.constant 0 : i32
    %c0_i32_0 = arith.constant 0 : i32
    %c0_i32_1 = arith.constant 0 : i32
    return %c0_i32, %c0_i32_0 : i32, i32
  }
  func.func @transform_8(%arg0: i32) -> (i32, i32) {
    %c0_i32 = arith.constant 0 : i32
    %c0_i32_0 = arith.constant 0 : i32
    %c0_i32_1 = arith.constant 0 : i32
    return %c0_i32, %c0_i32_0 : i32, i32
  }
  func.func @transform_9(%arg0: i32) -> (i32, i32) {
    %c0_i32 = arith.constant 0 : i32
    %c0_i32_0 = arith.constant 0 : i32
    %c0_i32_1 = arith.constant 0 : i32
    return %c0_i32, %c0_i32_0 : i32, i32
  }
  func.func @transform_10(%arg0: i32) -> (i32, i32) {
    %c0_i32 = arith.constant 0 : i32
    %c0_i32_0 = arith.constant 0 : i32
    %c0_i32_1 = arith.constant 0 : i32
    return %c0_i32, %c0_i32_0 : i32, i32
  }
  func.func @transform_11(%arg0: i32) -> (i32, i32, i32) {
    %c0_i32 = arith.constant 0 : i32
    %c0_i32_0 = arith.constant 0 : i32
    %c0_i32_1 = arith.constant 0 : i32
    %c0_i32_2 = arith.constant 0 : i32
    return %c0_i32, %c0_i32_0, %c0_i32_1 : i32, i32, i32
  }
  func.func @transform_12(%arg0: i32) -> (i32, i32) {
    %c0_i32 = arith.constant 0 : i32
    %c0_i32_0 = arith.constant 0 : i32
    return %arg0, %c0_i32 : i32, i32
  }
}

</mosaic_0001>

<llo_original>
// kernel: tpu_custom_call.1
$region0: #{tpu_custom_call.1}
  #allocation0 [shape = 'u32[]', space=smem, size = 0x4, offset = 0x4, fixed_abs, tag = 'smem constant byte address 0x4 - core index']
  #allocation1 [shape = 'u32[72,128]{1,0:T(1,128)}', space=vmem, size = 0x9000, scoped, tag = 'internal scratch']
  %s0 = inlined_call_operand.hbm [shape: f32[8,16], index: 0, kind: input, shape index: {}]
  %s1 = inlined_call_operand.hbm [shape: f32[8,16], index: 1, kind: input, shape index: {}]
  %s2 = inlined_call_operand.hbm [shape: bf16[16,128], index: 2, kind: input, shape index: {}]
  %s3 = inlined_call_operand.hbm [shape: bf16[2,128,128], index: 3, kind: input, shape index: {}]
  %s4 = inlined_call_operand.hbm [shape: bf16[2,128,2048], index: 4, kind: input, shape index: {}]
  %s5 = inlined_call_operand.hbm [shape: bf16[2,2048,128], index: 5, kind: input, shape index: {}]
  %s6 = inlined_call_operand.hbm [shape: bf16[128,128], index: 6, kind: input, shape index: {}]
  %s7 = inlined_call_operand.hbm [shape: bf16[128,128], index: 7, kind: input, shape index: {}]
  %s8 = inlined_call_operand.hbm [shape: bf16[128,128], index: 8, kind: input, shape index: {}]
  %s9 = inlined_call_operand.hbm [shape: bf16[128,128], index: 9, kind: input, shape index: {}]
  %s10 = inlined_call_operand.hbm [shape: f32[16,128], index: 10, kind: input, shape index: {}]
  %s11 = inlined_call_operand.hbm [shape: f32[2,1,2048], index: 11, kind: input, shape index: {}]
  %s12 = inlined_call_operand.hbm [shape: f32[8,128], index: 12, kind: output, shape index: {}]
  %s13 = sld [smem:[#allocation0]]
  $region106: #{tpu_custom_call.1} parent=0
    _
  %s15 = ssub.s32 1, %s13
  %s16 = scalar_select 0, %s15, %s13
  $region1: #{tpu_custom_call.1} parent=0
    #allocation2 [shape = 'u8[4096]{0}', space=vmem, size = 0x1000, scoped, tag = 'input window, operand 0, single buffered']
    #allocation3 [shape = 's32[1]{0}', space=sflag, size = 0x4, scoped, tag = 'scoped memory for tpu_custom_call.1']
    #allocation4 [shape = 's32[1]{0}', space=sflag, size = 0x4, scoped, tag = 'scoped memory for tpu_custom_call.1']
    #allocation5 [shape = 'u8[4096]{0}', space=vmem, size = 0x1000, scoped, tag = 'input window, operand 1, single buffered']
    #allocation6 [shape = 's32[1]{0}', space=sflag, size = 0x4, scoped, tag = 'scoped memory for tpu_custom_call.1']
    #allocation7 [shape = 'u8[4096]{0}', space=vmem, size = 0x1000, scoped, tag = 'input window, operand 2, single buffered']
    #allocation8 [shape = 'u8[65536]{0}', space=vmem, size = 0x10000, scoped, tag = 'input window, operand 3, single buffered']
    #allocation9 [shape = 's32[1]{0}', space=sflag, size = 0x4, scoped, tag = 'scoped memory for tpu_custom_call.1']
    #allocation10 [shape = 'u8[1048576]{0}', space=vmem, size = 0x100000, scoped, tag = 'input window, operand 4, single buffered']
    #allocation11 [shape = 'u8[1048576]{0}', space=vmem, size = 0x100000, scoped, tag = 'input window, operand 5, single buffered']
    #allocation12 [shape = 's32[1]{0}', space=sflag, size = 0x4, scoped, tag = 'scoped memory for tpu_custom_call.1']
    #allocation13 [shape = 'u8[32768]{0}', space=vmem, size = 0x8000, scoped, tag = 'input window, operand 6, single buffered']
    #allocation14 [shape = 'u8[32768]{0}', space=vmem, size = 0x8000, scoped, tag = 'input window, operand 7, single buffered']
    #allocation15 [shape = 's32[1]{0}', space=sflag, size = 0x4, scoped, tag = 'scoped memory for tpu_custom_call.1']
    #allocation16 [shape = 'u8[32768]{0}', space=vmem, size = 0x8000, scoped, tag = 'input window, operand 8, single buffered']
    #allocation17 [shape = 'u8[32768]{0}', space=vmem, size = 0x8000, scoped, tag = 'input window, operand 9, single buffered']
    #allocation18 [shape = 's32[1]{0}', space=sflag, size = 0x4, scoped, tag = 'scoped memory for tpu_custom_call.1']
    #allocation19 [shape = 'u8[8192]{0}', space=vmem, size = 0x2000, scoped, tag = 'input window, operand 10, single buffered']
    #allocation20 [shape = 'u8[16384]{0}', space=vmem, size = 0x4000, scoped, tag = 'input window, operand 11, single buffered']
    #allocation21 [shape = 's32[1]{0}', space=sflag, size = 0x4, scoped, tag = 'scoped memory for tpu_custom_call.1']
    #allocation22 [shape = 'u8[4096]{0}', space=vmem, size = 0x1000, scoped, tag = 'output window, operand 0, single buffered']
    %17 = vsyncpa [#allocation3], 0
    %18 = vsyncpa [#allocation6], 0
    %19 = vsyncpa [#allocation9], 0
    %20 = vsyncpa [#allocation12], 0
    %21 = vsyncpa [#allocation15], 0
    %22 = vsyncpa [#allocation18], 0
    %23 = vsyncpa [#allocation21], 0
    %24 = vsyncpa [#allocation4], 0
    // Predicated region
    $region2: #{tpu_custom_call.1} parent=1 // pred_check
      _
    $region3: #{tpu_custom_call.1} parent=1 // pred_check_branch
      %26 = sbr.rel (0) target = $region5
    $region4: #{tpu_custom_call.1} parent=1 // pred_region
      %28 = vsyncadd [#allocation3], 0
      %s30 = sshll.u32 %s0, 4
      %s31 = int_to_ptr.hbm [resolvable:$true] %s30
      %s32 = sshll.u32 [#allocation2], 4
      %s33 = int_to_ptr.vmem [resolvable:$true] %s32
      %35 = dma.hbm_to_vmem [thread:$0]  %s31, 128, %s33, [#allocation3]
    $region5: #{tpu_custom_call.1} parent=1 // pred_fallthru
      _
    // Predicated region
    $region6: #{tpu_custom_call.1} parent=1 // pred_check
      _
    $region7: #{tpu_custom_call.1} parent=1 // pred_check_branch
      %37 = sbr.rel (0) target = $region9
    $region8: #{tpu_custom_call.1} parent=1 // pred_region
      %39 = vsyncadd [#allocation6], 0
      %s41 = sshll.u32 %s1, 4
      %s42 = int_to_ptr.hbm [resolvable:$true] %s41
      %s43 = sshll.u32 [#allocation5], 4
      %s44 = int_to_ptr.vmem [resolvable:$true] %s43
      %46 = dma.hbm_to_vmem [thread:$0]  %s42, 128, %s44, [#allocation6]
    $region9: #{tpu_custom_call.1} parent=1 // pred_fallthru
      _
    // Predicated region
    $region10: #{tpu_custom_call.1} parent=1 // pred_check
      _
    $region11: #{tpu_custom_call.1} parent=1 // pred_check_branch
      %48 = sbr.rel (0) target = $region13
    $region12: #{tpu_custom_call.1} parent=1 // pred_region
      %50 = vsyncadd [#allocation6], 0
      %s51 = sshll.u32 %s2, 4
      %s52 = int_to_ptr.hbm [resolvable:$true] %s51
      %s53 = sshll.u32 [#allocation7], 4
      %s54 = int_to_ptr.vmem [resolvable:$true] %s53
      %59 = dma.hbm_to_vmem [thread:$0]  %s52, 128, %s54, [#allocation6], 64, 64, 4
    $region13: #{tpu_custom_call.1} parent=1 // pred_fallthru
      _
    // Predicated region
    $region14: #{tpu_custom_call.1} parent=1 // pred_check
      _
    $region15: #{tpu_custom_call.1} parent=1 // pred_check_branch
      %61 = sbr.rel (0) target = $region17
    $region16: #{tpu_custom_call.1} parent=1 // pred_region
      %63 = vsyncadd [#allocation9], 0
      %s64 = sshll.u32 %s3, 4
      %s65 = int_to_ptr.hbm [resolvable:$true] %s64
      %s66 = sshll.u32 [#allocation8], 4
      %s67 = int_to_ptr.vmem [resolvable:$true] %s66
      %72 = dma.hbm_to_vmem [thread:$0]  %s65, 2048, %s67, [#allocation9], 64, 64, 4
    $region17: #{tpu_custom_call.1} parent=1 // pred_fallthru
      _
    // Predicated region
    $region18: #{tpu_custom_call.1} parent=1 // pred_check
      _
    $region19: #{tpu_custom_call.1} parent=1 // pred_check_branch
      %74 = sbr.rel (0) target = $region21
    $region20: #{tpu_custom_call.1} parent=1 // pred_region
      %76 = vsyncadd [#allocation9], 0
      %s77 = sshll.u32 %s4, 4
      %s78 = int_to_ptr.hbm [resolvable:$true] %s77
      %s79 = sshll.u32 [#allocation10], 4
      %s80 = int_to_ptr.vmem [resolvable:$true] %s79
      %85 = dma.hbm_to_vmem [thread:$0]  %s78, 32768, %s80, [#allocation9], 1024, 1024, 64
    $region21: #{tpu_custom_call.1} parent=1 // pred_fallthru
      _
    // Predicated region
    $region22: #{tpu_custom_call.1} parent=1 // pred_check
      _
    $region23: #{tpu_custom_call.1} parent=1 // pred_check_branch
      %87 = sbr.rel (0) target = $region25
    $region24: #{tpu_custom_call.1} parent=1 // pred_region
      %89 = vsyncadd [#allocation12], 0
      %s90 = sshll.u32 %s5, 4
      %s91 = int_to_ptr.hbm [resolvable:$true] %s90
      %s92 = sshll.u32 [#allocation11], 4
      %s93 = int_to_ptr.vmem [resolvable:$true] %s92
      %98 = dma.hbm_to_vmem [thread:$0]  %s91, 32768, %s93, [#allocation12], 64, 64, 4
    $region25: #{tpu_custom_call.1} parent=1 // pred_fallthru
      _
    // Predicated region
    $region26: #{tpu_custom_call.1} parent=1 // pred_check
      _
    $region27: #{tpu_custom_call.1} parent=1 // pred_check_branch
      %100 = sbr.rel (0) target = $region29
    $region28: #{tpu_custom_call.1} parent=1 // pred_region
      %102 = vsyncadd [#allocation12], 0
      %s103 = sshll.u32 %s6, 4
      %s104 = int_to_ptr.hbm [resolvable:$true] %s103
      %s105 = sshll.u32 [#allocation13], 4
      %s106 = int_to_ptr.vmem [resolvable:$true] %s105
      %111 = dma.hbm_to_vmem [thread:$0]  %s104, 1024, %s106, [#allocation12], 64, 64, 4
    $region29: #{tpu_custom_call.1} parent=1 // pred_fallthru
      _
    // Predicated region
    $region30: #{tpu_custom_call.1} parent=1 // pred_check
      _
    $region31: #{tpu_custom_call.1} parent=1 // pred_check_branch
      %113 = sbr.rel (0) target = $region33
    $region32: #{tpu_custom_call.1} parent=1 // pred_region
      %115 = vsyncadd [#allocation15], 0
      %s116 = sshll.u32 %s7, 4
      %s117 = int_to_ptr.hbm [resolvable:$true] %s116
      %s118 = sshll.u32 [#allocation14], 4
      %s119 = int_to_ptr.vmem [resolvable:$true] %s118
      %124 = dma.hbm_to_vmem [thread:$0]  %s117, 1024, %s119, [#allocation15], 64, 64, 4
    $region33: #{tpu_custom_call.1} parent=1 // pred_fallthru
      _
    // Predicated region
    $region34: #{tpu_custom_call.1} parent=1 // pred_check
      _
    $region35: #{tpu_custom_call.1} parent=1 // pred_check_branch
      %126 = sbr.rel (0) target = $region37
    $region36: #{tpu_custom_call.1} parent=1 // pred_region
      %128 = vsyncadd [#allocation15], 0
      %s129 = sshll.u32 %s8, 4
      %s130 = int_to_ptr.hbm [resolvable:$true] %s129
      %s131 = sshll.u32 [#allocation16], 4
      %s132 = int_to_ptr.vmem [resolvable:$true] %s131
      %137 = dma.hbm_to_vmem [thread:$0]  %s130, 1024, %s132, [#allocation15], 64, 64, 4
    $region37: #{tpu_custom_call.1} parent=1 // pred_fallthru
      _
    // Predicated region
    $region38: #{tpu_custom_call.1} parent=1 // pred_check
      _
    $region39: #{tpu_custom_call.1} parent=1 // pred_check_branch
      %139 = sbr.rel (0) target = $region41
    $region40: #{tpu_custom_call.1} parent=1 // pred_region
      %141 = vsyncadd [#allocation18], 0
      %s142 = sshll.u32 %s9, 4
      %s143 = int_to_ptr.hbm [resolvable:$true] %s142
      %s144 = sshll.u32 [#allocation17], 4
      %s145 = int_to_ptr.vmem [resolvable:$true] %s144
      %150 = dma.hbm_to_vmem [thread:$0]  %s143, 1024, %s145, [#allocation18], 64, 64, 4
    $region41: #{tpu_custom_call.1} parent=1 // pred_fallthru
      _
    // Predicated region
    $region42: #{tpu_custom_call.1} parent=1 // pred_check
      _
    $region43: #{tpu_custom_call.1} parent=1 // pred_check_branch
      %152 = sbr.rel (0) target = $region45
    $region44: #{tpu_custom_call.1} parent=1 // pred_region
      %154 = vsyncadd [#allocation18], 0
      %s155 = sshll.u32 %s10, 4
      %s156 = int_to_ptr.hbm [resolvable:$true] %s155
      %s157 = sshll.u32 [#allocation19], 4
      %s158 = int_to_ptr.vmem [resolvable:$true] %s157
      %163 = dma.hbm_to_vmem [thread:$0]  %s156, 256, %s158, [#allocation18], 128, 128, 8
    $region45: #{tpu_custom_call.1} parent=1 // pred_fallthru
      _
    // Predicated region
    $region46: #{tpu_custom_call.1} parent=1 // pred_check
      _
    $region47: #{tpu_custom_call.1} parent=1 // pred_check_branch
      %165 = sbr.rel (0) target = $region49
    $region48: #{tpu_custom_call.1} parent=1 // pred_region
      %167 = vsyncadd [#allocation21], 0
      %s168 = sshll.u32 %s11, 4
      %s169 = int_to_ptr.hbm [resolvable:$true] %s168
      %s170 = sshll.u32 [#allocation20], 4
      %s171 = int_to_ptr.vmem [resolvable:$true] %s170
      %176 = dma.hbm_to_vmem [thread:$0]  %s169, 512, %s171, [#allocation21], 256, 256, 16
    $region49: #{tpu_custom_call.1} parent=1 // pred_fallthru
      _
    // Predicated region
    $region50: #{tpu_custom_call.1} parent=1 // pred_check
      _
    $region51: #{tpu_custom_call.1} parent=1 // pred_check_branch
      %178 = sbr.rel (0) target = $region53
    $region52: #{tpu_custom_call.1} parent=1 // pred_region
      %180 = dma.done [#allocation3], 128
    $region53: #{tpu_custom_call.1} parent=1 // pred_fallthru
      _
    // Predicated region
    $region54: #{tpu_custom_call.1} parent=1 // pred_check
      _
    $region55: #{tpu_custom_call.1} parent=1 // pred_check_branch
      %182 = sbr.rel (0) target = $region57
    $region56: #{tpu_custom_call.1} parent=1 // pred_region
      %184 = dma.done [#allocation6], 128
    $region57: #{tpu_custom_call.1} parent=1 // pred_fallthru
      _
    // Predicated region
    $region58: #{tpu_custom_call.1} parent=1 // pred_check
      _
    $region59: #{tpu_custom_call.1} parent=1 // pred_check_branch
      %186 = sbr.rel (0) target = $region61
    $region60: #{tpu_custom_call.1} parent=1 // pred_region
      %188 = dma.done [#allocation6], 128
    $region61: #{tpu_custom_call.1} parent=1 // pred_fallthru
      _
    // Predicated region
    $region62: #{tpu_custom_call.1} parent=1 // pred_check
      _
    $region63: #{tpu_custom_call.1} parent=1 // pred_check_branch
      %190 = sbr.rel (0) target = $region65
    $region64: #{tpu_custom_call.1} parent=1 // pred_region
      %192 = dma.done [#allocation9], 2048
    $region65: #{tpu_custom_call.1} parent=1 // pred_fallthru
      _
    // Predicated region
    $region66: #{tpu_custom_call.1} parent=1 // pred_check
      _
    $region67: #{tpu_custom_call.1} parent=1 // pred_check_branch
      %194 = sbr.rel (0) target = $region69
    $region68: #{tpu_custom_call.1} parent=1 // pred_region
      %196 = dma.done [#allocation9], 32768
    $region69: #{tpu_custom_call.1} parent=1 // pred_fallthru
      _
    // Predicated region
    $region70: #{tpu_custom_call.1} parent=1 // pred_check
      _
    $region71: #{tpu_custom_call.1} parent=1 // pred_check_branch
      %198 = sbr.rel (0) target = $region73
    $region72: #{tpu_custom_call.1} parent=1 // pred_region
      %200 = dma.done [#allocation12], 32768
    $region73: #{tpu_custom_call.1} parent=1 // pred_fallthru
      _
    // Predicated region
    $region74: #{tpu_custom_call.1} parent=1 // pred_check
      _
    $region75: #{tpu_custom_call.1} parent=1 // pred_check_branch
      %202 = sbr.rel (0) target = $region77
    $region76: #{tpu_custom_call.1} parent=1 // pred_region
      %204 = dma.done [#allocation12], 1024
    $region77: #{tpu_custom_call.1} parent=1 // pred_fallthru
      _
    // Predicated region
    $region78: #{tpu_custom_call.1} parent=1 // pred_check
      _
    $region79: #{tpu_custom_call.1} parent=1 // pred_check_branch
      %206 = sbr.rel (0) target = $region81
    $region80: #{tpu_custom_call.1} parent=1 // pred_region
      %208 = dma.done [#allocation15], 1024
    $region81: #{tpu_custom_call.1} parent=1 // pred_fallthru
      _
    // Predicated region
    $region82: #{tpu_custom_call.1} parent=1 // pred_check
      _
    $region83: #{tpu_custom_call.1} parent=1 // pred_check_branch
      %210 = sbr.rel (0) target = $region85
    $region84: #{tpu_custom_call.1} parent=1 // pred_region
      %212 = dma.done [#allocation15], 1024
    $region85: #{tpu_custom_call.1} parent=1 // pred_fallthru
      _
    // Predicated region
    $region86: #{tpu_custom_call.1} parent=1 // pred_check
      _
    $region87: #{tpu_custom_call.1} parent=1 // pred_check_branch
      %214 = sbr.rel (0) target = $region89
    $region88: #{tpu_custom_call.1} parent=1 // pred_region
      %216 = dma.done [#allocation18], 1024
    $region89: #{tpu_custom_call.1} parent=1 // pred_fallthru
      _
    // Predicated region
    $region90: #{tpu_custom_call.1} parent=1 // pred_check
      _
    $region91: #{tpu_custom_call.1} parent=1 // pred_check_branch
      %218 = sbr.rel (0) target = $region93
    $region92: #{tpu_custom_call.1} parent=1 // pred_region
      %220 = dma.done [#allocation18], 256
    $region93: #{tpu_custom_call.1} parent=1 // pred_fallthru
      _
    // Predicated region
    $region94: #{tpu_custom_call.1} parent=1 // pred_check
      _
    $region95: #{tpu_custom_call.1} parent=1 // pred_check_branch
      %222 = sbr.rel (0) target = $region97
    $region96: #{tpu_custom_call.1} parent=1 // pred_region
      %224 = dma.done [#allocation21], 512
    $region97: #{tpu_custom_call.1} parent=1 // pred_fallthru
      _
    %v226 = vlaneseq
    %v227 = vand.u32 %v226, 127
    %vm228 = vcmp.lt.s32.totalorder %v227, 96
    %v229 = vsel %vm228, 1, 0
    %v230 = vcvt.s32.f32 %v229
    %v231 = vld [vmem:[#allocation2] sm:$0xff]
    %v232 = vld [vmem:[#allocation5] sm:$0xff]
    %v233 = vld [vmem:[#allocation7] sm:$0xf]
    %v234 = vld [vmem:[#allocation7 + $0x4] sm:$0xf]
    %v235 = vpack.c.bf16 %v232, %v231
    %v236 = vld [vmem:[#allocation19] sm:$0x1]
    %v237 = vperm.slane %v236, 0
    %v240 = vunpack.c.l.b16 %v233
    %v241 = vunpack.c.l.b16 %v234
    %v242 = vpack.c.b16 %v241, %v240
    %vm244 = vcmask 130048
    %v246 = vsel %vm244, %v235, 0
    %248 = vmatpush.bf16.msra.mxu0 0
    %249 = vmatpush.bf16.msra.mxu0 0
    %250 = vmatpush.bf16.msra.mxu0 0
    %251 = vmatpush.bf16.msra.mxu0 0
    %252 = vmatpush.bf16.msra.mxu0 0
    %253 = vmatpush.bf16.msra.mxu0 0
    %254 = vmatpush.bf16.msra.mxu0 0
    %255 = vmatpush.bf16.msra.mxu0 %v242
    %256 = vmatmul.bf16.gmra.mxu0 %v246
    %v257 = vpop.f32.mrf.mxu0
    %v258 = vadd.f32 %v237, %v257
    %v259 = vpop.f32.mrf.mxu0
    %v260 = vadd.f32 %v237, %v259
    %261 = vdwg.mxu0
    %v262 = vmax.f32 %v258, 0.0
    %v263 = vmax.f32 %v260, 0.0
    %v264 = vld [vmem:[#allocation8] sm:$0xf]
    %v265 = vld [vmem:[#allocation8 + $0x4] sm:$0xf]
    %v266 = vld [vmem:[#allocation8 + $0x8] sm:$0xf]
    %v267 = vld [vmem:[#allocation8 + $0xc] sm:$0xf]
    %v268 = vld [vmem:[#allocation8 + $0x10] sm:$0xf]
    %v269 = vld [vmem:[#allocation8 + $0x14] sm:$0xf]
    %v270 = vld [vmem:[#allocation8 + $0x18] sm:$0xf]
    %v271 = vld [vmem:[#allocation8 + $0x1c] sm:$0xf]
    %v272 = vld [vmem:[#allocation8 + $0x20] sm:$0xf]
    %v273 = vld [vmem:[#allocation8 + $0x24] sm:$0xf]
    %v274 = vld [vmem:[#allocation8 + $0x28] sm:$0xf]
    %v275 = vld [vmem:[#allocation8 + $0x2c] sm:$0xf]
    %v276 = vld [vmem:[#allocation8 + $0x30] sm:$0xf]
    %v277 = vld [vmem:[#allocation8 + $0x34] sm:$0xf]
    %v278 = vld [vmem:[#allocation8 + $0x38] sm:$0xf]
    %v279 = vld [vmem:[#allocation8 + $0x3c] sm:$0xf]
    %v280 = vpack.c.bf16 %v263, %v262
    %v281 = vld [vmem:[#allocation19 + $0x1] sm:$0x1]
    %v282 = vperm.slane %v281, 0
    %v299 = vunpack.c.l.b16 %v264
    %v300 = vunpack.c.l.b16 %v265
    %v301 = vunpack.c.l.b16 %v266
    %v302 = vunpack.c.l.b16 %v267
    %v303 = vunpack.c.l.b16 %v268
    %v304 = vunpack.c.l.b16 %v269
    %v305 = vunpack.c.l.b16 %v270
    %v306 = vunpack.c.l.b16 %v271
    %v307 = vunpack.c.l.b16 %v272
    %v308 = vunpack.c.l.b16 %v273
    %v309 = vunpack.c.l.b16 %v274
    %v310 = vunpack.c.l.b16 %v275
    %v311 = vunpack.c.l.b16 %v276
    %v312 = vunpack.c.l.b16 %v277
    %v313 = vunpack.c.l.b16 %v278
    %v314 = vunpack.c.l.b16 %v279
    %v315 = vpack.c.b16 %v300, %v299
    %v316 = vpack.c.b16 %v302, %v301
    %v317 = vpack.c.b16 %v304, %v303
    %v318 = vpack.c.b16 %v306, %v305
    %v319 = vpack.c.b16 %v308, %v307
    %v320 = vpack.c.b16 %v310, %v309
    %v321 = vpack.c.b16 %v312, %v311
    %v322 = vpack.c.b16 %v314, %v313
    %331 = vmatpush.bf16.msra.mxu0 %v322
    %332 = vmatpush.bf16.msra.mxu0 %v321
    %333 = vmatpush.bf16.msra.mxu0 %v320
    %334 = vmatpush.bf16.msra.mxu0 %v319
    %335 = vmatpush.bf16.msra.mxu0 %v318
    %336 = vmatpush.bf16.msra.mxu0 %v317
    %337 = vmatpush.bf16.msra.mxu0 %v316
    %338 = vmatpush.bf16.msra.mxu0 %v315
    %339 = vmatmul.bf16.gmra.mxu0 %v280
    %v340 = vpop.f32.mrf.mxu0
    %v341 = vadd.f32 %v282, %v340
    %v342 = vpop.f32.mrf.mxu0
    %v343 = vadd.f32 %v282, %v342
    %344 = vdwg.mxu0
    %v345 = vadd.f32 %v262, %v341
    %v346 = vadd.f32 %v263, %v343
    %v347 = vld [vmem:[#allocation19 + $0x2] sm:$0x1]
    %v348 = vld [vmem:[#allocation19 + $0x3] sm:$0x1]
    %349 = vadd.xlane.f32.xlu0 %v345
    %v350 = vpop.xlane.xlu0 %349
    %351 = vadd.xlane.f32.xlu0 %v346
    %v352 = vpop.xlane.xlu0 %351
    %v353 = vmul.f32 %v350, 0.010416667
    %v354 = vmul.f32 %v352, 0.010416667
    %v355 = vsub.f32 %v345, %v353
    %v356 = vsub.f32 %v346, %v354
    %v357 = vmul.f32 %v355, %v230
    %v358 = vmul.f32 %v356, %v230
    %v359 = vmul.f32 %v357, %v357
    %v360 = vmul.f32 %v358, %v358
    %361 = vadd.xlane.f32.xlu0 %v359
    %v362 = vpop.xlane.xlu0 %361
    %363 = vadd.xlane.f32.xlu0 %v360
    %v364 = vpop.xlane.xlu0 %363
    %v365 = vmul.f32 %v362, 0.010416667
    %v366 = vmul.f32 %v364, 0.010416667
    %v367 = vadd.f32 %v365, 1e-05
    %v368 = vadd.f32 %v366, 1e-05
    %v369 = vrsqrt.pop %v367
    %v370 = vmul.f32 %v369, %v367
    %v371 = vmul.f32 %v370, %v369
    %v372 = vmul.f32 0.5, %v371
    %v373 = vsub.f32 1.5, %v372
    %v374 = vmul.f32 %v369, %v373
    %vm375 = vweird.f32 %v367
    %vm376 = vweird.f32 %v369
    %vm377 = vmor %vm375, %vm376
    %v378 = vsel %vm377, %v369, %v374
    %v379 = vrsqrt.pop %v368
    %v380 = vmul.f32 %v379, %v368
    %v381 = vmul.f32 %v380, %v379
    %v382 = vmul.f32 0.5, %v381
    %v383 = vsub.f32 1.5, %v382
    %v384 = vmul.f32 %v379, %v383
    %vm385 = vweird.f32 %v368
    %vm386 = vweird.f32 %v379
    %vm387 = vmor %vm385, %vm386
    %v388 = vsel %vm387, %v379, %v384
    %v389 = vmul.f32 %v357, %v378
    %v390 = vmul.f32 %v358, %v388
    %v391 = vperm.slane %v347, 0
    %v392 = vmul.f32 %v389, %v391
    %v393 = vmul.f32 %v390, %v391
    %v394 = vperm.slane %v348, 0
    %v395 = vadd.f32 %v392, %v394
    %v396 = vadd.f32 %v393, %v394
    %v397 = vld [vmem:[#allocation10] sm:$0xff]
    %v398 = vld [vmem:[#allocation10 + $0x8] sm:$0xff]
    %v399 = vld [vmem:[#allocation10 + $0x10] sm:$0xff]
    %v400 = vld [vmem:[#allocation10 + $0x18] sm:$0xff]
    %v401 = vld [vmem:[#allocation10 + $0x20] sm:$0xff]
    %v402 = vld [vmem:[#allocation10 + $0x28] sm:$0xff]
    %v403 = vld [vmem:[#allocation10 + $0x30] sm:$0xff]
    %v404 = vld [vmem:[#allocation10 + $0x38] sm:$0xff]
    %v405 = vld [vmem:[#allocation10 + $0x40] sm:$0xff]
    %v406 = vld [vmem:[#allocation10 + $0x48] sm:$0xff]
    %v407 = vld [vmem:[#allocation10 + $0x50] sm:$0xff]
    %v408 = vld [vmem:[#allocation10 + $0x58] sm:$0xff]
    %v409 = vld [vmem:[#allocation10 + $0x60] sm:$0xff]
    %v410 = vld [vmem:[#allocation10 + $0x68] sm:$0xff]
    %v411 = vld [vmem:[#allocation10 + $0x70] sm:$0xff]
    %v412 = vld [vmem:[#allocation10 + $0x78] sm:$0xff]
    %v413 = vld [vmem:[#allocation10 + $0x80] sm:$0xff]
    %v414 = vld [vmem:[#allocation10 + $0x88] sm:$0xff]
    %v415 = vld [vmem:[#allocation10 + $0x90] sm:$0xff]
    %v416 = vld [vmem:[#allocation10 + $0x98] sm:$0xff]
    %v417 = vld [vmem:[#allocation10 + $0xa0] sm:$0xff]
    %v418 = vld [vmem:[#allocation10 + $0xa8] sm:$0xff]
    %v419 = vld [vmem:[#allocation10 + $0xb0] sm:$0xff]
    %v420 = vld [vmem:[#allocation10 + $0xb8] sm:$0xff]
    %v421 = vld [vmem:[#allocation10 + $0xc0] sm:$0xff]
    %v422 = vld [vmem:[#allocation10 + $0xc8] sm:$0xff]
    %v423 = vld [vmem:[#allocation10 + $0xd0] sm:$0xff]
    %v424 = vld [vmem:[#allocation10 + $0xd8] sm:$0xff]
    %v425 = vld [vmem:[#allocation10 + $0xe0] sm:$0xff]
    %v426 = vld [vmem:[#allocation10 + $0xe8] sm:$0xff]
    %v427 = vld [vmem:[#allocation10 + $0xf0] sm:$0xff]
    %v428 = vld [vmem:[#allocation10 + $0xf8] sm:$0xff]
    %v429 = vld [vmem:[#allocation10 + $0x100] sm:$0xff]
    %v430 = vld [vmem:[#allocation10 + $0x108] sm:$0xff]
    %v431 = vld [vmem:[#allocation10 + $0x110] sm:$0xff]
    %v432 = vld [vmem:[#allocation10 + $0x118] sm:$0xff]
    %v433 = vld [vmem:[#allocation10 + $0x120] sm:$0xff]
    %v434 = vld [vmem:[#allocation10 + $0x128] sm:$0xff]
    %v435 = vld [vmem:[#allocation10 + $0x130] sm:$0xff]
    %v436 = vld [vmem:[#allocation10 + $0x138] sm:$0xff]
    %v437 = vld [vmem:[#allocation10 + $0x140] sm:$0xff]
    %v438 = vld [vmem:[#allocation10 + $0x148] sm:$0xff]
    %v439 = vld [vmem:[#allocation10 + $0x150] sm:$0xff]
    %v440 = vld [vmem:[#allocation10 + $0x158] sm:$0xff]
    %v441 = vld [vmem:[#allocation10 + $0x160] sm:$0xff]
    %v442 = vld [vmem:[#allocation10 + $0x168] sm:$0xff]
    %v443 = vld [vmem:[#allocation10 + $0x170] sm:$0xff]
    %v444 = vld [vmem:[#allocation10 + $0x178] sm:$0xff]
    %v445 = vld [vmem:[#allocation10 + $0x180] sm:$0xff]
    %v446 = vld [vmem:[#allocation10 + $0x188] sm:$0xff]
    %v447 = vld [vmem:[#allocation10 + $0x190] sm:$0xff]
    %v448 = vld [vmem:[#allocation10 + $0x198] sm:$0xff]
    %v449 = vld [vmem:[#allocation10 + $0x1a0] sm:$0xff]
    %v450 = vld [vmem:[#allocation10 + $0x1a8] sm:$0xff]
    %v451 = vld [vmem:[#allocation10 + $0x1b0] sm:$0xff]
    %v452 = vld [vmem:[#allocation10 + $0x1b8] sm:$0xff]
    %v453 = vld [vmem:[#allocation10 + $0x1c0] sm:$0xff]
    %v454 = vld [vmem:[#allocation10 + $0x1c8] sm:$0xff]
    %v455 = vld [vmem:[#allocation10 + $0x1d0] sm:$0xff]
    %v456 = vld [vmem:[#allocation10 + $0x1d8] sm:$0xff]
    %v457 = vld [vmem:[#allocation10 + $0x1e0] sm:$0xff]
    %v458 = vld [vmem:[#allocation10 + $0x1e8] sm:$0xff]
    %v459 = vld [vmem:[#allocation10 + $0x1f0] sm:$0xff]
    %v460 = vld [vmem:[#allocation10 + $0x1f8] sm:$0xff]
    %v461 = vld [vmem:[#allocation10 + $0x200] sm:$0xff]
    %v462 = vld [vmem:[#allocation10 + $0x208] sm:$0xff]
    %v463 = vld [vmem:[#allocation10 + $0x210] sm:$0xff]
    %v464 = vld [vmem:[#allocation10 + $0x218] sm:$0xff]
    %v465 = vld [vmem:[#allocation10 + $0x220] sm:$0xff]
    %v466 = vld [vmem:[#allocation10 + $0x228] sm:$0xff]
    %v467 = vld [vmem:[#allocation10 + $0x230] sm:$0xff]
    %v468 = vld [vmem:[#allocation10 + $0x238] sm:$0xff]
    %v469 = vld [vmem:[#allocation10 + $0x240] sm:$0xff]
    %v470 = vld [vmem:[#allocation10 + $0x248] sm:$0xff]
    %v471 = vld [vmem:[#allocation10 + $0x250] sm:$0xff]
    %v472 = vld [vmem:[#allocation10 + $0x258] sm:$0xff]
    %v473 = vld [vmem:[#allocation10 + $0x260] sm:$0xff]
    %v474 = vld [vmem:[#allocation10 + $0x268] sm:$0xff]
    %v475 = vld [vmem:[#allocation10 + $0x270] sm:$0xff]
    %v476 = vld [vmem:[#allocation10 + $0x278] sm:$0xff]
    %v477 = vld [vmem:[#allocation10 + $0x280] sm:$0xff]
    %v478 = vld [vmem:[#allocation10 + $0x288] sm:$0xff]
    %v479 = vld [vmem:[#allocation10 + $0x290] sm:$0xff]
    %v480 = vld [vmem:[#allocation10 + $0x298] sm:$0xff]
    %v481 = vld [vmem:[#allocation10 + $0x2a0] sm:$0xff]
    %v482 = vld [vmem:[#allocation10 + $0x2a8] sm:$0xff]
    %v483 = vld [vmem:[#allocation10 + $0x2b0] sm:$0xff]
    %v484 = vld [vmem:[#allocation10 + $0x2b8] sm:$0xff]
    %v485 = vld [vmem:[#allocation10 + $0x2c0] sm:$0xff]
    %v486 = vld [vmem:[#allocation10 + $0x2c8] sm:$0xff]
    %v487 = vld [vmem:[#allocation10 + $0x2d0] sm:$0xff]
    %v488 = vld [vmem:[#allocation10 + $0x2d8] sm:$0xff]
    %v489 = vld [vmem:[#allocation10 + $0x2e0] sm:$0xff]
    %v490 = vld [vmem:[#allocation10 + $0x2e8] sm:$0xff]
    %v491 = vld [vmem:[#allocation10 + $0x2f0] sm:$0xff]
    %v492 = vld [vmem:[#allocation10 + $0x2f8] sm:$0xff]
    %v493 = vld [vmem:[#allocation10 + $0x300] sm:$0xff]
    %v494 = vld [vmem:[#allocation10 + $0x308] sm:$0xff]
    %v495 = vld [vmem:[#allocation10 + $0x310] sm:$0xff]
    %v496 = vld [vmem:[#allocation10 + $0x318] sm:$0xff]
    %v497 = vld [vmem:[#allocation10 + $0x320] sm:$0xff]
    %v498 = vld [vmem:[#allocation10 + $0x328] sm:$0xff]
    %v499 = vld [vmem:[#allocation10 + $0x330] sm:$0xff]
    %v500 = vld [vmem:[#allocation10 + $0x338] sm:$0xff]
    %v501 = vld [vmem:[#allocation10 + $0x340] sm:$0xff]
    %v502 = vld [vmem:[#allocation10 + $0x348] sm:$0xff]
    %v503 = vld [vmem:[#allocation10 + $0x350] sm:$0xff]
    %v504 = vld [vmem:[#allocation10 + $0x358] sm:$0xff]
    %v505 = vld [vmem:[#allocation10 + $0x360] sm:$0xff]
    %v506 = vld [vmem:[#allocation10 + $0x368] sm:$0xff]
    %v507 = vld [vmem:[#allocation10 + $0x370] sm:$0xff]
    %v508 = vld [vmem:[#allocation10 + $0x378] sm:$0xff]
    %v509 = vld [vmem:[#allocation10 + $0x380] sm:$0xff]
    %v510 = vld [vmem:[#allocation10 + $0x388] sm:$0xff]
    %v511 = vld [vmem:[#allocation10 + $0x390] sm:$0xff]
    %v512 = vld [vmem:[#allocation10 + $0x398] sm:$0xff]
    %v513 = vld [vmem:[#allocation10 + $0x3a0] sm:$0xff]
    %v514 = vld [vmem:[#allocation10 + $0x3a8] sm:$0xff]
    %v515 = vld [vmem:[#allocation10 + $0x3b0] sm:$0xff]
    %v516 = vld [vmem:[#allocation10 + $0x3b8] sm:$0xff]
    %v517 = vld [vmem:[#allocation10 + $0x3c0] sm:$0xff]
    %v518 = vld [vmem:[#allocation10 + $0x3c8] sm:$0xff]
    %v519 = vld [vmem:[#allocation10 + $0x3d0] sm:$0xff]
    %v520 = vld [vmem:[#allocation10 + $0x3d8] sm:$0xff]
    %v521 = vld [vmem:[#allocation10 + $0x3e0] sm:$0xff]
    %v522 = vld [vmem:[#allocation10 + $0x3e8] sm:$0xff]
    %v523 = vld [vmem:[#allocation10 + $0x3f0] sm:$0xff]
    %v524 = vld [vmem:[#allocation10 + $0x3f8] sm:$0xff]
    %v525 = vpack.c.bf16 %v396, %v395
    %v526 = vld [vmem:[#allocation20] sm:$0xff]
    %v527 = vld [vmem:[#allocation20 + $0x8] sm:$0xff]
    %v530 = vperm.slane %v526, 0
    %v531 = vperm.slane %v526, 1
    %v532 = vperm.slane %v526, 2
    %v533 = vperm.slane %v526, 3
    %v534 = vperm.slane %v526, 4
    %v535 = vperm.slane %v526, 5
    %v536 = vperm.slane %v526, 6
    %v537 = vperm.slane %v526, 7
    %v538 = vperm.slane %v527, 0
    %v539 = vperm.slane %v527, 1
    %v540 = vperm.slane %v527, 2
    %v541 = vperm.slane %v527, 3
    %v542 = vperm.slane %v527, 4
    %v543 = vperm.slane %v527, 5
    %v544 = vperm.slane %v527, 6
    %v545 = vperm.slane %v527, 7
    %v690 = vunpack.c.l.b16 %v397
    %v691 = vunpack.c.h.b16 %v397
    %v692 = vunpack.c.l.b16 %v398
    %v693 = vunpack.c.h.b16 %v398
    %v694 = vunpack.c.l.b16 %v399
    %v695 = vunpack.c.h.b16 %v399
    %v696 = vunpack.c.l.b16 %v400
    %v697 = vunpack.c.h.b16 %v400
    %v698 = vunpack.c.l.b16 %v401
    %v699 = vunpack.c.h.b16 %v401
    %v700 = vunpack.c.l.b16 %v402
    %v701 = vunpack.c.h.b16 %v402
    %v702 = vunpack.c.l.b16 %v403
    %v703 = vunpack.c.h.b16 %v403
    %v704 = vunpack.c.l.b16 %v404
    %v705 = vunpack.c.h.b16 %v404
    %v706 = vunpack.c.l.b16 %v405
    %v707 = vunpack.c.h.b16 %v405
    %v708 = vunpack.c.l.b16 %v406
    %v709 = vunpack.c.h.b16 %v406
    %v710 = vunpack.c.l.b16 %v407
    %v711 = vunpack.c.h.b16 %v407
    %v712 = vunpack.c.l.b16 %v408
    %v713 = vunpack.c.h.b16 %v408
    %v714 = vunpack.c.l.b16 %v409
    %v715 = vunpack.c.h.b16 %v409
    %v716 = vunpack.c.l.b16 %v410
    %v717 = vunpack.c.h.b16 %v410
    %v718 = vunpack.c.l.b16 %v411
    %v719 = vunpack.c.h.b16 %v411
    %v720 = vunpack.c.l.b16 %v412
    %v721 = vunpack.c.h.b16 %v412
    %v722 = vunpack.c.l.b16 %v413
    %v723 = vunpack.c.h.b16 %v413
    %v724 = vunpack.c.l.b16 %v414
    %v725 = vunpack.c.h.b16 %v414
    %v726 = vunpack.c.l.b16 %v415
    %v727 = vunpack.c.h.b16 %v415
    %v728 = vunpack.c.l.b16 %v416
    %v729 = vunpack.c.h.b16 %v416
    %v730 = vunpack.c.l.b16 %v417
    %v731 = vunpack.c.h.b16 %v417
    %v732 = vunpack.c.l.b16 %v418
    %v733 = vunpack.c.h.b16 %v418
    %v734 = vunpack.c.l.b16 %v419
    %v735 = vunpack.c.h.b16 %v419
    %v736 = vunpack.c.l.b16 %v420
    %v737 = vunpack.c.h.b16 %v420
    %v738 = vunpack.c.l.b16 %v421
    %v739 = vunpack.c.h.b16 %v421
    %v740 = vunpack.c.l.b16 %v422
    %v741 = vunpack.c.h.b16 %v422
    %v742 = vunpack.c.l.b16 %v423
    %v743 = vunpack.c.h.b16 %v423
    %v744 = vunpack.c.l.b16 %v424
    %v745 = vunpack.c.h.b16 %v424
    %v746 = vunpack.c.l.b16 %v425
    %v747 = vunpack.c.h.b16 %v425
    %v748 = vunpack.c.l.b16 %v426
    %v749 = vunpack.c.h.b16 %v426
    %v750 = vunpack.c.l.b16 %v427
    %v751 = vunpack.c.h.b16 %v427
    %v752 = vunpack.c.l.b16 %v428
    %v753 = vunpack.c.h.b16 %v428
    %v754 = vunpack.c.l.b16 %v429
    %v755 = vunpack.c.h.b16 %v429
    %v756 = vunpack.c.l.b16 %v430
    %v757 = vunpack.c.h.b16 %v430
    %v758 = vunpack.c.l.b16 %v431
    %v759 = vunpack.c.h.b16 %v431
    %v760 = vunpack.c.l.b16 %v432
    %v761 = vunpack.c.h.b16 %v432
    %v762 = vunpack.c.l.b16 %v433
    %v763 = vunpack.c.h.b16 %v433
    %v764 = vunpack.c.l.b16 %v434
    %v765 = vunpack.c.h.b16 %v434
    %v766 = vunpack.c.l.b16 %v435
    %v767 = vunpack.c.h.b16 %v435
    %v768 = vunpack.c.l.b16 %v436
    %v769 = vunpack.c.h.b16 %v436
    %v770 = vunpack.c.l.b16 %v437
    %v771 = vunpack.c.h.b16 %v437
    %v772 = vunpack.c.l.b16 %v438
    %v773 = vunpack.c.h.b16 %v438
    %v774 = vunpack.c.l.b16 %v439
    %v775 = vunpack.c.h.b16 %v439
    %v776 = vunpack.c.l.b16 %v440
    %v777 = vunpack.c.h.b16 %v440
    %v778 = vunpack.c.l.b16 %v441
    %v779 = vunpack.c.h.b16 %v441
    %v780 = vunpack.c.l.b16 %v442
    %v781 = vunpack.c.h.b16 %v442
    %v782 = vunpack.c.l.b16 %v443
    %v783 = vunpack.c.h.b16 %v443
    %v784 = vunpack.c.l.b16 %v444
    %v785 = vunpack.c.h.b16 %v444
    %v786 = vunpack.c.l.b16 %v445
    %v787 = vunpack.c.h.b16 %v445
    %v788 = vunpack.c.l.b16 %v446
    %v789 = vunpack.c.h.b16 %v446
    %v790 = vunpack.c.l.b16 %v447
    %v791 = vunpack.c.h.b16 %v447
    %v792 = vunpack.c.l.b16 %v448
    %v793 = vunpack.c.h.b16 %v448
    %v794 = vunpack.c.l.b16 %v449
    %v795 = vunpack.c.h.b16 %v449
    %v796 = vunpack.c.l.b16 %v450
    %v797 = vunpack.c.h.b16 %v450
    %v798 = vunpack.c.l.b16 %v451
    %v799 = vunpack.c.h.b16 %v451
    %v800 = vunpack.c.l.b16 %v452
    %v801 = vunpack.c.h.b16 %v452
    %v802 = vunpack.c.l.b16 %v453
    %v803 = vunpack.c.h.b16 %v453
    %v804 = vunpack.c.l.b16 %v454
    %v805 = vunpack.c.h.b16 %v454
    %v806 = vunpack.c.l.b16 %v455
    %v807 = vunpack.c.h.b16 %v455
    %v808 = vunpack.c.l.b16 %v456
    %v809 = vunpack.c.h.b16 %v456
    %v810 = vunpack.c.l.b16 %v457
    %v811 = vunpack.c.h.b16 %v457
    %v812 = vunpack.c.l.b16 %v458
    %v813 = vunpack.c.h.b16 %v458
    %v814 = vunpack.c.l.b16 %v459
    %v815 = vunpack.c.h.b16 %v459
    %v816 = vunpack.c.l.b16 %v460
    %v817 = vunpack.c.h.b16 %v460
    %v818 = vunpack.c.l.b16 %v461
    %v819 = vunpack.c.h.b16 %v461
    %v820 = vunpack.c.l.b16 %v462
    %v821 = vunpack.c.h.b16 %v462
    %v822 = vunpack.c.l.b16 %v463
    %v823 = vunpack.c.h.b16 %v463
    %v824 = vunpack.c.l.b16 %v464
    %v825 = vunpack.c.h.b16 %v464
    %v826 = vunpack.c.l.b16 %v465
    %v827 = vunpack.c.h.b16 %v465
    %v828 = vunpack.c.l.b16 %v466
    %v829 = vunpack.c.h.b16 %v466
    %v830 = vunpack.c.l.b16 %v467
    %v831 = vunpack.c.h.b16 %v467
    %v832 = vunpack.c.l.b16 %v468
    %v833 = vunpack.c.h.b16 %v468
    %v834 = vunpack.c.l.b16 %v469
    %v835 = vunpack.c.h.b16 %v469
    %v836 = vunpack.c.l.b16 %v470
    %v837 = vunpack.c.h.b16 %v470
    %v838 = vunpack.c.l.b16 %v471
    %v839 = vunpack.c.h.b16 %v471
    %v840 = vunpack.c.l.b16 %v472
    %v841 = vunpack.c.h.b16 %v472
    %v842 = vunpack.c.l.b16 %v473
    %v843 = vunpack.c.h.b16 %v473
    %v844 = vunpack.c.l.b16 %v474
    %v845 = vunpack.c.h.b16 %v474
    %v846 = vunpack.c.l.b16 %v475
    %v847 = vunpack.c.h.b16 %v475
    %v848 = vunpack.c.l.b16 %v476
    %v849 = vunpack.c.h.b16 %v476
    %v850 = vunpack.c.l.b16 %v477
    %v851 = vunpack.c.h.b16 %v477
    %v852 = vunpack.c.l.b16 %v478
    %v853 = vunpack.c.h.b16 %v478
    %v854 = vunpack.c.l.b16 %v479
    %v855 = vunpack.c.h.b16 %v479
    %v856 = vunpack.c.l.b16 %v480
    %v857 = vunpack.c.h.b16 %v480
    %v858 = vunpack.c.l.b16 %v481
    %v859 = vunpack.c.h.b16 %v481
    %v860 = vunpack.c.l.b16 %v482
    %v861 = vunpack.c.h.b16 %v482
    %v862 = vunpack.c.l.b16 %v483
    %v863 = vunpack.c.h.b16 %v483
    %v864 = vunpack.c.l.b16 %v484
    %v865 = vunpack.c.h.b16 %v484
    %v866 = vunpack.c.l.b16 %v485
    %v867 = vunpack.c.h.b16 %v485
    %v868 = vunpack.c.l.b16 %v486
    %v869 = vunpack.c.h.b16 %v486
    %v870 = vunpack.c.l.b16 %v487
    %v871 = vunpack.c.h.b16 %v487
    %v872 = vunpack.c.l.b16 %v488
    %v873 = vunpack.c.h.b16 %v488
    %v874 = vunpack.c.l.b16 %v489
    %v875 = vunpack.c.h.b16 %v489
    %v876 = vunpack.c.l.b16 %v490
    %v877 = vunpack.c.h.b16 %v490
    %v878 = vunpack.c.l.b16 %v491
    %v879 = vunpack.c.h.b16 %v491
    %v880 = vunpack.c.l.b16 %v492
    %v881 = vunpack.c.h.b16 %v492
    %v882 = vunpack.c.l.b16 %v493
    %v883 = vunpack.c.h.b16 %v493
    %v884 = vunpack.c.l.b16 %v494
    %v885 = vunpack.c.h.b16 %v494
    %v886 = vunpack.c.l.b16 %v495
    %v887 = vunpack.c.h.b16 %v495
    %v888 = vunpack.c.l.b16 %v496
    %v889 = vunpack.c.h.b16 %v496
    %v890 = vunpack.c.l.b16 %v497
    %v891 = vunpack.c.h.b16 %v497
    %v892 = vunpack.c.l.b16 %v498
    %v893 = vunpack.c.h.b16 %v498
    %v894 = vunpack.c.l.b16 %v499
    %v895 = vunpack.c.h.b16 %v499
    %v896 = vunpack.c.l.b16 %v500
    %v897 = vunpack.c.h.b16 %v500
    %v898 = vunpack.c.l.b16 %v501
    %v899 = vunpack.c.h.b16 %v501
    %v900 = vunpack.c.l.b16 %v502
    %v901 = vunpack.c.h.b16 %v502
    %v902 = vunpack.c.l.b16 %v503
    %v903 = vunpack.c.h.b16 %v503
    %v904 = vunpack.c.l.b16 %v504
    %v905 = vunpack.c.h.b16 %v504
    %v906 = vunpack.c.l.b16 %v505
    %v907 = vunpack.c.h.b16 %v505
    %v908 = vunpack.c.l.b16 %v506
    %v909 = vunpack.c.h.b16 %v506
    %v910 = vunpack.c.l.b16 %v507
    %v911 = vunpack.c.h.b16 %v507
    %v912 = vunpack.c.l.b16 %v508
    %v913 = vunpack.c.h.b16 %v508
    %v914 = vunpack.c.l.b16 %v509
    %v915 = vunpack.c.h.b16 %v509
    %v916 = vunpack.c.l.b16 %v510
    %v917 = vunpack.c.h.b16 %v510
    %v918 = vunpack.c.l.b16 %v511
    %v919 = vunpack.c.h.b16 %v511
    %v920 = vunpack.c.l.b16 %v512
    %v921 = vunpack.c.h.b16 %v512
    %v922 = vunpack.c.l.b16 %v513
    %v923 = vunpack.c.h.b16 %v513
    %v924 = vunpack.c.l.b16 %v514
    %v925 = vunpack.c.h.b16 %v514
    %v926 = vunpack.c.l.b16 %v515
    %v927 = vunpack.c.h.b16 %v515
    %v928 = vunpack.c.l.b16 %v516
    %v929 = vunpack.c.h.b16 %v516
    %v930 = vunpack.c.l.b16 %v517
    %v931 = vunpack.c.h.b16 %v517
    %v932 = vunpack.c.l.b16 %v518
    %v933 = vunpack.c.h.b16 %v518
    %v934 = vunpack.c.l.b16 %v519
    %v935 = vunpack.c.h.b16 %v519
    %v936 = vunpack.c.l.b16 %v520
    %v937 = vunpack.c.h.b16 %v520
    %v938 = vunpack.c.l.b16 %v521
    %v939 = vunpack.c.h.b16 %v521
    %v940 = vunpack.c.l.b16 %v522
    %v941 = vunpack.c.h.b16 %v522
    %v942 = vunpack.c.l.b16 %v523
    %v943 = vunpack.c.h.b16 %v523
    %v944 = vunpack.c.l.b16 %v524
    %v945 = vunpack.c.h.b16 %v524
    %v946 = vpack.c.b16 %v706, %v690
    %v947 = vpack.c.b16 %v707, %v691
    %v948 = vpack.c.b16 %v708, %v692
    %v949 = vpack.c.b16 %v709, %v693
    %v950 = vpack.c.b16 %v710, %v694
    %v951 = vpack.c.b16 %v711, %v695
    %v952 = vpack.c.b16 %v712, %v696
    %v953 = vpack.c.b16 %v713, %v697
    %v954 = vpack.c.b16 %v714, %v698
    %v955 = vpack.c.b16 %v715, %v699
    %v956 = vpack.c.b16 %v716, %v700
    %v957 = vpack.c.b16 %v717, %v701
    %v958 = vpack.c.b16 %v718, %v702
    %v959 = vpack.c.b16 %v719, %v703
    %v960 = vpack.c.b16 %v720, %v704
    %v961 = vpack.c.b16 %v721, %v705
    %v962 = vpack.c.b16 %v738, %v722
    %v963 = vpack.c.b16 %v739, %v723
    %v964 = vpack.c.b16 %v740, %v724
    %v965 = vpack.c.b16 %v741, %v725
    %v966 = vpack.c.b16 %v742, %v726
    %v967 = vpack.c.b16 %v743, %v727
    %v968 = vpack.c.b16 %v744, %v728
    %v969 = vpack.c.b16 %v745, %v729
    %v970 = vpack.c.b16 %v746, %v730
    %v971 = vpack.c.b16 %v747, %v731
    %v972 = vpack.c.b16 %v748, %v732
    %v973 = vpack.c.b16 %v749, %v733
    %v974 = vpack.c.b16 %v750, %v734
    %v975 = vpack.c.b16 %v751, %v735
    %v976 = vpack.c.b16 %v752, %v736
    %v977 = vpack.c.b16 %v753, %v737
    %v978 = vpack.c.b16 %v770, %v754
    %v979 = vpack.c.b16 %v771, %v755
    %v980 = vpack.c.b16 %v772, %v756
    %v981 = vpack.c.b16 %v773, %v757
    %v982 = vpack.c.b16 %v774, %v758
    %v983 = vpack.c.b16 %v775, %v759
    %v984 = vpack.c.b16 %v776, %v760
    %v985 = vpack.c.b16 %v777, %v761
    %v986 = vpack.c.b16 %v778, %v762
    %v987 = vpack.c.b16 %v779, %v763
    %v988 = vpack.c.b16 %v780, %v764
    %v989 = vpack.c.b16 %v781, %v765
    %v990 = vpack.c.b16 %v782, %v766
    %v991 = vpack.c.b16 %v783, %v767
    %v992 = vpack.c.b16 %v784, %v768
    %v993 = vpack.c.b16 %v785, %v769
    %v994 = vpack.c.b16 %v802, %v786
    %v995 = vpack.c.b16 %v803, %v787
    %v996 = vpack.c.b16 %v804, %v788
    %v997 = vpack.c.b16 %v805, %v789
    %v998 = vpack.c.b16 %v806, %v790
    %v999 = vpack.c.b16 %v807, %v791
    %v1000 = vpack.c.b16 %v808, %v792
    %v1001 = vpack.c.b16 %v809, %v793
    %v1002 = vpack.c.b16 %v810, %v794
    %v1003 = vpack.c.b16 %v811, %v795
    %v1004 = vpack.c.b16 %v812, %v796
    %v1005 = vpack.c.b16 %v813, %v797
    %v1006 = vpack.c.b16 %v814, %v798
    %v1007 = vpack.c.b16 %v815, %v799
    %v1008 = vpack.c.b16 %v816, %v800
    %v1009 = vpack.c.b16 %v817, %v801
    %v1010 = vpack.c.b16 %v834, %v818
    %v1011 = vpack.c.b16 %v835, %v819
    %v1012 = vpack.c.b16 %v836, %v820
    %v1013 = vpack.c.b16 %v837, %v821
    %v1014 = vpack.c.b16 %v838, %v822
    %v1015 = vpack.c.b16 %v839, %v823
    %v1016 = vpack.c.b16 %v840, %v824
    %v1017 = vpack.c.b16 %v841, %v825
    %v1018 = vpack.c.b16 %v842, %v826
    %v1019 = vpack.c.b16 %v843, %v827
    %v1020 = vpack.c.b16 %v844, %v828
    %v1021 = vpack.c.b16 %v845, %v829
    %v1022 = vpack.c.b16 %v846, %v830
    %v1023 = vpack.c.b16 %v847, %v831
    %v1024 = vpack.c.b16 %v848, %v832
    %v1025 = vpack.c.b16 %v849, %v833
    %v1026 = vpack.c.b16 %v866, %v850
    %v1027 = vpack.c.b16 %v867, %v851
    %v1028 = vpack.c.b16 %v868, %v852
    %v1029 = vpack.c.b16 %v869, %v853
    %v1030 = vpack.c.b16 %v870, %v854
    %v1031 = vpack.c.b16 %v871, %v855
    %v1032 = vpack.c.b16 %v872, %v856
    %v1033 = vpack.c.b16 %v873, %v857
    %v1034 = vpack.c.b16 %v874, %v858
    %v1035 = vpack.c.b16 %v875, %v859
    %v1036 = vpack.c.b16 %v876, %v860
    %v1037 = vpack.c.b16 %v877, %v861
    %v1038 = vpack.c.b16 %v878, %v862
    %v1039 = vpack.c.b16 %v879, %v863
    %v1040 = vpack.c.b16 %v880, %v864
    %v1041 = vpack.c.b16 %v881, %v865
    %v1042 = vpack.c.b16 %v898, %v882
    %v1043 = vpack.c.b16 %v899, %v883
    %v1044 = vpack.c.b16 %v900, %v884
    %v1045 = vpack.c.b16 %v901, %v885
    %v1046 = vpack.c.b16 %v902, %v886
    %v1047 = vpack.c.b16 %v903, %v887
    %v1048 = vpack.c.b16 %v904, %v888
    %v1049 = vpack.c.b16 %v905, %v889
    %v1050 = vpack.c.b16 %v906, %v890
    %v1051 = vpack.c.b16 %v907, %v891
    %v1052 = vpack.c.b16 %v908, %v892
    %v1053 = vpack.c.b16 %v909, %v893
    %v1054 = vpack.c.b16 %v910, %v894
    %v1055 = vpack.c.b16 %v911, %v895
    %v1056 = vpack.c.b16 %v912, %v896
    %v1057 = vpack.c.b16 %v913, %v897
    %v1058 = vpack.c.b16 %v930, %v914
    %v1059 = vpack.c.b16 %v931, %v915
    %v1060 = vpack.c.b16 %v932, %v916
    %v1061 = vpack.c.b16 %v933, %v917
    %v1062 = vpack.c.b16 %v934, %v918
    %v1063 = vpack.c.b16 %v935, %v919
    %v1064 = vpack.c.b16 %v936, %v920
    %v1065 = vpack.c.b16 %v937, %v921
    %v1066 = vpack.c.b16 %v938, %v922
    %v1067 = vpack.c.b16 %v939, %v923
    %v1068 = vpack.c.b16 %v940, %v924
    %v1069 = vpack.c.b16 %v941, %v925
    %v1070 = vpack.c.b16 %v942, %v926
    %v1071 = vpack.c.b16 %v943, %v927
    %v1072 = vpack.c.b16 %v944, %v928
    %v1073 = vpack.c.b16 %v945, %v929
    %1202 = vmatpush.bf16.msra.mxu0 %v1058
    %1203 = vmatpush.bf16.msra.mxu0 %v1042
    %1204 = vmatpush.bf16.msra.mxu0 %v1026
    %1205 = vmatpush.bf16.msra.mxu0 %v1010
    %1206 = vmatpush.bf16.msra.mxu0 %v994
    %1207 = vmatpush.bf16.msra.mxu0 %v978
    %1208 = vmatpush.bf16.msra.mxu0 %v962
    %1209 = vmatpush.bf16.msra.mxu0 %v946
    %1210 = vmatmul.bf16.gmra.mxu0 %v525
    %v1211 = vpop.f32.mrf.mxu0
    %v1212 = vadd.f32 %v530, %v1211
    %v1213 = vpop.f32.mrf.mxu0
    %v1214 = vadd.f32 %v530, %v1213
    %1215 = vdwg.mxu0
    %1216 = vmatpush.bf16.msra.mxu0 %v1059
    %1217 = vmatpush.bf16.msra.mxu0 %v1043
    %1218 = vmatpush.bf16.msra.mxu0 %v1027
    %1219 = vmatpush.bf16.msra.mxu0 %v1011
    %1220 = vmatpush.bf16.msra.mxu0 %v995
    %1221 = vmatpush.bf16.msra.mxu0 %v979
    %1222 = vmatpush.bf16.msra.mxu0 %v963
    %1223 = vmatpush.bf16.msra.mxu0 %v947
    %1224 = vmatmul.bf16.gmra.mxu0 %v525
    %v1225 = vpop.f32.mrf.mxu0
    %v1226 = vadd.f32 %v531, %v1225
    %v1227 = vpop.f32.mrf.mxu0
    %v1228 = vadd.f32 %v531, %v1227
    %1229 = vdwg.mxu0
    %1230 = vmatpush.bf16.msra.mxu0 %v1060
    %1231 = vmatpush.bf16.msra.mxu0 %v1044
    %1232 = vmatpush.bf16.msra.mxu0 %v1028
    %1233 = vmatpush.bf16.msra.mxu0 %v1012
    %1234 = vmatpush.bf16.msra.mxu0 %v996
    %1235 = vmatpush.bf16.msra.mxu0 %v980
    %1236 = vmatpush.bf16.msra.mxu0 %v964
    %1237 = vmatpush.bf16.msra.mxu0 %v948
    %1238 = vmatmul.bf16.gmra.mxu0 %v525
    %v1239 = vpop.f32.mrf.mxu0
    %v1240 = vadd.f32 %v532, %v1239
    %v1241 = vpop.f32.mrf.mxu0
    %v1242 = vadd.f32 %v532, %v1241
    %1243 = vdwg.mxu0
    %1244 = vmatpush.bf16.msra.mxu0 %v1061
    %1245 = vmatpush.bf16.msra.mxu0 %v1045
    %1246 = vmatpush.bf16.msra.mxu0 %v1029
    %1247 = vmatpush.bf16.msra.mxu0 %v1013
    %1248 = vmatpush.bf16.msra.mxu0 %v997
    %1249 = vmatpush.bf16.msra.mxu0 %v981
    %1250 = vmatpush.bf16.msra.mxu0 %v965
    %1251 = vmatpush.bf16.msra.mxu0 %v949
    %1252 = vmatmul.bf16.gmra.mxu0 %v525
    %v1253 = vpop.f32.mrf.mxu0
    %v1254 = vadd.f32 %v533, %v1253
    %v1255 = vpop.f32.mrf.mxu0
    %v1256 = vadd.f32 %v533, %v1255
    %1257 = vdwg.mxu0
    %1258 = vmatpush.bf16.msra.mxu0 %v1062
    %1259 = vmatpush.bf16.msra.mxu0 %v1046
    %1260 = vmatpush.bf16.msra.mxu0 %v1030
    %1261 = vmatpush.bf16.msra.mxu0 %v1014
    %1262 = vmatpush.bf16.msra.mxu0 %v998
    %1263 = vmatpush.bf16.msra.mxu0 %v982
    %1264 = vmatpush.bf16.msra.mxu0 %v966
    %1265 = vmatpush.bf16.msra.mxu0 %v950
    %1266 = vmatmul.bf16.gmra.mxu0 %v525
    %v1267 = vpop.f32.mrf.mxu0
    %v1268 = vadd.f32 %v534, %v1267
    %v1269 = vpop.f32.mrf.mxu0
    %v1270 = vadd.f32 %v534, %v1269
    %1271 = vdwg.mxu0
    %1272 = vmatpush.bf16.msra.mxu0 %v1063
    %1273 = vmatpush.bf16.msra.mxu0 %v1047
    %1274 = vmatpush.bf16.msra.mxu0 %v1031
    %1275 = vmatpush.bf16.msra.mxu0 %v1015
    %1276 = vmatpush.bf16.msra.mxu0 %v999
    %1277 = vmatpush.bf16.msra.mxu0 %v983
    %1278 = vmatpush.bf16.msra.mxu0 %v967
    %1279 = vmatpush.bf16.msra.mxu0 %v951
    %1280 = vmatmul.bf16.gmra.mxu0 %v525
    %v1281 = vpop.f32.mrf.mxu0
    %v1282 = vadd.f32 %v535, %v1281
    %v1283 = vpop.f32.mrf.mxu0
    %v1284 = vadd.f32 %v535, %v1283
    %1285 = vdwg.mxu0
    %1286 = vmatpush.bf16.msra.mxu0 %v1064
    %1287 = vmatpush.bf16.msra.mxu0 %v1048
    %1288 = vmatpush.bf16.msra.mxu0 %v1032
    %1289 = vmatpush.bf16.msra.mxu0 %v1016
    %1290 = vmatpush.bf16.msra.mxu0 %v1000
    %1291 = vmatpush.bf16.msra.mxu0 %v984
    %1292 = vmatpush.bf16.msra.mxu0 %v968
    %1293 = vmatpush.bf16.msra.mxu0 %v952
    %1294 = vmatmul.bf16.gmra.mxu0 %v525
    %v1295 = vpop.f32.mrf.mxu0
    %v1296 = vadd.f32 %v536, %v1295
    %v1297 = vpop.f32.mrf.mxu0
    %v1298 = vadd.f32 %v536, %v1297
    %1299 = vdwg.mxu0
    %1300 = vmatpush.bf16.msra.mxu0 %v1065
    %1301 = vmatpush.bf16.msra.mxu0 %v1049
    %1302 = vmatpush.bf16.msra.mxu0 %v1033
    %1303 = vmatpush.bf16.msra.mxu0 %v1017
    %1304 = vmatpush.bf16.msra.mxu0 %v1001
    %1305 = vmatpush.bf16.msra.mxu0 %v985
    %1306 = vmatpush.bf16.msra.mxu0 %v969
    %1307 = vmatpush.bf16.msra.mxu0 %v953
    %1308 = vmatmul.bf16.gmra.mxu0 %v525
    %v1309 = vpop.f32.mrf.mxu0
    %v1310 = vadd.f32 %v537, %v1309
    %v1311 = vpop.f32.mrf.mxu0
    %v1312 = vadd.f32 %v537, %v1311
    %1313 = vdwg.mxu0
    %1314 = vmatpush.bf16.msra.mxu0 %v1066
    %1315 = vmatpush.bf16.msra.mxu0 %v1050
    %1316 = vmatpush.bf16.msra.mxu0 %v1034
    %1317 = vmatpush.bf16.msra.mxu0 %v1018
    %1318 = vmatpush.bf16.msra.mxu0 %v1002
    %1319 = vmatpush.bf16.msra.mxu0 %v986
    %1320 = vmatpush.bf16.msra.mxu0 %v970
    %1321 = vmatpush.bf16.msra.mxu0 %v954
    %1322 = vmatmul.bf16.gmra.mxu0 %v525
    %v1323 = vpop.f32.mrf.mxu0
    %v1324 = vadd.f32 %v538, %v1323
    %v1325 = vpop.f32.mrf.mxu0
    %v1326 = vadd.f32 %v538, %v1325
    %1327 = vdwg.mxu0
    %1328 = vmatpush.bf16.msra.mxu0 %v1067
    %1329 = vmatpush.bf16.msra.mxu0 %v1051
    %1330 = vmatpush.bf16.msra.mxu0 %v1035
    %1331 = vmatpush.bf16.msra.mxu0 %v1019
    %1332 = vmatpush.bf16.msra.mxu0 %v1003
    %1333 = vmatpush.bf16.msra.mxu0 %v987
    %1334 = vmatpush.bf16.msra.mxu0 %v971
    %1335 = vmatpush.bf16.msra.mxu0 %v955
    %1336 = vmatmul.bf16.gmra.mxu0 %v525
    %v1337 = vpop.f32.mrf.mxu0
    %v1338 = vadd.f32 %v539, %v1337
    %v1339 = vpop.f32.mrf.mxu0
    %v1340 = vadd.f32 %v539, %v1339
    %1341 = vdwg.mxu0
    %1342 = vmatpush.bf16.msra.mxu0 %v1068
    %1343 = vmatpush.bf16.msra.mxu0 %v1052
    %1344 = vmatpush.bf16.msra.mxu0 %v1036
    %1345 = vmatpush.bf16.msra.mxu0 %v1020
    %1346 = vmatpush.bf16.msra.mxu0 %v1004
    %1347 = vmatpush.bf16.msra.mxu0 %v988
    %1348 = vmatpush.bf16.msra.mxu0 %v972
    %1349 = vmatpush.bf16.msra.mxu0 %v956
    %1350 = vmatmul.bf16.gmra.mxu0 %v525
    %v1351 = vpop.f32.mrf.mxu0
    %v1352 = vadd.f32 %v540, %v1351
    %v1353 = vpop.f32.mrf.mxu0
    %v1354 = vadd.f32 %v540, %v1353
    %1355 = vdwg.mxu0
    %1356 = vmatpush.bf16.msra.mxu0 %v1069
    %1357 = vmatpush.bf16.msra.mxu0 %v1053
    %1358 = vmatpush.bf16.msra.mxu0 %v1037
    %1359 = vmatpush.bf16.msra.mxu0 %v1021
    %1360 = vmatpush.bf16.msra.mxu0 %v1005
    %1361 = vmatpush.bf16.msra.mxu0 %v989
    %1362 = vmatpush.bf16.msra.mxu0 %v973
    %1363 = vmatpush.bf16.msra.mxu0 %v957
    %1364 = vmatmul.bf16.gmra.mxu0 %v525
    %v1365 = vpop.f32.mrf.mxu0
    %v1366 = vadd.f32 %v541, %v1365
    %v1367 = vpop.f32.mrf.mxu0
    %v1368 = vadd.f32 %v541, %v1367
    %1369 = vdwg.mxu0
    %1370 = vmatpush.bf16.msra.mxu0 %v1070
    %1371 = vmatpush.bf16.msra.mxu0 %v1054
    %1372 = vmatpush.bf16.msra.mxu0 %v1038
    %1373 = vmatpush.bf16.msra.mxu0 %v1022
    %1374 = vmatpush.bf16.msra.mxu0 %v1006
    %1375 = vmatpush.bf16.msra.mxu0 %v990
    %1376 = vmatpush.bf16.msra.mxu0 %v974
    %1377 = vmatpush.bf16.msra.mxu0 %v958
    %1378 = vmatmul.bf16.gmra.mxu0 %v525
    %v1379 = vpop.f32.mrf.mxu0
    %v1380 = vadd.f32 %v542, %v1379
    %v1381 = vpop.f32.mrf.mxu0
    %v1382 = vadd.f32 %v542, %v1381
    %1383 = vdwg.mxu0
    %1384 = vmatpush.bf16.msra.mxu0 %v1071
    %1385 = vmatpush.bf16.msra.mxu0 %v1055
    %1386 = vmatpush.bf16.msra.mxu0 %v1039
    %1387 = vmatpush.bf16.msra.mxu0 %v1023
    %1388 = vmatpush.bf16.msra.mxu0 %v1007
    %1389 = vmatpush.bf16.msra.mxu0 %v991
    %1390 = vmatpush.bf16.msra.mxu0 %v975
    %1391 = vmatpush.bf16.msra.mxu0 %v959
    %1392 = vmatmul.bf16.gmra.mxu0 %v525
    %v1393 = vpop.f32.mrf.mxu0
    %v1394 = vadd.f32 %v543, %v1393
    %v1395 = vpop.f32.mrf.mxu0
    %v1396 = vadd.f32 %v543, %v1395
    %1397 = vdwg.mxu0
    %1398 = vmatpush.bf16.msra.mxu0 %v1072
    %1399 = vmatpush.bf16.msra.mxu0 %v1056
    %1400 = vmatpush.bf16.msra.mxu0 %v1040
    %1401 = vmatpush.bf16.msra.mxu0 %v1024
    %1402 = vmatpush.bf16.msra.mxu0 %v1008
    %1403 = vmatpush.bf16.msra.mxu0 %v992
    %1404 = vmatpush.bf16.msra.mxu0 %v976
    %1405 = vmatpush.bf16.msra.mxu0 %v960
    %1406 = vmatmul.bf16.gmra.mxu0 %v525
    %v1407 = vpop.f32.mrf.mxu0
    %v1408 = vadd.f32 %v544, %v1407
    %v1409 = vpop.f32.mrf.mxu0
    %v1410 = vadd.f32 %v544, %v1409
    %1411 = vdwg.mxu0
    %1412 = vmatpush.bf16.msra.mxu0 %v1073
    %1413 = vmatpush.bf16.msra.mxu0 %v1057
    %1414 = vmatpush.bf16.msra.mxu0 %v1041
    %1415 = vmatpush.bf16.msra.mxu0 %v1025
    %1416 = vmatpush.bf16.msra.mxu0 %v1009
    %1417 = vmatpush.bf16.msra.mxu0 %v993
    %1418 = vmatpush.bf16.msra.mxu0 %v977
    %1419 = vmatpush.bf16.msra.mxu0 %v961
    %1420 = vmatmul.bf16.gmra.mxu0 %v525
    %v1421 = vpop.f32.mrf.mxu0
    %v1422 = vadd.f32 %v545, %v1421
    %v1423 = vpop.f32.mrf.mxu0
    %v1424 = vadd.f32 %v545, %v1423
    %1425 = vdwg.mxu0
    %v1426 = vmax.f32 %v1212, 0.0
    %v1427 = vmax.f32 %v1226, 0.0
    %v1428 = vmax.f32 %v1240, 0.0
    %v1429 = vmax.f32 %v1254, 0.0
    %v1430 = vmax.f32 %v1268, 0.0
    %v1431 = vmax.f32 %v1282, 0.0
    %v1432 = vmax.f32 %v1296, 0.0
    %v1433 = vmax.f32 %v1310, 0.0
    %v1434 = vmax.f32 %v1324, 0.0
    %v1435 = vmax.f32 %v1338, 0.0
    %v1436 = vmax.f32 %v1352, 0.0
    %v1437 = vmax.f32 %v1366, 0.0
    %v1438 = vmax.f32 %v1380, 0.0
    %v1439 = vmax.f32 %v1394, 0.0
    %v1440 = vmax.f32 %v1408, 0.0
    %v1441 = vmax.f32 %v1422, 0.0
    %v1442 = vmax.f32 %v1214, 0.0
    %v1443 = vmax.f32 %v1228, 0.0
    %v1444 = vmax.f32 %v1242, 0.0
    %v1445 = vmax.f32 %v1256, 0.0
    %v1446 = vmax.f32 %v1270, 0.0
    %v1447 = vmax.f32 %v1284, 0.0
    %v1448 = vmax.f32 %v1298, 0.0
    %v1449 = vmax.f32 %v1312, 0.0
    %v1450 = vmax.f32 %v1326, 0.0
    %v1451 = vmax.f32 %v1340, 0.0
    %v1452 = vmax.f32 %v1354, 0.0
    %v1453 = vmax.f32 %v1368, 0.0
    %v1454 = vmax.f32 %v1382, 0.0
    %v1455 = vmax.f32 %v1396, 0.0
    %v1456 = vmax.f32 %v1410, 0.0
    %v1457 = vmax.f32 %v1424, 0.0
    %v1458 = vld [vmem:[#allocation11] sm:$0xf]
    %v1459 = vld [vmem:[#allocation11 + $0x4] sm:$0xf]
    %v1460 = vld [vmem:[#allocation11 + $0x8] sm:$0xf]
    %v1461 = vld [vmem:[#allocation11 + $0xc] sm:$0xf]
    %v1462 = vld [vmem:[#allocation11 + $0x10] sm:$0xf]
    %v1463 = vld [vmem:[#allocation11 + $0x14] sm:$0xf]
    %v1464 = vld [vmem:[#allocation11 + $0x18] sm:$0xf]
    %v1465 = vld [vmem:[#allocation11 + $0x1c] sm:$0xf]
    %v1466 = vld [vmem:[#allocation11 + $0x20] sm:$0xf]
    %v1467 = vld [vmem:[#allocation11 + $0x24] sm:$0xf]
    %v1468 = vld [vmem:[#allocation11 + $0x28] sm:$0xf]
    %v1469 = vld [vmem:[#allocation11 + $0x2c] sm:$0xf]
    %v1470 = vld [vmem:[#allocation11 + $0x30] sm:$0xf]
    %v1471 = vld [vmem:[#allocation11 + $0x34] sm:$0xf]
    %v1472 = vld [vmem:[#allocation11 + $0x38] sm:$0xf]
    %v1473 = vld [vmem:[#allocation11 + $0x3c] sm:$0xf]
    %v1474 = vld [vmem:[#allocation11 + $0x40] sm:$0xf]
    %v1475 = vld [vmem:[#allocation11 + $0x44] sm:$0xf]
    %v1476 = vld [vmem:[#allocation11 + $0x48] sm:$0xf]
    %v1477 = vld [vmem:[#allocation11 + $0x4c] sm:$0xf]
    %v1478 = vld [vmem:[#allocation11 + $0x50] sm:$0xf]
    %v1479 = vld [vmem:[#allocation11 + $0x54] sm:$0xf]
    %v1480 = vld [vmem:[#allocation11 + $0x58] sm:$0xf]
    %v1481 = vld [vmem:[#allocation11 + $0x5c] sm:$0xf]
    %v1482 = vld [vmem:[#allocation11 + $0x60] sm:$0xf]
    %v1483 = vld [vmem:[#allocation11 + $0x64] sm:$0xf]
    %v1484 = vld [vmem:[#allocation11 + $0x68] sm:$0xf]
    %v1485 = vld [vmem:[#allocation11 + $0x6c] sm:$0xf]
    %v1486 = vld [vmem:[#allocation11 + $0x70] sm:$0xf]
    %v1487 = vld [vmem:[#allocation11 + $0x74] sm:$0xf]
    %v1488 = vld [vmem:[#allocation11 + $0x78] sm:$0xf]
    %v1489 = vld [vmem:[#allocation11 + $0x7c] sm:$0xf]
    %v1490 = vld [vmem:[#allocation11 + $0x80] sm:$0xf]
    %v1491 = vld [vmem:[#allocation11 + $0x84] sm:$0xf]
    %v1492 = vld [vmem:[#allocation11 + $0x88] sm:$0xf]
    %v1493 = vld [vmem:[#allocation11 + $0x8c] sm:$0xf]
    %v1494 = vld [vmem:[#allocation11 + $0x90] sm:$0xf]
    %v1495 = vld [vmem:[#allocation11 + $0x94] sm:$0xf]
    %v1496 = vld [vmem:[#allocation11 + $0x98] sm:$0xf]
    %v1497 = vld [vmem:[#allocation11 + $0x9c] sm:$0xf]
    %v1498 = vld [vmem:[#allocation11 + $0xa0] sm:$0xf]
    %v1499 = vld [vmem:[#allocation11 + $0xa4] sm:$0xf]
    %v1500 = vld [vmem:[#allocation11 + $0xa8] sm:$0xf]
    %v1501 = vld [vmem:[#allocation11 + $0xac] sm:$0xf]
    %v1502 = vld [vmem:[#allocation11 + $0xb0] sm:$0xf]
    %v1503 = vld [vmem:[#allocation11 + $0xb4] sm:$0xf]
    %v1504 = vld [vmem:[#allocation11 + $0xb8] sm:$0xf]
    %v1505 = vld [vmem:[#allocation11 + $0xbc] sm:$0xf]
    %v1506 = vld [vmem:[#allocation11 + $0xc0] sm:$0xf]
    %v1507 = vld [vmem:[#allocation11 + $0xc4] sm:$0xf]
    %v1508 = vld [vmem:[#allocation11 + $0xc8] sm:$0xf]
    %v1509 = vld [vmem:[#allocation11 + $0xcc] sm:$0xf]
    %v1510 = vld [vmem:[#allocation11 + $0xd0] sm:$0xf]
    %v1511 = vld [vmem:[#allocation11 + $0xd4] sm:$0xf]
    %v1512 = vld [vmem:[#allocation11 + $0xd8] sm:$0xf]
    %v1513 = vld [vmem:[#allocation11 + $0xdc] sm:$0xf]
    %v1514 = vld [vmem:[#allocation11 + $0xe0] sm:$0xf]
    %v1515 = vld [vmem:[#allocation11 + $0xe4] sm:$0xf]
    %v1516 = vld [vmem:[#allocation11 + $0xe8] sm:$0xf]
    %v1517 = vld [vmem:[#allocation11 + $0xec] sm:$0xf]
    %v1518 = vld [vmem:[#allocation11 + $0xf0] sm:$0xf]
    %v1519 = vld [vmem:[#allocation11 + $0xf4] sm:$0xf]
    %v1520 = vld [vmem:[#allocation11 + $0xf8] sm:$0xf]
    %v1521 = vld [vmem:[#allocation11 + $0xfc] sm:$0xf]
    %v1522 = vld [vmem:[#allocation11 + $0x100] sm:$0xf]
    %v1523 = vld [vmem:[#allocation11 + $0x104] sm:$0xf]
    %v1524 = vld [vmem:[#allocation11 + $0x108] sm:$0xf]
    %v1525 = vld [vmem:[#allocation11 + $0x10c] sm:$0xf]
    %v1526 = vld [vmem:[#allocation11 + $0x110] sm:$0xf]
    %v1527 = vld [vmem:[#allocation11 + $0x114] sm:$0xf]
    %v1528 = vld [vmem:[#allocation11 + $0x118] sm:$0xf]
    %v1529 = vld [vmem:[#allocation11 + $0x11c] sm:$0xf]
    %v1530 = vld [vmem:[#allocation11 + $0x120] sm:$0xf]
    %v1531 = vld [vmem:[#allocation11 + $0x124] sm:$0xf]
    %v1532 = vld [vmem:[#allocation11 + $0x128] sm:$0xf]
    %v1533 = vld [vmem:[#allocation11 + $0x12c] sm:$0xf]
    %v1534 = vld [vmem:[#allocation11 + $0x130] sm:$0xf]
    %v1535 = vld [vmem:[#allocation11 + $0x134] sm:$0xf]
    %v1536 = vld [vmem:[#allocation11 + $0x138] sm:$0xf]
    %v1537 = vld [vmem:[#allocation11 + $0x13c] sm:$0xf]
    %v1538 = vld [vmem:[#allocation11 + $0x140] sm:$0xf]
    %v1539 = vld [vmem:[#allocation11 + $0x144] sm:$0xf]
    %v1540 = vld [vmem:[#allocation11 + $0x148] sm:$0xf]
    %v1541 = vld [vmem:[#allocation11 + $0x14c] sm:$0xf]
    %v1542 = vld [vmem:[#allocation11 + $0x150] sm:$0xf]
    %v1543 = vld [vmem:[#allocation11 + $0x154] sm:$0xf]
    %v1544 = vld [vmem:[#allocation11 + $0x158] sm:$0xf]
    %v1545 = vld [vmem:[#allocation11 + $0x15c] sm:$0xf]
    %v1546 = vld [vmem:[#allocation11 + $0x160] sm:$0xf]
    %v1547 = vld [vmem:[#allocation11 + $0x164] sm:$0xf]
    %v1548 = vld [vmem:[#allocation11 + $0x168] sm:$0xf]
    %v1549 = vld [vmem:[#allocation11 + $0x16c] sm:$0xf]
    %v1550 = vld [vmem:[#allocation11 + $0x170] sm:$0xf]
    %v1551 = vld [vmem:[#allocation11 + $0x174] sm:$0xf]
    %v1552 = vld [vmem:[#allocation11 + $0x178] sm:$0xf]
    %v1553 = vld [vmem:[#allocation11 + $0x17c] sm:$0xf]
    %v1554 = vld [vmem:[#allocation11 + $0x180] sm:$0xf]
    %v1555 = vld [vmem:[#allocation11 + $0x184] sm:$0xf]
    %v1556 = vld [vmem:[#allocation11 + $0x188] sm:$0xf]
    %v1557 = vld [vmem:[#allocation11 + $0x18c] sm:$0xf]
    %v1558 = vld [vmem:[#allocation11 + $0x190] sm:$0xf]
    %v1559 = vld [vmem:[#allocation11 + $0x194] sm:$0xf]
    %v1560 = vld [vmem:[#allocation11 + $0x198] sm:$0xf]
    %v1561 = vld [vmem:[#allocation11 + $0x19c] sm:$0xf]
    %v1562 = vld [vmem:[#allocation11 + $0x1a0] sm:$0xf]
    %v1563 = vld [vmem:[#allocation11 + $0x1a4] sm:$0xf]
    %v1564 = vld [vmem:[#allocation11 + $0x1a8] sm:$0xf]
    %v1565 = vld [vmem:[#allocation11 + $0x1ac] sm:$0xf]
    %v1566 = vld [vmem:[#allocation11 + $0x1b0] sm:$0xf]
    %v1567 = vld [vmem:[#allocation11 + $0x1b4] sm:$0xf]
    %v1568 = vld [vmem:[#allocation11 + $0x1b8] sm:$0xf]
    %v1569 = vld [vmem:[#allocation11 + $0x1bc] sm:$0xf]
    %v1570 = vld [vmem:[#allocation11 + $0x1c0] sm:$0xf]
    %v1571 = vld [vmem:[#allocation11 + $0x1c4] sm:$0xf]
    %v1572 = vld [vmem:[#allocation11 + $0x1c8] sm:$0xf]
    %v1573 = vld [vmem:[#allocation11 + $0x1cc] sm:$0xf]
    %v1574 = vld [vmem:[#allocation11 + $0x1d0] sm:$0xf]
    %v1575 = vld [vmem:[#allocation11 + $0x1d4] sm:$0xf]
    %v1576 = vld [vmem:[#allocation11 + $0x1d8] sm:$0xf]
    %v1577 = vld [vmem:[#allocation11 + $0x1dc] sm:$0xf]
    %v1578 = vld [vmem:[#allocation11 + $0x1e0] sm:$0xf]
    %v1579 = vld [vmem:[#allocation11 + $0x1e4] sm:$0xf]
    %v1580 = vld [vmem:[#allocation11 + $0x1e8] sm:$0xf]
    %v1581 = vld [vmem:[#allocation11 + $0x1ec] sm:$0xf]
    %v1582 = vld [vmem:[#allocation11 + $0x1f0] sm:$0xf]
    %v1583 = vld [vmem:[#allocation11 + $0x1f4] sm:$0xf]
    %v1584 = vld [vmem:[#allocation11 + $0x1f8] sm:$0xf]
    %v1585 = vld [vmem:[#allocation11 + $0x1fc] sm:$0xf]
    %v1586 = vld [vmem:[#allocation11 + $0x200] sm:$0xf]
    %v1587 = vld [vmem:[#allocation11 + $0x204] sm:$0xf]
    %v1588 = vld [vmem:[#allocation11 + $0x208] sm:$0xf]
    %v1589 = vld [vmem:[#allocation11 + $0x20c] sm:$0xf]
    %v1590 = vld [vmem:[#allocation11 + $0x210] sm:$0xf]
    %v1591 = vld [vmem:[#allocation11 + $0x214] sm:$0xf]
    %v1592 = vld [vmem:[#allocation11 + $0x218] sm:$0xf]
    %v1593 = vld [vmem:[#allocation11 + $0x21c] sm:$0xf]
    %v1594 = vld [vmem:[#allocation11 + $0x220] sm:$0xf]
    %v1595 = vld [vmem:[#allocation11 + $0x224] sm:$0xf]
    %v1596 = vld [vmem:[#allocation11 + $0x228] sm:$0xf]
    %v1597 = vld [vmem:[#allocation11 + $0x22c] sm:$0xf]
    %v1598 = vld [vmem:[#allocation11 + $0x230] sm:$0xf]
    %v1599 = vld [vmem:[#allocation11 + $0x234] sm:$0xf]
    %v1600 = vld [vmem:[#allocation11 + $0x238] sm:$0xf]
    %v1601 = vld [vmem:[#allocation11 + $0x23c] sm:$0xf]
    %v1602 = vld [vmem:[#allocation11 + $0x240] sm:$0xf]
    %v1603 = vld [vmem:[#allocation11 + $0x244] sm:$0xf]
    %v1604 = vld [vmem:[#allocation11 + $0x248] sm:$0xf]
    %v1605 = vld [vmem:[#allocation11 + $0x24c] sm:$0xf]
    %v1606 = vld [vmem:[#allocation11 + $0x250] sm:$0xf]
    %v1607 = vld [vmem:[#allocation11 + $0x254] sm:$0xf]
    %v1608 = vld [vmem:[#allocation11 + $0x258] sm:$0xf]
    %v1609 = vld [vmem:[#allocation11 + $0x25c] sm:$0xf]
    %v1610 = vld [vmem:[#allocation11 + $0x260] sm:$0xf]
    %v1611 = vld [vmem:[#allocation11 + $0x264] sm:$0xf]
    %v1612 = vld [vmem:[#allocation11 + $0x268] sm:$0xf]
    %v1613 = vld [vmem:[#allocation11 + $0x26c] sm:$0xf]
    %v1614 = vld [vmem:[#allocation11 + $0x270] sm:$0xf]
    %v1615 = vld [vmem:[#allocation11 + $0x274] sm:$0xf]
    %v1616 = vld [vmem:[#allocation11 + $0x278] sm:$0xf]
    %v1617 = vld [vmem:[#allocation11 + $0x27c] sm:$0xf]
    %v1618 = vld [vmem:[#allocation11 + $0x280] sm:$0xf]
    %v1619 = vld [vmem:[#allocation11 + $0x284] sm:$0xf]
    %v1620 = vld [vmem:[#allocation11 + $0x288] sm:$0xf]
    %v1621 = vld [vmem:[#allocation11 + $0x28c] sm:$0xf]
    %v1622 = vld [vmem:[#allocation11 + $0x290] sm:$0xf]
    %v1623 = vld [vmem:[#allocation11 + $0x294] sm:$0xf]
    %v1624 = vld [vmem:[#allocation11 + $0x298] sm:$0xf]
    %v1625 = vld [vmem:[#allocation11 + $0x29c] sm:$0xf]
    %v1626 = vld [vmem:[#allocation11 + $0x2a0] sm:$0xf]
    %v1627 = vld [vmem:[#allocation11 + $0x2a4] sm:$0xf]
    %v1628 = vld [vmem:[#allocation11 + $0x2a8] sm:$0xf]
    %v1629 = vld [vmem:[#allocation11 + $0x2ac] sm:$0xf]
    %v1630 = vld [vmem:[#allocation11 + $0x2b0] sm:$0xf]
    %v1631 = vld [vmem:[#allocation11 + $0x2b4] sm:$0xf]
    %v1632 = vld [vmem:[#allocation11 + $0x2b8] sm:$0xf]
    %v1633 = vld [vmem:[#allocation11 + $0x2bc] sm:$0xf]
    %v1634 = vld [vmem:[#allocation11 + $0x2c0] sm:$0xf]
    %v1635 = vld [vmem:[#allocation11 + $0x2c4] sm:$0xf]
    %v1636 = vld [vmem:[#allocation11 + $0x2c8] sm:$0xf]
    %v1637 = vld [vmem:[#allocation11 + $0x2cc] sm:$0xf]
    %v1638 = vld [vmem:[#allocation11 + $0x2d0] sm:$0xf]
    %v1639 = vld [vmem:[#allocation11 + $0x2d4] sm:$0xf]
    %v1640 = vld [vmem:[#allocation11 + $0x2d8] sm:$0xf]
    %v1641 = vld [vmem:[#allocation11 + $0x2dc] sm:$0xf]
    %v1642 = vld [vmem:[#allocation11 + $0x2e0] sm:$0xf]
    %v1643 = vld [vmem:[#allocation11 + $0x2e4] sm:$0xf]
    %v1644 = vld [vmem:[#allocation11 + $0x2e8] sm:$0xf]
    %v1645 = vld [vmem:[#allocation11 + $0x2ec] sm:$0xf]
    %v1646 = vld [vmem:[#allocation11 + $0x2f0] sm:$0xf]
    %v1647 = vld [vmem:[#allocation11 + $0x2f4] sm:$0xf]
    %v1648 = vld [vmem:[#allocation11 + $0x2f8] sm:$0xf]
    %v1649 = vld [vmem:[#allocation11 + $0x2fc] sm:$0xf]
    %v1650 = vld [vmem:[#allocation11 + $0x300] sm:$0xf]
    %v1651 = vld [vmem:[#allocation11 + $0x304] sm:$0xf]
    %v1652 = vld [vmem:[#allocation11 + $0x308] sm:$0xf]
    %v1653 = vld [vmem:[#allocation11 + $0x30c] sm:$0xf]
    %v1654 = vld [vmem:[#allocation11 + $0x310] sm:$0xf]
    %v1655 = vld [vmem:[#allocation11 + $0x314] sm:$0xf]
    %v1656 = vld [vmem:[#allocation11 + $0x318] sm:$0xf]
    %v1657 = vld [vmem:[#allocation11 + $0x31c] sm:$0xf]
    %v1658 = vld [vmem:[#allocation11 + $0x320] sm:$0xf]
    %v1659 = vld [vmem:[#allocation11 + $0x324] sm:$0xf]
    %v1660 = vld [vmem:[#allocation11 + $0x328] sm:$0xf]
    %v1661 = vld [vmem:[#allocation11 + $0x32c] sm:$0xf]
    %v1662 = vld [vmem:[#allocation11 + $0x330] sm:$0xf]
    %v1663 = vld [vmem:[#allocation11 + $0x334] sm:$0xf]
    %v1664 = vld [vmem:[#allocation11 + $0x338] sm:$0xf]
    %v1665 = vld [vmem:[#allocation11 + $0x33c] sm:$0xf]
    %v1666 = vld [vmem:[#allocation11 + $0x340] sm:$0xf]
    %v1667 = vld [vmem:[#allocation11 + $0x344] sm:$0xf]
    %v1668 = vld [vmem:[#allocation11 + $0x348] sm:$0xf]
    %v1669 = vld [vmem:[#allocation11 + $0x34c] sm:$0xf]
    %v1670 = vld [vmem:[#allocation11 + $0x350] sm:$0xf]
    %v1671 = vld [vmem:[#allocation11 + $0x354] sm:$0xf]
    %v1672 = vld [vmem:[#allocation11 + $0x358] sm:$0xf]
    %v1673 = vld [vmem:[#allocation11 + $0x35c] sm:$0xf]
    %v1674 = vld [vmem:[#allocation11 + $0x360] sm:$0xf]
    %v1675 = vld [vmem:[#allocation11 + $0x364] sm:$0xf]
    %v1676 = vld [vmem:[#allocation11 + $0x368] sm:$0xf]
    %v1677 = vld [vmem:[#allocation11 + $0x36c] sm:$0xf]
    %v1678 = vld [vmem:[#allocation11 + $0x370] sm:$0xf]
    %v1679 = vld [vmem:[#allocation11 + $0x374] sm:$0xf]
    %v1680 = vld [vmem:[#allocation11 + $0x378] sm:$0xf]
    %v1681 = vld [vmem:[#allocation11 + $0x37c] sm:$0xf]
    %v1682 = vld [vmem:[#allocation11 + $0x380] sm:$0xf]
    %v1683 = vld [vmem:[#allocation11 + $0x384] sm:$0xf]
    %v1684 = vld [vmem:[#allocation11 + $0x388] sm:$0xf]
    %v1685 = vld [vmem:[#allocation11 + $0x38c] sm:$0xf]
    %v1686 = vld [vmem:[#allocation11 + $0x390] sm:$0xf]
    %v1687 = vld [vmem:[#allocation11 + $0x394] sm:$0xf]
    %v1688 = vld [vmem:[#allocation11 + $0x398] sm:$0xf]
    %v1689 = vld [vmem:[#allocation11 + $0x39c] sm:$0xf]
    %v1690 = vld [vmem:[#allocation11 + $0x3a0] sm:$0xf]
    %v1691 = vld [vmem:[#allocation11 + $0x3a4] sm:$0xf]
    %v1692 = vld [vmem:[#allocation11 + $0x3a8] sm:$0xf]
    %v1693 = vld [vmem:[#allocation11 + $0x3ac] sm:$0xf]
    %v1694 = vld [vmem:[#allocation11 + $0x3b0] sm:$0xf]
    %v1695 = vld [vmem:[#allocation11 + $0x3b4] sm:$0xf]
    %v1696 = vld [vmem:[#allocation11 + $0x3b8] sm:$0xf]
    %v1697 = vld [vmem:[#allocation11 + $0x3bc] sm:$0xf]
    %v1698 = vld [vmem:[#allocation11 + $0x3c0] sm:$0xf]
    %v1699 = vld [vmem:[#allocation11 + $0x3c4] sm:$0xf]
    %v1700 = vld [vmem:[#allocation11 + $0x3c8] sm:$0xf]
    %v1701 = vld [vmem:[#allocation11 + $0x3cc] sm:$0xf]
    %v1702 = vld [vmem:[#allocation11 + $0x3d0] sm:$0xf]
    %v1703 = vld [vmem:[#allocation11 + $0x3d4] sm:$0xf]
    %v1704 = vld [vmem:[#allocation11 + $0x3d8] sm:$0xf]
    %v1705 = vld [vmem:[#allocation11 + $0x3dc] sm:$0xf]
    %v1706 = vld [vmem:[#allocation11 + $0x3e0] sm:$0xf]
    %v1707 = vld [vmem:[#allocation11 + $0x3e4] sm:$0xf]
    %v1708 = vld [vmem:[#allocation11 + $0x3e8] sm:$0xf]
    %v1709 = vld [vmem:[#allocation11 + $0x3ec] sm:$0xf]
    %v1710 = vld [vmem:[#allocation11 + $0x3f0] sm:$0xf]
    %v1711 = vld [vmem:[#allocation11 + $0x3f4] sm:$0xf]
    %v1712 = vld [vmem:[#allocation11 + $0x3f8] sm:$0xf]
    %v1713 = vld [vmem:[#allocation11 + $0x3fc] sm:$0xf]
    %v1714 = vpack.c.bf16 %v1442, %v1426
    %v1715 = vpack.c.bf16 %v1443, %v1427
    %v1716 = vpack.c.bf16 %v1444, %v1428
    %v1717 = vpack.c.bf16 %v1445, %v1429
    %v1718 = vpack.c.bf16 %v1446, %v1430
    %v1719 = vpack.c.bf16 %v1447, %v1431
    %v1720 = vpack.c.bf16 %v1448, %v1432
    %v1721 = vpack.c.bf16 %v1449, %v1433
    %v1722 = vpack.c.bf16 %v1450, %v1434
    %v1723 = vpack.c.bf16 %v1451, %v1435
    %v1724 = vpack.c.bf16 %v1452, %v1436
    %v1725 = vpack.c.bf16 %v1453, %v1437
    %v1726 = vpack.c.bf16 %v1454, %v1438
    %v1727 = vpack.c.bf16 %v1455, %v1439
    %v1728 = vpack.c.bf16 %v1456, %v1440
    %v1729 = vpack.c.bf16 %v1457, %v1441
    %v1730 = vld [vmem:[#allocation19 + $0x4] sm:$0x1]
    %v1731 = vperm.slane %v1730, 0
    %v1988 = vunpack.c.l.b16 %v1458
    %v1989 = vunpack.c.l.b16 %v1459
    %v1990 = vunpack.c.l.b16 %v1460
    %v1991 = vunpack.c.l.b16 %v1461
    %v1992 = vunpack.c.l.b16 %v1462
    %v1993 = vunpack.c.l.b16 %v1463
    %v1994 = vunpack.c.l.b16 %v1464
    %v1995 = vunpack.c.l.b16 %v1465
    %v1996 = vunpack.c.l.b16 %v1466
    %v1997 = vunpack.c.l.b16 %v1467
    %v1998 = vunpack.c.l.b16 %v1468
    %v1999 = vunpack.c.l.b16 %v1469
    %v2000 = vunpack.c.l.b16 %v1470
    %v2001 = vunpack.c.l.b16 %v1471
    %v2002 = vunpack.c.l.b16 %v1472
    %v2003 = vunpack.c.l.b16 %v1473
    %v2004 = vunpack.c.l.b16 %v1474
    %v2005 = vunpack.c.l.b16 %v1475
    %v2006 = vunpack.c.l.b16 %v1476
    %v2007 = vunpack.c.l.b16 %v1477
    %v2008 = vunpack.c.l.b16 %v1478
    %v2009 = vunpack.c.l.b16 %v1479
    %v2010 = vunpack.c.l.b16 %v1480
    %v2011 = vunpack.c.l.b16 %v1481
    %v2012 = vunpack.c.l.b16 %v1482
    %v2013 = vunpack.c.l.b16 %v1483
    %v2014 = vunpack.c.l.b16 %v1484
    %v2015 = vunpack.c.l.b16 %v1485
    %v2016 = vunpack.c.l.b16 %v1486
    %v2017 = vunpack.c.l.b16 %v1487
    %v2018 = vunpack.c.l.b16 %v1488
    %v2019 = vunpack.c.l.b16 %v1489
    %v2020 = vunpack.c.l.b16 %v1490
    %v2021 = vunpack.c.l.b16 %v1491
    %v2022 = vunpack.c.l.b16 %v1492
    %v2023 = vunpack.c.l.b16 %v1493
    %v2024 = vunpack.c.l.b16 %v1494
    %v2025 = vunpack.c.l.b16 %v1495
    %v2026 = vunpack.c.l.b16 %v1496
    %v2027 = vunpack.c.l.b16 %v1497
    %v2028 = vunpack.c.l.b16 %v1498
    %v2029 = vunpack.c.l.b16 %v1499
    %v2030 = vunpack.c.l.b16 %v1500
    %v2031 = vunpack.c.l.b16 %v1501
    %v2032 = vunpack.c.l.b16 %v1502
    %v2033 = vunpack.c.l.b16 %v1503
    %v2034 = vunpack.c.l.b16 %v1504
    %v2035 = vunpack.c.l.b16 %v1505
    %v2036 = vunpack.c.l.b16 %v1506
    %v2037 = vunpack.c.l.b16 %v1507
    %v2038 = vunpack.c.l.b16 %v1508
    %v2039 = vunpack.c.l.b16 %v1509
    %v2040 = vunpack.c.l.b16 %v1510
    %v2041 = vunpack.c.l.b16 %v1511
    %v2042 = vunpack.c.l.b16 %v1512
    %v2043 = vunpack.c.l.b16 %v1513
    %v2044 = vunpack.c.l.b16 %v1514
    %v2045 = vunpack.c.l.b16 %v1515
    %v2046 = vunpack.c.l.b16 %v1516
    %v2047 = vunpack.c.l.b16 %v1517
    %v2048 = vunpack.c.l.b16 %v1518
    %v2049 = vunpack.c.l.b16 %v1519
    %v2050 = vunpack.c.l.b16 %v1520
    %v2051 = vunpack.c.l.b16 %v1521
    %v2052 = vunpack.c.l.b16 %v1522
    %v2053 = vunpack.c.l.b16 %v1523
    %v2054 = vunpack.c.l.b16 %v1524
    %v2055 = vunpack.c.l.b16 %v1525
    %v2056 = vunpack.c.l.b16 %v1526
    %v2057 = vunpack.c.l.b16 %v1527
    %v2058 = vunpack.c.l.b16 %v1528
    %v2059 = vunpack.c.l.b16 %v1529
    %v2060 = vunpack.c.l.b16 %v1530
    %v2061 = vunpack.c.l.b16 %v1531
    %v2062 = vunpack.c.l.b16 %v1532
    %v2063 = vunpack.c.l.b16 %v1533
    %v2064 = vunpack.c.l.b16 %v1534
    %v2065 = vunpack.c.l.b16 %v1535
    %v2066 = vunpack.c.l.b16 %v1536
    %v2067 = vunpack.c.l.b16 %v1537
    %v2068 = vunpack.c.l.b16 %v1538
    %v2069 = vunpack.c.l.b16 %v1539
    %v2070 = vunpack.c.l.b16 %v1540
    %v2071 = vunpack.c.l.b16 %v1541
    %v2072 = vunpack.c.l.b16 %v1542
    %v2073 = vunpack.c.l.b16 %v1543
    %v2074 = vunpack.c.l.b16 %v1544
    %v2075 = vunpack.c.l.b16 %v1545
    %v2076 = vunpack.c.l.b16 %v1546
    %v2077 = vunpack.c.l.b16 %v1547
    %v2078 = vunpack.c.l.b16 %v1548
    %v2079 = vunpack.c.l.b16 %v1549
    %v2080 = vunpack.c.l.b16 %v1550
    %v2081 = vunpack.c.l.b16 %v1551
    %v2082 = vunpack.c.l.b16 %v1552
    %v2083 = vunpack.c.l.b16 %v1553
    %v2084 = vunpack.c.l.b16 %v1554
    %v2085 = vunpack.c.l.b16 %v1555
    %v2086 = vunpack.c.l.b16 %v1556
    %v2087 = vunpack.c.l.b16 %v1557
    %v2088 = vunpack.c.l.b16 %v1558
    %v2089 = vunpack.c.l.b16 %v1559
    %v2090 = vunpack.c.l.b16 %v1560
    %v2091 = vunpack.c.l.b16 %v1561
    %v2092 = vunpack.c.l.b16 %v1562
    %v2093 = vunpack.c.l.b16 %v1563
    %v2094 = vunpack.c.l.b16 %v1564
    %v2095 = vunpack.c.l.b16 %v1565
    %v2096 = vunpack.c.l.b16 %v1566
    %v2097 = vunpack.c.l.b16 %v1567
    %v2098 = vunpack.c.l.b16 %v1568
    %v2099 = vunpack.c.l.b16 %v1569
    %v2100 = vunpack.c.l.b16 %v1570
    %v2101 = vunpack.c.l.b16 %v1571
    %v2102 = vunpack.c.l.b16 %v1572
    %v2103 = vunpack.c.l.b16 %v1573
    %v2104 = vunpack.c.l.b16 %v1574
    %v2105 = vunpack.c.l.b16 %v1575
    %v2106 = vunpack.c.l.b16 %v1576
    %v2107 = vunpack.c.l.b16 %v1577
    %v2108 = vunpack.c.l.b16 %v1578
    %v2109 = vunpack.c.l.b16 %v1579
    %v2110 = vunpack.c.l.b16 %v1580
    %v2111 = vunpack.c.l.b16 %v1581
    %v2112 = vunpack.c.l.b16 %v1582
    %v2113 = vunpack.c.l.b16 %v1583
    %v2114 = vunpack.c.l.b16 %v1584
    %v2115 = vunpack.c.l.b16 %v1585
    %v2116 = vunpack.c.l.b16 %v1586
    %v2117 = vunpack.c.l.b16 %v1587
    %v2118 = vunpack.c.l.b16 %v1588
    %v2119 = vunpack.c.l.b16 %v1589
    %v2120 = vunpack.c.l.b16 %v1590
    %v2121 = vunpack.c.l.b16 %v1591
    %v2122 = vunpack.c.l.b16 %v1592
    %v2123 = vunpack.c.l.b16 %v1593
    %v2124 = vunpack.c.l.b16 %v1594
    %v2125 = vunpack.c.l.b16 %v1595
    %v2126 = vunpack.c.l.b16 %v1596
    %v2127 = vunpack.c.l.b16 %v1597
    %v2128 = vunpack.c.l.b16 %v1598
    %v2129 = vunpack.c.l.b16 %v1599
    %v2130 = vunpack.c.l.b16 %v1600
    %v2131 = vunpack.c.l.b16 %v1601
    %v2132 = vunpack.c.l.b16 %v1602
    %v2133 = vunpack.c.l.b16 %v1603
    %v2134 = vunpack.c.l.b16 %v1604
    %v2135 = vunpack.c.l.b16 %v1605
    %v2136 = vunpack.c.l.b16 %v1606
    %v2137 = vunpack.c.l.b16 %v1607
    %v2138 = vunpack.c.l.b16 %v1608
    %v2139 = vunpack.c.l.b16 %v1609
    %v2140 = vunpack.c.l.b16 %v1610
    %v2141 = vunpack.c.l.b16 %v1611
    %v2142 = vunpack.c.l.b16 %v1612
    %v2143 = vunpack.c.l.b16 %v1613
    %v2144 = vunpack.c.l.b16 %v1614
    %v2145 = vunpack.c.l.b16 %v1615
    %v2146 = vunpack.c.l.b16 %v1616
    %v2147 = vunpack.c.l.b16 %v1617
    %v2148 = vunpack.c.l.b16 %v1618
    %v2149 = vunpack.c.l.b16 %v1619
    %v2150 = vunpack.c.l.b16 %v1620
    %v2151 = vunpack.c.l.b16 %v1621
    %v2152 = vunpack.c.l.b16 %v1622
    %v2153 = vunpack.c.l.b16 %v1623
    %v2154 = vunpack.c.l.b16 %v1624
    %v2155 = vunpack.c.l.b16 %v1625
    %v2156 = vunpack.c.l.b16 %v1626
    %v2157 = vunpack.c.l.b16 %v1627
    %v2158 = vunpack.c.l.b16 %v1628
    %v2159 = vunpack.c.l.b16 %v1629
    %v2160 = vunpack.c.l.b16 %v1630
    %v2161 = vunpack.c.l.b16 %v1631
    %v2162 = vunpack.c.l.b16 %v1632
    %v2163 = vunpack.c.l.b16 %v1633
    %v2164 = vunpack.c.l.b16 %v1634
    %v2165 = vunpack.c.l.b16 %v1635
    %v2166 = vunpack.c.l.b16 %v1636
    %v2167 = vunpack.c.l.b16 %v1637
    %v2168 = vunpack.c.l.b16 %v1638
    %v2169 = vunpack.c.l.b16 %v1639
    %v2170 = vunpack.c.l.b16 %v1640
    %v2171 = vunpack.c.l.b16 %v1641
    %v2172 = vunpack.c.l.b16 %v1642
    %v2173 = vunpack.c.l.b16 %v1643
    %v2174 = vunpack.c.l.b16 %v1644
    %v2175 = vunpack.c.l.b16 %v1645
    %v2176 = vunpack.c.l.b16 %v1646
    %v2177 = vunpack.c.l.b16 %v1647
    %v2178 = vunpack.c.l.b16 %v1648
    %v2179 = vunpack.c.l.b16 %v1649
    %v2180 = vunpack.c.l.b16 %v1650
    %v2181 = vunpack.c.l.b16 %v1651
    %v2182 = vunpack.c.l.b16 %v1652
    %v2183 = vunpack.c.l.b16 %v1653
    %v2184 = vunpack.c.l.b16 %v1654
    %v2185 = vunpack.c.l.b16 %v1655
    %v2186 = vunpack.c.l.b16 %v1656
    %v2187 = vunpack.c.l.b16 %v1657
    %v2188 = vunpack.c.l.b16 %v1658
    %v2189 = vunpack.c.l.b16 %v1659
    %v2190 = vunpack.c.l.b16 %v1660
    %v2191 = vunpack.c.l.b16 %v1661
    %v2192 = vunpack.c.l.b16 %v1662
    %v2193 = vunpack.c.l.b16 %v1663
    %v2194 = vunpack.c.l.b16 %v1664
    %v2195 = vunpack.c.l.b16 %v1665
    %v2196 = vunpack.c.l.b16 %v1666
    %v2197 = vunpack.c.l.b16 %v1667
    %v2198 = vunpack.c.l.b16 %v1668
    %v2199 = vunpack.c.l.b16 %v1669
    %v2200 = vunpack.c.l.b16 %v1670
    %v2201 = vunpack.c.l.b16 %v1671
    %v2202 = vunpack.c.l.b16 %v1672
    %v2203 = vunpack.c.l.b16 %v1673
    %v2204 = vunpack.c.l.b16 %v1674
    %v2205 = vunpack.c.l.b16 %v1675
    %v2206 = vunpack.c.l.b16 %v1676
    %v2207 = vunpack.c.l.b16 %v1677
    %v2208 = vunpack.c.l.b16 %v1678
    %v2209 = vunpack.c.l.b16 %v1679
    %v2210 = vunpack.c.l.b16 %v1680
    %v2211 = vunpack.c.l.b16 %v1681
    %v2212 = vunpack.c.l.b16 %v1682
    %v2213 = vunpack.c.l.b16 %v1683
    %v2214 = vunpack.c.l.b16 %v1684
    %v2215 = vunpack.c.l.b16 %v1685
    %v2216 = vunpack.c.l.b16 %v1686
    %v2217 = vunpack.c.l.b16 %v1687
    %v2218 = vunpack.c.l.b16 %v1688
    %v2219 = vunpack.c.l.b16 %v1689
    %v2220 = vunpack.c.l.b16 %v1690
    %v2221 = vunpack.c.l.b16 %v1691
    %v2222 = vunpack.c.l.b16 %v1692
    %v2223 = vunpack.c.l.b16 %v1693
    %v2224 = vunpack.c.l.b16 %v1694
    %v2225 = vunpack.c.l.b16 %v1695
    %v2226 = vunpack.c.l.b16 %v1696
    %v2227 = vunpack.c.l.b16 %v1697
    %v2228 = vunpack.c.l.b16 %v1698
    %v2229 = vunpack.c.l.b16 %v1699
    %v2230 = vunpack.c.l.b16 %v1700
    %v2231 = vunpack.c.l.b16 %v1701
    %v2232 = vunpack.c.l.b16 %v1702
    %v2233 = vunpack.c.l.b16 %v1703
    %v2234 = vunpack.c.l.b16 %v1704
    %v2235 = vunpack.c.l.b16 %v1705
    %v2236 = vunpack.c.l.b16 %v1706
    %v2237 = vunpack.c.l.b16 %v1707
    %v2238 = vunpack.c.l.b16 %v1708
    %v2239 = vunpack.c.l.b16 %v1709
    %v2240 = vunpack.c.l.b16 %v1710
    %v2241 = vunpack.c.l.b16 %v1711
    %v2242 = vunpack.c.l.b16 %v1712
    %v2243 = vunpack.c.l.b16 %v1713
    %v2244 = vpack.c.b16 %v1989, %v1988
    %v2245 = vpack.c.b16 %v1991, %v1990
    %v2246 = vpack.c.b16 %v1993, %v1992
    %v2247 = vpack.c.b16 %v1995, %v1994
    %v2248 = vpack.c.b16 %v1997, %v1996
    %v2249 = vpack.c.b16 %v1999, %v1998
    %v2250 = vpack.c.b16 %v2001, %v2000
    %v2251 = vpack.c.b16 %v2003, %v2002
    %v2252 = vpack.c.b16 %v2005, %v2004
    %v2253 = vpack.c.b16 %v2007, %v2006
    %v2254 = vpack.c.b16 %v2009, %v2008
    %v2255 = vpack.c.b16 %v2011, %v2010
    %v2256 = vpack.c.b16 %v2013, %v2012
    %v2257 = vpack.c.b16 %v2015, %v2014
    %v2258 = vpack.c.b16 %v2017, %v2016
    %v2259 = vpack.c.b16 %v2019, %v2018
    %v2260 = vpack.c.b16 %v2021, %v2020
    %v2261 = vpack.c.b16 %v2023, %v2022
    %v2262 = vpack.c.b16 %v2025, %v2024
    %v2263 = vpack.c.b16 %v2027, %v2026
    %v2264 = vpack.c.b16 %v2029, %v2028
    %v2265 = vpack.c.b16 %v2031, %v2030
    %v2266 = vpack.c.b16 %v2033, %v2032
    %v2267 = vpack.c.b16 %v2035, %v2034
    %v2268 = vpack.c.b16 %v2037, %v2036
    %v2269 = vpack.c.b16 %v2039, %v2038
    %v2270 = vpack.c.b16 %v2041, %v2040
    %v2271 = vpack.c.b16 %v2043, %v2042
    %v2272 = vpack.c.b16 %v2045, %v2044
    %v2273 = vpack.c.b16 %v2047, %v2046
    %v2274 = vpack.c.b16 %v2049, %v2048
    %v2275 = vpack.c.b16 %v2051, %v2050
    %v2276 = vpack.c.b16 %v2053, %v2052
    %v2277 = vpack.c.b16 %v2055, %v2054
    %v2278 = vpack.c.b16 %v2057, %v2056
    %v2279 = vpack.c.b16 %v2059, %v2058
    %v2280 = vpack.c.b16 %v2061, %v2060
    %v2281 = vpack.c.b16 %v2063, %v2062
    %v2282 = vpack.c.b16 %v2065, %v2064
    %v2283 = vpack.c.b16 %v2067, %v2066
    %v2284 = vpack.c.b16 %v2069, %v2068
    %v2285 = vpack.c.b16 %v2071, %v2070
    %v2286 = vpack.c.b16 %v2073, %v2072
    %v2287 = vpack.c.b16 %v2075, %v2074
    %v2288 = vpack.c.b16 %v2077, %v2076
    %v2289 = vpack.c.b16 %v2079, %v2078
    %v2290 = vpack.c.b16 %v2081, %v2080
    %v2291 = vpack.c.b16 %v2083, %v2082
    %v2292 = vpack.c.b16 %v2085, %v2084
    %v2293 = vpack.c.b16 %v2087, %v2086
    %v2294 = vpack.c.b16 %v2089, %v2088
    %v2295 = vpack.c.b16 %v2091, %v2090
    %v2296 = vpack.c.b16 %v2093, %v2092
    %v2297 = vpack.c.b16 %v2095, %v2094
    %v2298 = vpack.c.b16 %v2097, %v2096
    %v2299 = vpack.c.b16 %v2099, %v2098
    %v2300 = vpack.c.b16 %v2101, %v2100
    %v2301 = vpack.c.b16 %v2103, %v2102
    %v2302 = vpack.c.b16 %v2105, %v2104
    %v2303 = vpack.c.b16 %v2107, %v2106
    %v2304 = vpack.c.b16 %v2109, %v2108
    %v2305 = vpack.c.b16 %v2111, %v2110
    %v2306 = vpack.c.b16 %v2113, %v2112
    %v2307 = vpack.c.b16 %v2115, %v2114
    %v2308 = vpack.c.b16 %v2117, %v2116
    %v2309 = vpack.c.b16 %v2119, %v2118
    %v2310 = vpack.c.b16 %v2121, %v2120
    %v2311 = vpack.c.b16 %v2123, %v2122
    %v2312 = vpack.c.b16 %v2125, %v2124
    %v2313 = vpack.c.b16 %v2127, %v2126
    %v2314 = vpack.c.b16 %v2129, %v2128
    %v2315 = vpack.c.b16 %v2131, %v2130
    %v2316 = vpack.c.b16 %v2133, %v2132
    %v2317 = vpack.c.b16 %v2135, %v2134
    %v2318 = vpack.c.b16 %v2137, %v2136
    %v2319 = vpack.c.b16 %v2139, %v2138
    %v2320 = vpack.c.b16 %v2141, %v2140
    %v2321 = vpack.c.b16 %v2143, %v2142
    %v2322 = vpack.c.b16 %v2145, %v2144
    %v2323 = vpack.c.b16 %v2147, %v2146
    %v2324 = vpack.c.b16 %v2149, %v2148
    %v2325 = vpack.c.b16 %v2151, %v2150
    %v2326 = vpack.c.b16 %v2153, %v2152
    %v2327 = vpack.c.b16 %v2155, %v2154
    %v2328 = vpack.c.b16 %v2157, %v2156
    %v2329 = vpack.c.b16 %v2159, %v2158
    %v2330 = vpack.c.b16 %v2161, %v2160
    %v2331 = vpack.c.b16 %v2163, %v2162
    %v2332 = vpack.c.b16 %v2165, %v2164
    %v2333 = vpack.c.b16 %v2167, %v2166
    %v2334 = vpack.c.b16 %v2169, %v2168
    %v2335 = vpack.c.b16 %v2171, %v2170
    %v2336 = vpack.c.b16 %v2173, %v2172
    %v2337 = vpack.c.b16 %v2175, %v2174
    %v2338 = vpack.c.b16 %v2177, %v2176
    %v2339 = vpack.c.b16 %v2179, %v2178
    %v2340 = vpack.c.b16 %v2181, %v2180
    %v2341 = vpack.c.b16 %v2183, %v2182
    %v2342 = vpack.c.b16 %v2185, %v2184
    %v2343 = vpack.c.b16 %v2187, %v2186
    %v2344 = vpack.c.b16 %v2189, %v2188
    %v2345 = vpack.c.b16 %v2191, %v2190
    %v2346 = vpack.c.b16 %v2193, %v2192
    %v2347 = vpack.c.b16 %v2195, %v2194
    %v2348 = vpack.c.b16 %v2197, %v2196
    %v2349 = vpack.c.b16 %v2199, %v2198
    %v2350 = vpack.c.b16 %v2201, %v2200
    %v2351 = vpack.c.b16 %v2203, %v2202
    %v2352 = vpack.c.b16 %v2205, %v2204
    %v2353 = vpack.c.b16 %v2207, %v2206
    %v2354 = vpack.c.b16 %v2209, %v2208
    %v2355 = vpack.c.b16 %v2211, %v2210
    %v2356 = vpack.c.b16 %v2213, %v2212
    %v2357 = vpack.c.b16 %v2215, %v2214
    %v2358 = vpack.c.b16 %v2217, %v2216
    %v2359 = vpack.c.b16 %v2219, %v2218
    %v2360 = vpack.c.b16 %v2221, %v2220
    %v2361 = vpack.c.b16 %v2223, %v2222
    %v2362 = vpack.c.b16 %v2225, %v2224
    %v2363 = vpack.c.b16 %v2227, %v2226
    %v2364 = vpack.c.b16 %v2229, %v2228
    %v2365 = vpack.c.b16 %v2231, %v2230
    %v2366 = vpack.c.b16 %v2233, %v2232
    %v2367 = vpack.c.b16 %v2235, %v2234
    %v2368 = vpack.c.b16 %v2237, %v2236
    %v2369 = vpack.c.b16 %v2239, %v2238
    %v2370 = vpack.c.b16 %v2241, %v2240
    %v2371 = vpack.c.b16 %v2243, %v2242
    %2500 = vmatpush.bf16.msra.mxu0 %v2251
    %2501 = vmatpush.bf16.msra.mxu0 %v2250
    %2502 = vmatpush.bf16.msra.mxu0 %v2249
    %2503 = vmatpush.bf16.msra.mxu0 %v2248
    %2504 = vmatpush.bf16.msra.mxu0 %v2247
    %2505 = vmatpush.bf16.msra.mxu0 %v2246
    %2506 = vmatpush.bf16.msra.mxu0 %v2245
    %2507 = vmatpush.bf16.msra.mxu0 %v2244
    %2508 = vmatmul.bf16.gmra.mxu0 %v1714
    %v2509 = vpop.f32.mrf.mxu0
    %v2510 = vadd.f32 %v1731, %v2509
    %v2511 = vpop.f32.mrf.mxu0
    %v2512 = vadd.f32 %v1731, %v2511
    %2513 = vdwg.mxu0
    %2514 = vmatpush.bf16.msra.mxu0 %v2259
    %2515 = vmatpush.bf16.msra.mxu0 %v2258
    %2516 = vmatpush.bf16.msra.mxu0 %v2257
    %2517 = vmatpush.bf16.msra.mxu0 %v2256
    %2518 = vmatpush.bf16.msra.mxu0 %v2255
    %2519 = vmatpush.bf16.msra.mxu0 %v2254
    %2520 = vmatpush.bf16.msra.mxu0 %v2253
    %2521 = vmatpush.bf16.msra.mxu0 %v2252
    %2522 = vmatmul.bf16.gmra.mxu0 %v1715
    %v2523 = vpop.f32.mrf.mxu0
    %v2524 = vadd.f32 %v2510, %v2523
    %v2525 = vpop.f32.mrf.mxu0
    %v2526 = vadd.f32 %v2512, %v2525
    %2527 = vdwg.mxu0
    %2528 = vmatpush.bf16.msra.mxu0 %v2267
    %2529 = vmatpush.bf16.msra.mxu0 %v2266
    %2530 = vmatpush.bf16.msra.mxu0 %v2265
    %2531 = vmatpush.bf16.msra.mxu0 %v2264
    %2532 = vmatpush.bf16.msra.mxu0 %v2263
    %2533 = vmatpush.bf16.msra.mxu0 %v2262
    %2534 = vmatpush.bf16.msra.mxu0 %v2261
    %2535 = vmatpush.bf16.msra.mxu0 %v2260
    %2536 = vmatmul.bf16.gmra.mxu0 %v1716
    %v2537 = vpop.f32.mrf.mxu0
    %v2538 = vadd.f32 %v2524, %v2537
    %v2539 = vpop.f32.mrf.mxu0
    %v2540 = vadd.f32 %v2526, %v2539
    %2541 = vdwg.mxu0
    %2542 = vmatpush.bf16.msra.mxu0 %v2275
    %2543 = vmatpush.bf16.msra.mxu0 %v2274
    %2544 = vmatpush.bf16.msra.mxu0 %v2273
    %2545 = vmatpush.bf16.msra.mxu0 %v2272
    %2546 = vmatpush.bf16.msra.mxu0 %v2271
    %2547 = vmatpush.bf16.msra.mxu0 %v2270
    %2548 = vmatpush.bf16.msra.mxu0 %v2269
    %2549 = vmatpush.bf16.msra.mxu0 %v2268
    %2550 = vmatmul.bf16.gmra.mxu0 %v1717
    %v2551 = vpop.f32.mrf.mxu0
    %v2552 = vadd.f32 %v2538, %v2551
    %v2553 = vpop.f32.mrf.mxu0
    %v2554 = vadd.f32 %v2540, %v2553
    %2555 = vdwg.mxu0
    %2556 = vmatpush.bf16.msra.mxu0 %v2283
    %2557 = vmatpush.bf16.msra.mxu0 %v2282
    %2558 = vmatpush.bf16.msra.mxu0 %v2281
    %2559 = vmatpush.bf16.msra.mxu0 %v2280
    %2560 = vmatpush.bf16.msra.mxu0 %v2279
    %2561 = vmatpush.bf16.msra.mxu0 %v2278
    %2562 = vmatpush.bf16.msra.mxu0 %v2277
    %2563 = vmatpush.bf16.msra.mxu0 %v2276
    %2564 = vmatmul.bf16.gmra.mxu0 %v1718
    %v2565 = vpop.f32.mrf.mxu0
    %v2566 = vadd.f32 %v2552, %v2565
    %v2567 = vpop.f32.mrf.mxu0
    %v2568 = vadd.f32 %v2554, %v2567
    %2569 = vdwg.mxu0
    %2570 = vmatpush.bf16.msra.mxu0 %v2291
    %2571 = vmatpush.bf16.msra.mxu0 %v2290
    %2572 = vmatpush.bf16.msra.mxu0 %v2289
    %2573 = vmatpush.bf16.msra.mxu0 %v2288
    %2574 = vmatpush.bf16.msra.mxu0 %v2287
    %2575 = vmatpush.bf16.msra.mxu0 %v2286
    %2576 = vmatpush.bf16.msra.mxu0 %v2285
    %2577 = vmatpush.bf16.msra.mxu0 %v2284
    %2578 = vmatmul.bf16.gmra.mxu0 %v1719
    %v2579 = vpop.f32.mrf.mxu0
    %v2580 = vadd.f32 %v2566, %v2579
    %v2581 = vpop.f32.mrf.mxu0
    %v2582 = vadd.f32 %v2568, %v2581
    %2583 = vdwg.mxu0
    %2584 = vmatpush.bf16.msra.mxu0 %v2299
    %2585 = vmatpush.bf16.msra.mxu0 %v2298
    %2586 = vmatpush.bf16.msra.mxu0 %v2297
    %2587 = vmatpush.bf16.msra.mxu0 %v2296
    %2588 = vmatpush.bf16.msra.mxu0 %v2295
    %2589 = vmatpush.bf16.msra.mxu0 %v2294
    %2590 = vmatpush.bf16.msra.mxu0 %v2293
    %2591 = vmatpush.bf16.msra.mxu0 %v2292
    %2592 = vmatmul.bf16.gmra.mxu0 %v1720
    %v2593 = vpop.f32.mrf.mxu0
    %v2594 = vadd.f32 %v2580, %v2593
    %v2595 = vpop.f32.mrf.mxu0
    %v2596 = vadd.f32 %v2582, %v2595
    %2597 = vdwg.mxu0
    %2598 = vmatpush.bf16.msra.mxu0 %v2307
    %2599 = vmatpush.bf16.msra.mxu0 %v2306
    %2600 = vmatpush.bf16.msra.mxu0 %v2305
    %2601 = vmatpush.bf16.msra.mxu0 %v2304
    %2602 = vmatpush.bf16.msra.mxu0 %v2303
    %2603 = vmatpush.bf16.msra.mxu0 %v2302
    %2604 = vmatpush.bf16.msra.mxu0 %v2301
    %2605 = vmatpush.bf16.msra.mxu0 %v2300
    %2606 = vmatmul.bf16.gmra.mxu0 %v1721
    %v2607 = vpop.f32.mrf.mxu0
    %v2608 = vadd.f32 %v2594, %v2607
    %v2609 = vpop.f32.mrf.mxu0
    %v2610 = vadd.f32 %v2596, %v2609
    %2611 = vdwg.mxu0
    %2612 = vmatpush.bf16.msra.mxu0 %v2315
    %2613 = vmatpush.bf16.msra.mxu0 %v2314
    %2614 = vmatpush.bf16.msra.mxu0 %v2313
    %2615 = vmatpush.bf16.msra.mxu0 %v2312
    %2616 = vmatpush.bf16.msra.mxu0 %v2311
    %2617 = vmatpush.bf16.msra.mxu0 %v2310
    %2618 = vmatpush.bf16.msra.mxu0 %v2309
    %2619 = vmatpush.bf16.msra.mxu0 %v2308
    %2620 = vmatmul.bf16.gmra.mxu0 %v1722
    %v2621 = vpop.f32.mrf.mxu0
    %v2622 = vadd.f32 %v2608, %v2621
    %v2623 = vpop.f32.mrf.mxu0
    %v2624 = vadd.f32 %v2610, %v2623
    %2625 = vdwg.mxu0
    %2626 = vmatpush.bf16.msra.mxu0 %v2323
    %2627 = vmatpush.bf16.msra.mxu0 %v2322
    %2628 = vmatpush.bf16.msra.mxu0 %v2321
    %2629 = vmatpush.bf16.msra.mxu0 %v2320
    %2630 = vmatpush.bf16.msra.mxu0 %v2319
    %2631 = vmatpush.bf16.msra.mxu0 %v2318
    %2632 = vmatpush.bf16.msra.mxu0 %v2317
    %2633 = vmatpush.bf16.msra.mxu0 %v2316
    %2634 = vmatmul.bf16.gmra.mxu0 %v1723
    %v2635 = vpop.f32.mrf.mxu0
    %v2636 = vadd.f32 %v2622, %v2635
    %v2637 = vpop.f32.mrf.mxu0
    %v2638 = vadd.f32 %v2624, %v2637
    %2639 = vdwg.mxu0
    %2640 = vmatpush.bf16.msra.mxu0 %v2331
    %2641 = vmatpush.bf16.msra.mxu0 %v2330
    %2642 = vmatpush.bf16.msra.mxu0 %v2329
    %2643 = vmatpush.bf16.msra.mxu0 %v2328
    %2644 = vmatpush.bf16.msra.mxu0 %v2327
    %2645 = vmatpush.bf16.msra.mxu0 %v2326
    %2646 = vmatpush.bf16.msra.mxu0 %v2325
    %2647 = vmatpush.bf16.msra.mxu0 %v2324
    %2648 = vmatmul.bf16.gmra.mxu0 %v1724
    %v2649 = vpop.f32.mrf.mxu0
    %v2650 = vadd.f32 %v2636, %v2649
    %v2651 = vpop.f32.mrf.mxu0
    %v2652 = vadd.f32 %v2638, %v2651
    %2653 = vdwg.mxu0
    %2654 = vmatpush.bf16.msra.mxu0 %v2339
    %2655 = vmatpush.bf16.msra.mxu0 %v2338
    %2656 = vmatpush.bf16.msra.mxu0 %v2337
    %2657 = vmatpush.bf16.msra.mxu0 %v2336
    %2658 = vmatpush.bf16.msra.mxu0 %v2335
    %2659 = vmatpush.bf16.msra.mxu0 %v2334
    %2660 = vmatpush.bf16.msra.mxu0 %v2333
    %2661 = vmatpush.bf16.msra.mxu0 %v2332
    %2662 = vmatmul.bf16.gmra.mxu0 %v1725
    %v2663 = vpop.f32.mrf.mxu0
    %v2664 = vadd.f32 %v2650, %v2663
    %v2665 = vpop.f32.mrf.mxu0
    %v2666 = vadd.f32 %v2652, %v2665
    %2667 = vdwg.mxu0
    %2668 = vmatpush.bf16.msra.mxu0 %v2347
    %2669 = vmatpush.bf16.msra.mxu0 %v2346
    %2670 = vmatpush.bf16.msra.mxu0 %v2345
    %2671 = vmatpush.bf16.msra.mxu0 %v2344
    %2672 = vmatpush.bf16.msra.mxu0 %v2343
    %2673 = vmatpush.bf16.msra.mxu0 %v2342
    %2674 = vmatpush.bf16.msra.mxu0 %v2341
    %2675 = vmatpush.bf16.msra.mxu0 %v2340
    %2676 = vmatmul.bf16.gmra.mxu0 %v1726
    %v2677 = vpop.f32.mrf.mxu0
    %v2678 = vadd.f32 %v2664, %v2677
    %v2679 = vpop.f32.mrf.mxu0
    %v2680 = vadd.f32 %v2666, %v2679
    %2681 = vdwg.mxu0
    %2682 = vmatpush.bf16.msra.mxu0 %v2355
    %2683 = vmatpush.bf16.msra.mxu0 %v2354
    %2684 = vmatpush.bf16.msra.mxu0 %v2353
    %2685 = vmatpush.bf16.msra.mxu0 %v2352
    %2686 = vmatpush.bf16.msra.mxu0 %v2351
    %2687 = vmatpush.bf16.msra.mxu0 %v2350
    %2688 = vmatpush.bf16.msra.mxu0 %v2349
    %2689 = vmatpush.bf16.msra.mxu0 %v2348
    %2690 = vmatmul.bf16.gmra.mxu0 %v1727
    %v2691 = vpop.f32.mrf.mxu0
    %v2692 = vadd.f32 %v2678, %v2691
    %v2693 = vpop.f32.mrf.mxu0
    %v2694 = vadd.f32 %v2680, %v2693
    %2695 = vdwg.mxu0
    %2696 = vmatpush.bf16.msra.mxu0 %v2363
    %2697 = vmatpush.bf16.msra.mxu0 %v2362
    %2698 = vmatpush.bf16.msra.mxu0 %v2361
    %2699 = vmatpush.bf16.msra.mxu0 %v2360
    %2700 = vmatpush.bf16.msra.mxu0 %v2359
    %2701 = vmatpush.bf16.msra.mxu0 %v2358
    %2702 = vmatpush.bf16.msra.mxu0 %v2357
    %2703 = vmatpush.bf16.msra.mxu0 %v2356
    %2704 = vmatmul.bf16.gmra.mxu0 %v1728
    %v2705 = vpop.f32.mrf.mxu0
    %v2706 = vadd.f32 %v2692, %v2705
    %v2707 = vpop.f32.mrf.mxu0
    %v2708 = vadd.f32 %v2694, %v2707
    %2709 = vdwg.mxu0
    %2710 = vmatpush.bf16.msra.mxu0 %v2371
    %2711 = vmatpush.bf16.msra.mxu0 %v2370
    %2712 = vmatpush.bf16.msra.mxu0 %v2369
    %2713 = vmatpush.bf16.msra.mxu0 %v2368
    %2714 = vmatpush.bf16.msra.mxu0 %v2367
    %2715 = vmatpush.bf16.msra.mxu0 %v2366
    %2716 = vmatpush.bf16.msra.mxu0 %v2365
    %2717 = vmatpush.bf16.msra.mxu0 %v2364
    %2718 = vmatmul.bf16.gmra.mxu0 %v1729
    %v2719 = vpop.f32.mrf.mxu0
    %v2720 = vadd.f32 %v2706, %v2719
    %v2721 = vpop.f32.mrf.mxu0
    %v2722 = vadd.f32 %v2708, %v2721
    %2723 = vdwg.mxu0
    %v2724 = vadd.f32 %v395, %v2720
    %v2725 = vadd.f32 %v396, %v2722
    %v2726 = vld [vmem:[#allocation19 + $0x5] sm:$0x1]
    %v2727 = vld [vmem:[#allocation19 + $0x6] sm:$0x1]
    %2728 = vadd.xlane.f32.xlu0 %v2724
    %v2729 = vpop.xlane.xlu0 %2728
    %2730 = vadd.xlane.f32.xlu0 %v2725
    %v2731 = vpop.xlane.xlu0 %2730
    %v2732 = vmul.f32 %v2729, 0.010416667
    %v2733 = vmul.f32 %v2731, 0.010416667
    %v2734 = vsub.f32 %v2724, %v2732
    %v2735 = vsub.f32 %v2725, %v2733
    %v2736 = vmul.f32 %v2734, %v230
    %v2737 = vmul.f32 %v2735, %v230
    %v2738 = vmul.f32 %v2736, %v2736
    %v2739 = vmul.f32 %v2737, %v2737
    %2740 = vadd.xlane.f32.xlu0 %v2738
    %v2741 = vpop.xlane.xlu0 %2740
    %2742 = vadd.xlane.f32.xlu0 %v2739
    %v2743 = vpop.xlane.xlu0 %2742
    %v2744 = vmul.f32 %v2741, 0.010416667
    %v2745 = vmul.f32 %v2743, 0.010416667
    %v2746 = vadd.f32 %v2744, 1e-05
    %v2747 = vadd.f32 %v2745, 1e-05
    %v2748 = vrsqrt.pop %v2746
    %v2749 = vmul.f32 %v2748, %v2746
    %v2750 = vmul.f32 %v2749, %v2748
    %v2751 = vmul.f32 0.5, %v2750
    %v2752 = vsub.f32 1.5, %v2751
    %v2753 = vmul.f32 %v2748, %v2752
    %vm2754 = vweird.f32 %v2746
    %vm2755 = vweird.f32 %v2748
    %vm2756 = vmor %vm2754, %vm2755
    %v2757 = vsel %vm2756, %v2748, %v2753
    %v2758 = vrsqrt.pop %v2747
    %v2759 = vmul.f32 %v2758, %v2747
    %v2760 = vmul.f32 %v2759, %v2758
    %v2761 = vmul.f32 0.5, %v2760
    %v2762 = vsub.f32 1.5, %v2761
    %v2763 = vmul.f32 %v2758, %v2762
    %vm2764 = vweird.f32 %v2747
    %vm2765 = vweird.f32 %v2758
    %vm2766 = vmor %vm2764, %vm2765
    %v2767 = vsel %vm2766, %v2758, %v2763
    %v2768 = vmul.f32 %v2736, %v2757
    %v2769 = vmul.f32 %v2737, %v2767
    %v2770 = vperm.slane %v2726, 0
    %v2771 = vmul.f32 %v2768, %v2770
    %v2772 = vmul.f32 %v2769, %v2770
    %v2773 = vperm.slane %v2727, 0
    %v2774 = vadd.f32 %v2771, %v2773
    %v2775 = vadd.f32 %v2772, %v2773
    %s2776 = scalar_lea.vmem [#allocation8], 64
    %v2777 = vld [vmem:[%s2776] sm:$0xf]
    %v2778 = vld [vmem:[%s2776 + $0x4] sm:$0xf]
    %v2779 = vld [vmem:[%s2776 + $0x8] sm:$0xf]
    %v2780 = vld [vmem:[%s2776 + $0xc] sm:$0xf]
    %v2781 = vld [vmem:[%s2776 + $0x10] sm:$0xf]
    %v2782 = vld [vmem:[%s2776 + $0x14] sm:$0xf]
    %v2783 = vld [vmem:[%s2776 + $0x18] sm:$0xf]
    %v2784 = vld [vmem:[%s2776 + $0x1c] sm:$0xf]
    %v2785 = vld [vmem:[%s2776 + $0x20] sm:$0xf]
    %v2786 = vld [vmem:[%s2776 + $0x24] sm:$0xf]
    %v2787 = vld [vmem:[%s2776 + $0x28] sm:$0xf]
    %v2788 = vld [vmem:[%s2776 + $0x2c] sm:$0xf]
    %v2789 = vld [vmem:[%s2776 + $0x30] sm:$0xf]
    %v2790 = vld [vmem:[%s2776 + $0x34] sm:$0xf]
    %v2791 = vld [vmem:[%s2776 + $0x38] sm:$0xf]
    %v2792 = vld [vmem:[%s2776 + $0x3c] sm:$0xf]
    %v2793 = vpack.c.bf16 %v2775, %v2774
    %v2794 = vld [vmem:[#allocation19 + $0x7] sm:$0x1]
    %v2795 = vperm.slane %v2794, 0
    %v2812 = vunpack.c.l.b16 %v2777
    %v2813 = vunpack.c.l.b16 %v2778
    %v2814 = vunpack.c.l.b16 %v2779
    %v2815 = vunpack.c.l.b16 %v2780
    %v2816 = vunpack.c.l.b16 %v2781
    %v2817 = vunpack.c.l.b16 %v2782
    %v2818 = vunpack.c.l.b16 %v2783
    %v2819 = vunpack.c.l.b16 %v2784
    %v2820 = vunpack.c.l.b16 %v2785
    %v2821 = vunpack.c.l.b16 %v2786
    %v2822 = vunpack.c.l.b16 %v2787
    %v2823 = vunpack.c.l.b16 %v2788
    %v2824 = vunpack.c.l.b16 %v2789
    %v2825 = vunpack.c.l.b16 %v2790
    %v2826 = vunpack.c.l.b16 %v2791
    %v2827 = vunpack.c.l.b16 %v2792
    %v2828 = vpack.c.b16 %v2813, %v2812
    %v2829 = vpack.c.b16 %v2815, %v2814
    %v2830 = vpack.c.b16 %v2817, %v2816
    %v2831 = vpack.c.b16 %v2819, %v2818
    %v2832 = vpack.c.b16 %v2821, %v2820
    %v2833 = vpack.c.b16 %v2823, %v2822
    %v2834 = vpack.c.b16 %v2825, %v2824
    %v2835 = vpack.c.b16 %v2827, %v2826
    %2844 = vmatpush.bf16.msra.mxu0 %v2835
    %2845 = vmatpush.bf16.msra.mxu0 %v2834
    %2846 = vmatpush.bf16.msra.mxu0 %v2833
    %2847 = vmatpush.bf16.msra.mxu0 %v2832
    %2848 = vmatpush.bf16.msra.mxu0 %v2831
    %2849 = vmatpush.bf16.msra.mxu0 %v2830
    %2850 = vmatpush.bf16.msra.mxu0 %v2829
    %2851 = vmatpush.bf16.msra.mxu0 %v2828
    %2852 = vmatmul.bf16.gmra.mxu0 %v2793
    %v2853 = vpop.f32.mrf.mxu0
    %v2854 = vadd.f32 %v2795, %v2853
    %v2855 = vpop.f32.mrf.mxu0
    %v2856 = vadd.f32 %v2795, %v2855
    %2857 = vdwg.mxu0
    %v2858 = vadd.f32 %v2774, %v2854
    %v2859 = vadd.f32 %v2775, %v2856
    %v2860 = vld [vmem:[#allocation19 + $0x8] sm:$0x1]
    %v2861 = vld [vmem:[#allocation19 + $0x9] sm:$0x1]
    %2862 = vadd.xlane.f32.xlu0 %v2858
    %v2863 = vpop.xlane.xlu0 %2862
    %2864 = vadd.xlane.f32.xlu0 %v2859
    %v2865 = vpop.xlane.xlu0 %2864
    %v2866 = vmul.f32 %v2863, 0.010416667
    %v2867 = vmul.f32 %v2865, 0.010416667
    %v2868 = vsub.f32 %v2858, %v2866
    %v2869 = vsub.f32 %v2859, %v2867
    %v2870 = vmul.f32 %v2868, %v230
    %v2871 = vmul.f32 %v2869, %v230
    %v2872 = vmul.f32 %v2870, %v2870
    %v2873 = vmul.f32 %v2871, %v2871
    %2874 = vadd.xlane.f32.xlu0 %v2872
    %v2875 = vpop.xlane.xlu0 %2874
    %2876 = vadd.xlane.f32.xlu0 %v2873
    %v2877 = vpop.xlane.xlu0 %2876
    %v2878 = vmul.f32 %v2875, 0.010416667
    %v2879 = vmul.f32 %v2877, 0.010416667
    %v2880 = vadd.f32 %v2878, 1e-05
    %v2881 = vadd.f32 %v2879, 1e-05
    %v2882 = vrsqrt.pop %v2880
    %v2883 = vmul.f32 %v2882, %v2880
    %v2884 = vmul.f32 %v2883, %v2882
    %v2885 = vmul.f32 0.5, %v2884
    %v2886 = vsub.f32 1.5, %v2885
    %v2887 = vmul.f32 %v2882, %v2886
    %vm2888 = vweird.f32 %v2880
    %vm2889 = vweird.f32 %v2882
    %vm2890 = vmor %vm2888, %vm2889
    %v2891 = vsel %vm2890, %v2882, %v2887
    %v2892 = vrsqrt.pop %v2881
    %v2893 = vmul.f32 %v2892, %v2881
    %v2894 = vmul.f32 %v2893, %v2892
    %v2895 = vmul.f32 0.5, %v2894
    %v2896 = vsub.f32 1.5, %v2895
    %v2897 = vmul.f32 %v2892, %v2896
    %vm2898 = vweird.f32 %v2881
    %vm2899 = vweird.f32 %v2892
    %vm2900 = vmor %vm2898, %vm2899
    %v2901 = vsel %vm2900, %v2892, %v2897
    %v2902 = vmul.f32 %v2870, %v2891
    %v2903 = vmul.f32 %v2871, %v2901
    %v2904 = vperm.slane %v2860, 0
    %v2905 = vmul.f32 %v2902, %v2904
    %v2906 = vmul.f32 %v2903, %v2904
    %v2907 = vperm.slane %v2861, 0
    %v2908 = vadd.f32 %v2905, %v2907
    %v2909 = vadd.f32 %v2906, %v2907
    %s2910 = scalar_lea.vmem [#allocation10], 1024
    %v2911 = vld [vmem:[%s2910] sm:$0xff]
    %v2912 = vld [vmem:[%s2910 + $0x8] sm:$0xff]
    %v2913 = vld [vmem:[%s2910 + $0x10] sm:$0xff]
    %v2914 = vld [vmem:[%s2910 + $0x18] sm:$0xff]
    %v2915 = vld [vmem:[%s2910 + $0x20] sm:$0xff]
    %v2916 = vld [vmem:[%s2910 + $0x28] sm:$0xff]
    %v2917 = vld [vmem:[%s2910 + $0x30] sm:$0xff]
    %v2918 = vld [vmem:[%s2910 + $0x38] sm:$0xff]
    %v2919 = vld [vmem:[%s2910 + $0x40] sm:$0xff]
    %v2920 = vld [vmem:[%s2910 + $0x48] sm:$0xff]
    %v2921 = vld [vmem:[%s2910 + $0x50] sm:$0xff]
    %v2922 = vld [vmem:[%s2910 + $0x58] sm:$0xff]
    %v2923 = vld [vmem:[%s2910 + $0x60] sm:$0xff]
    %v2924 = vld [vmem:[%s2910 + $0x68] sm:$0xff]
    %v2925 = vld [vmem:[%s2910 + $0x70] sm:$0xff]
    %v2926 = vld [vmem:[%s2910 + $0x78] sm:$0xff]
    %v2927 = vld [vmem:[%s2910 + $0x80] sm:$0xff]
    %v2928 = vld [vmem:[%s2910 + $0x88] sm:$0xff]
    %v2929 = vld [vmem:[%s2910 + $0x90] sm:$0xff]
    %v2930 = vld [vmem:[%s2910 + $0x98] sm:$0xff]
    %v2931 = vld [vmem:[%s2910 + $0xa0] sm:$0xff]
    %v2932 = vld [vmem:[%s2910 + $0xa8] sm:$0xff]
    %v2933 = vld [vmem:[%s2910 + $0xb0] sm:$0xff]
    %v2934 = vld [vmem:[%s2910 + $0xb8] sm:$0xff]
    %v2935 = vld [vmem:[%s2910 + $0xc0] sm:$0xff]
    %v2936 = vld [vmem:[%s2910 + $0xc8] sm:$0xff]
    %v2937 = vld [vmem:[%s2910 + $0xd0] sm:$0xff]
    %v2938 = vld [vmem:[%s2910 + $0xd8] sm:$0xff]
    %v2939 = vld [vmem:[%s2910 + $0xe0] sm:$0xff]
    %v2940 = vld [vmem:[%s2910 + $0xe8] sm:$0xff]
    %v2941 = vld [vmem:[%s2910 + $0xf0] sm:$0xff]
    %v2942 = vld [vmem:[%s2910 + $0xf8] sm:$0xff]
    %v2943 = vld [vmem:[%s2910 + $0x100] sm:$0xff]
    %v2944 = vld [vmem:[%s2910 + $0x108] sm:$0xff]
    %v2945 = vld [vmem:[%s2910 + $0x110] sm:$0xff]
    %v2946 = vld [vmem:[%s2910 + $0x118] sm:$0xff]
    %v2947 = vld [vmem:[%s2910 + $0x120] sm:$0xff]
    %v2948 = vld [vmem:[%s2910 + $0x128] sm:$0xff]
    %v2949 = vld [vmem:[%s2910 + $0x130] sm:$0xff]
    %v2950 = vld [vmem:[%s2910 + $0x138] sm:$0xff]
    %v2951 = vld [vmem:[%s2910 + $0x140] sm:$0xff]
    %v2952 = vld [vmem:[%s2910 + $0x148] sm:$0xff]
    %v2953 = vld [vmem:[%s2910 + $0x150] sm:$0xff]
    %v2954 = vld [vmem:[%s2910 + $0x158] sm:$0xff]
    %v2955 = vld [vmem:[%s2910 + $0x160] sm:$0xff]
    %v2956 = vld [vmem:[%s2910 + $0x168] sm:$0xff]
    %v2957 = vld [vmem:[%s2910 + $0x170] sm:$0xff]
    %v2958 = vld [vmem:[%s2910 + $0x178] sm:$0xff]
    %v2959 = vld [vmem:[%s2910 + $0x180] sm:$0xff]
    %v2960 = vld [vmem:[%s2910 + $0x188] sm:$0xff]
    %v2961 = vld [vmem:[%s2910 + $0x190] sm:$0xff]
    %v2962 = vld [vmem:[%s2910 + $0x198] sm:$0xff]
    %v2963 = vld [vmem:[%s2910 + $0x1a0] sm:$0xff]
    %v2964 = vld [vmem:[%s2910 + $0x1a8] sm:$0xff]
    %v2965 = vld [vmem:[%s2910 + $0x1b0] sm:$0xff]
    %v2966 = vld [vmem:[%s2910 + $0x1b8] sm:$0xff]
    %v2967 = vld [vmem:[%s2910 + $0x1c0] sm:$0xff]
    %v2968 = vld [vmem:[%s2910 + $0x1c8] sm:$0xff]
    %v2969 = vld [vmem:[%s2910 + $0x1d0] sm:$0xff]
    %v2970 = vld [vmem:[%s2910 + $0x1d8] sm:$0xff]
    %v2971 = vld [vmem:[%s2910 + $0x1e0] sm:$0xff]
    %v2972 = vld [vmem:[%s2910 + $0x1e8] sm:$0xff]
    %v2973 = vld [vmem:[%s2910 + $0x1f0] sm:$0xff]
    %v2974 = vld [vmem:[%s2910 + $0x1f8] sm:$0xff]
    %v2975 = vld [vmem:[%s2910 + $0x200] sm:$0xff]
    %v2976 = vld [vmem:[%s2910 + $0x208] sm:$0xff]
    %v2977 = vld [vmem:[%s2910 + $0x210] sm:$0xff]
    %v2978 = vld [vmem:[%s2910 + $0x218] sm:$0xff]
    %v2979 = vld [vmem:[%s2910 + $0x220] sm:$0xff]
    %v2980 = vld [vmem:[%s2910 + $0x228] sm:$0xff]
    %v2981 = vld [vmem:[%s2910 + $0x230] sm:$0xff]
    %v2982 = vld [vmem:[%s2910 + $0x238] sm:$0xff]
    %v2983 = vld [vmem:[%s2910 + $0x240] sm:$0xff]
    %v2984 = vld [vmem:[%s2910 + $0x248] sm:$0xff]
    %v2985 = vld [vmem:[%s2910 + $0x250] sm:$0xff]
    %v2986 = vld [vmem:[%s2910 + $0x258] sm:$0xff]
    %v2987 = vld [vmem:[%s2910 + $0x260] sm:$0xff]
    %v2988 = vld [vmem:[%s2910 + $0x268] sm:$0xff]
    %v2989 = vld [vmem:[%s2910 + $0x270] sm:$0xff]
    %v2990 = vld [vmem:[%s2910 + $0x278] sm:$0xff]
    %v2991 = vld [vmem:[%s2910 + $0x280] sm:$0xff]
    %v2992 = vld [vmem:[%s2910 + $0x288] sm:$0xff]
    %v2993 = vld [vmem:[%s2910 + $0x290] sm:$0xff]
    %v2994 = vld [vmem:[%s2910 + $0x298] sm:$0xff]
    %v2995 = vld [vmem:[%s2910 + $0x2a0] sm:$0xff]
    %v2996 = vld [vmem:[%s2910 + $0x2a8] sm:$0xff]
    %v2997 = vld [vmem:[%s2910 + $0x2b0] sm:$0xff]
    %v2998 = vld [vmem:[%s2910 + $0x2b8] sm:$0xff]
    %v2999 = vld [vmem:[%s2910 + $0x2c0] sm:$0xff]
    %v3000 = vld [vmem:[%s2910 + $0x2c8] sm:$0xff]
    %v3001 = vld [vmem:[%s2910 + $0x2d0] sm:$0xff]
    %v3002 = vld [vmem:[%s2910 + $0x2d8] sm:$0xff]
    %v3003 = vld [vmem:[%s2910 + $0x2e0] sm:$0xff]
    %v3004 = vld [vmem:[%s2910 + $0x2e8] sm:$0xff]
    %v3005 = vld [vmem:[%s2910 + $0x2f0] sm:$0xff]
    %v3006 = vld [vmem:[%s2910 + $0x2f8] sm:$0xff]
    %v3007 = vld [vmem:[%s2910 + $0x300] sm:$0xff]
    %v3008 = vld [vmem:[%s2910 + $0x308] sm:$0xff]
    %v3009 = vld [vmem:[%s2910 + $0x310] sm:$0xff]
    %v3010 = vld [vmem:[%s2910 + $0x318] sm:$0xff]
    %v3011 = vld [vmem:[%s2910 + $0x320] sm:$0xff]
    %v3012 = vld [vmem:[%s2910 + $0x328] sm:$0xff]
    %v3013 = vld [vmem:[%s2910 + $0x330] sm:$0xff]
    %v3014 = vld [vmem:[%s2910 + $0x338] sm:$0xff]
    %v3015 = vld [vmem:[%s2910 + $0x340] sm:$0xff]
    %v3016 = vld [vmem:[%s2910 + $0x348] sm:$0xff]
    %v3017 = vld [vmem:[%s2910 + $0x350] sm:$0xff]
    %v3018 = vld [vmem:[%s2910 + $0x358] sm:$0xff]
    %v3019 = vld [vmem:[%s2910 + $0x360] sm:$0xff]
    %v3020 = vld [vmem:[%s2910 + $0x368] sm:$0xff]
    %v3021 = vld [vmem:[%s2910 + $0x370] sm:$0xff]
    %v3022 = vld [vmem:[%s2910 + $0x378] sm:$0xff]
    %v3023 = vld [vmem:[%s2910 + $0x380] sm:$0xff]
    %v3024 = vld [vmem:[%s2910 + $0x388] sm:$0xff]
    %v3025 = vld [vmem:[%s2910 + $0x390] sm:$0xff]
    %v3026 = vld [vmem:[%s2910 + $0x398] sm:$0xff]
    %v3027 = vld [vmem:[%s2910 + $0x3a0] sm:$0xff]
    %v3028 = vld [vmem:[%s2910 + $0x3a8] sm:$0xff]
    %v3029 = vld [vmem:[%s2910 + $0x3b0] sm:$0xff]
    %v3030 = vld [vmem:[%s2910 + $0x3b8] sm:$0xff]
    %v3031 = vld [vmem:[%s2910 + $0x3c0] sm:$0xff]
    %v3032 = vld [vmem:[%s2910 + $0x3c8] sm:$0xff]
    %v3033 = vld [vmem:[%s2910 + $0x3d0] sm:$0xff]
    %v3034 = vld [vmem:[%s2910 + $0x3d8] sm:$0xff]
    %v3035 = vld [vmem:[%s2910 + $0x3e0] sm:$0xff]
    %v3036 = vld [vmem:[%s2910 + $0x3e8] sm:$0xff]
    %v3037 = vld [vmem:[%s2910 + $0x3f0] sm:$0xff]
    %v3038 = vld [vmem:[%s2910 + $0x3f8] sm:$0xff]
    %v3039 = vpack.c.bf16 %v2909, %v2908
    %s3040 = scalar_lea.vmem [#allocation20], 16
    %v3041 = vld [vmem:[%s3040] sm:$0xff]
    %v3042 = vld [vmem:[%s3040 + $0x8] sm:$0xff]
    %v3045 = vperm.slane %v3041, 0
    %v3046 = vperm.slane %v3041, 1
    %v3047 = vperm.slane %v3041, 2
    %v3048 = vperm.slane %v3041, 3
    %v3049 = vperm.slane %v3041, 4
    %v3050 = vperm.slane %v3041, 5
    %v3051 = vperm.slane %v3041, 6
    %v3052 = vperm.slane %v3041, 7
    %v3053 = vperm.slane %v3042, 0
    %v3054 = vperm.slane %v3042, 1
    %v3055 = vperm.slane %v3042, 2
    %v3056 = vperm.slane %v3042, 3
    %v3057 = vperm.slane %v3042, 4
    %v3058 = vperm.slane %v3042, 5
    %v3059 = vperm.slane %v3042, 6
    %v3060 = vperm.slane %v3042, 7
    %v3205 = vunpack.c.l.b16 %v2911
    %v3206 = vunpack.c.h.b16 %v2911
    %v3207 = vunpack.c.l.b16 %v2912
    %v3208 = vunpack.c.h.b16 %v2912
    %v3209 = vunpack.c.l.b16 %v2913
    %v3210 = vunpack.c.h.b16 %v2913
    %v3211 = vunpack.c.l.b16 %v2914
    %v3212 = vunpack.c.h.b16 %v2914
    %v3213 = vunpack.c.l.b16 %v2915
    %v3214 = vunpack.c.h.b16 %v2915
    %v3215 = vunpack.c.l.b16 %v2916
    %v3216 = vunpack.c.h.b16 %v2916
    %v3217 = vunpack.c.l.b16 %v2917
    %v3218 = vunpack.c.h.b16 %v2917
    %v3219 = vunpack.c.l.b16 %v2918
    %v3220 = vunpack.c.h.b16 %v2918
    %v3221 = vunpack.c.l.b16 %v2919
    %v3222 = vunpack.c.h.b16 %v2919
    %v3223 = vunpack.c.l.b16 %v2920
    %v3224 = vunpack.c.h.b16 %v2920
    %v3225 = vunpack.c.l.b16 %v2921
    %v3226 = vunpack.c.h.b16 %v2921
    %v3227 = vunpack.c.l.b16 %v2922
    %v3228 = vunpack.c.h.b16 %v2922
    %v3229 = vunpack.c.l.b16 %v2923
    %v3230 = vunpack.c.h.b16 %v2923
    %v3231 = vunpack.c.l.b16 %v2924
    %v3232 = vunpack.c.h.b16 %v2924
    %v3233 = vunpack.c.l.b16 %v2925
    %v3234 = vunpack.c.h.b16 %v2925
    %v3235 = vunpack.c.l.b16 %v2926
    %v3236 = vunpack.c.h.b16 %v2926
    %v3237 = vunpack.c.l.b16 %v2927
    %v3238 = vunpack.c.h.b16 %v2927
    %v3239 = vunpack.c.l.b16 %v2928
    %v3240 = vunpack.c.h.b16 %v2928
    %v3241 = vunpack.c.l.b16 %v2929
    %v3242 = vunpack.c.h.b16 %v2929
    %v3243 = vunpack.c.l.b16 %v2930
    %v3244 = vunpack.c.h.b16 %v2930
    %v3245 = vunpack.c.l.b16 %v2931
    %v3246 = vunpack.c.h.b16 %v2931
    %v3247 = vunpack.c.l.b16 %v2932
    %v3248 = vunpack.c.h.b16 %v2932
    %v3249 = vunpack.c.l.b16 %v2933
    %v3250 = vunpack.c.h.b16 %v2933
    %v3251 = vunpack.c.l.b16 %v2934
    %v3252 = vunpack.c.h.b16 %v2934
    %v3253 = vunpack.c.l.b16 %v2935
    %v3254 = vunpack.c.h.b16 %v2935
    %v3255 = vunpack.c.l.b16 %v2936
    %v3256 = vunpack.c.h.b16 %v2936
    %v3257 = vunpack.c.l.b16 %v2937
    %v3258 = vunpack.c.h.b16 %v2937
    %v3259 = vunpack.c.l.b16 %v2938
    %v3260 = vunpack.c.h.b16 %v2938
    %v3261 = vunpack.c.l.b16 %v2939
    %v3262 = vunpack.c.h.b16 %v2939
    %v3263 = vunpack.c.l.b16 %v2940
    %v3264 = vunpack.c.h.b16 %v2940
    %v3265 = vunpack.c.l.b16 %v2941
    %v3266 = vunpack.c.h.b16 %v2941
    %v3267 = vunpack.c.l.b16 %v2942
    %v3268 = vunpack.c.h.b16 %v2942
    %v3269 = vunpack.c.l.b16 %v2943
    %v3270 = vunpack.c.h.b16 %v2943
    %v3271 = vunpack.c.l.b16 %v2944
    %v3272 = vunpack.c.h.b16 %v2944
    %v3273 = vunpack.c.l.b16 %v2945
    %v3274 = vunpack.c.h.b16 %v2945
    %v3275 = vunpack.c.l.b16 %v2946
    %v3276 = vunpack.c.h.b16 %v2946
    %v3277 = vunpack.c.l.b16 %v2947
    %v3278 = vunpack.c.h.b16 %v2947
    %v3279 = vunpack.c.l.b16 %v2948
    %v3280 = vunpack.c.h.b16 %v2948
    %v3281 = vunpack.c.l.b16 %v2949
    %v3282 = vunpack.c.h.b16 %v2949
    %v3283 = vunpack.c.l.b16 %v2950
    %v3284 = vunpack.c.h.b16 %v2950
    %v3285 = vunpack.c.l.b16 %v2951
    %v3286 = vunpack.c.h.b16 %v2951
    %v3287 = vunpack.c.l.b16 %v2952
    %v3288 = vunpack.c.h.b16 %v2952
    %v3289 = vunpack.c.l.b16 %v2953
    %v3290 = vunpack.c.h.b16 %v2953
    %v3291 = vunpack.c.l.b16 %v2954
    %v3292 = vunpack.c.h.b16 %v2954
    %v3293 = vunpack.c.l.b16 %v2955
    %v3294 = vunpack.c.h.b16 %v2955
    %v3295 = vunpack.c.l.b16 %v2956
    %v3296 = vunpack.c.h.b16 %v2956
    %v3297 = vunpack.c.l.b16 %v2957
    %v3298 = vunpack.c.h.b16 %v2957
    %v3299 = vunpack.c.l.b16 %v2958
    %v3300 = vunpack.c.h.b16 %v2958
    %v3301 = vunpack.c.l.b16 %v2959
    %v3302 = vunpack.c.h.b16 %v2959
    %v3303 = vunpack.c.l.b16 %v2960
    %v3304 = vunpack.c.h.b16 %v2960
    %v3305 = vunpack.c.l.b16 %v2961
    %v3306 = vunpack.c.h.b16 %v2961
    %v3307 = vunpack.c.l.b16 %v2962
    %v3308 = vunpack.c.h.b16 %v2962
    %v3309 = vunpack.c.l.b16 %v2963
    %v3310 = vunpack.c.h.b16 %v2963
    %v3311 = vunpack.c.l.b16 %v2964
    %v3312 = vunpack.c.h.b16 %v2964
    %v3313 = vunpack.c.l.b16 %v2965
    %v3314 = vunpack.c.h.b16 %v2965
    %v3315 = vunpack.c.l.b16 %v2966
    %v3316 = vunpack.c.h.b16 %v2966
    %v3317 = vunpack.c.l.b16 %v2967
    %v3318 = vunpack.c.h.b16 %v2967
    %v3319 = vunpack.c.l.b16 %v2968
    %v3320 = vunpack.c.h.b16 %v2968
    %v3321 = vunpack.c.l.b16 %v2969
    %v3322 = vunpack.c.h.b16 %v2969
    %v3323 = vunpack.c.l.b16 %v2970
    %v3324 = vunpack.c.h.b16 %v2970
    %v3325 = vunpack.c.l.b16 %v2971
    %v3326 = vunpack.c.h.b16 %v2971
    %v3327 = vunpack.c.l.b16 %v2972
    %v3328 = vunpack.c.h.b16 %v2972
    %v3329 = vunpack.c.l.b16 %v2973
    %v3330 = vunpack.c.h.b16 %v2973
    %v3331 = vunpack.c.l.b16 %v2974
    %v3332 = vunpack.c.h.b16 %v2974
    %v3333 = vunpack.c.l.b16 %v2975
    %v3334 = vunpack.c.h.b16 %v2975
    %v3335 = vunpack.c.l.b16 %v2976
    %v3336 = vunpack.c.h.b16 %v2976
    %v3337 = vunpack.c.l.b16 %v2977
    %v3338 = vunpack.c.h.b16 %v2977
    %v3339 = vunpack.c.l.b16 %v2978
    %v3340 = vunpack.c.h.b16 %v2978
    %v3341 = vunpack.c.l.b16 %v2979
    %v3342 = vunpack.c.h.b16 %v2979
    %v3343 = vunpack.c.l.b16 %v2980
    %v3344 = vunpack.c.h.b16 %v2980
    %v3345 = vunpack.c.l.b16 %v2981
    %v3346 = vunpack.c.h.b16 %v2981
    %v3347 = vunpack.c.l.b16 %v2982
    %v3348 = vunpack.c.h.b16 %v2982
    %v3349 = vunpack.c.l.b16 %v2983
    %v3350 = vunpack.c.h.b16 %v2983
    %v3351 = vunpack.c.l.b16 %v2984
    %v3352 = vunpack.c.h.b16 %v2984
    %v3353 = vunpack.c.l.b16 %v2985
    %v3354 = vunpack.c.h.b16 %v2985
    %v3355 = vunpack.c.l.b16 %v2986
    %v3356 = vunpack.c.h.b16 %v2986
    %v3357 = vunpack.c.l.b16 %v2987
    %v3358 = vunpack.c.h.b16 %v2987
    %v3359 = vunpack.c.l.b16 %v2988
    %v3360 = vunpack.c.h.b16 %v2988
    %v3361 = vunpack.c.l.b16 %v2989
    %v3362 = vunpack.c.h.b16 %v2989
    %v3363 = vunpack.c.l.b16 %v2990
    %v3364 = vunpack.c.h.b16 %v2990
    %v3365 = vunpack.c.l.b16 %v2991
    %v3366 = vunpack.c.h.b16 %v2991
    %v3367 = vunpack.c.l.b16 %v2992
    %v3368 = vunpack.c.h.b16 %v2992
    %v3369 = vunpack.c.l.b16 %v2993
    %v3370 = vunpack.c.h.b16 %v2993
    %v3371 = vunpack.c.l.b16 %v2994
    %v3372 = vunpack.c.h.b16 %v2994
    %v3373 = vunpack.c.l.b16 %v2995
    %v3374 = vunpack.c.h.b16 %v2995
    %v3375 = vunpack.c.l.b16 %v2996
    %v3376 = vunpack.c.h.b16 %v2996
    %v3377 = vunpack.c.l.b16 %v2997
    %v3378 = vunpack.c.h.b16 %v2997
    %v3379 = vunpack.c.l.b16 %v2998
    %v3380 = vunpack.c.h.b16 %v2998
    %v3381 = vunpack.c.l.b16 %v2999
    %v3382 = vunpack.c.h.b16 %v2999
    %v3383 = vunpack.c.l.b16 %v3000
    %v3384 = vunpack.c.h.b16 %v3000
    %v3385 = vunpack.c.l.b16 %v3001
    %v3386 = vunpack.c.h.b16 %v3001
    %v3387 = vunpack.c.l.b16 %v3002
    %v3388 = vunpack.c.h.b16 %v3002
    %v3389 = vunpack.c.l.b16 %v3003
    %v3390 = vunpack.c.h.b16 %v3003
    %v3391 = vunpack.c.l.b16 %v3004
    %v3392 = vunpack.c.h.b16 %v3004
    %v3393 = vunpack.c.l.b16 %v3005
    %v3394 = vunpack.c.h.b16 %v3005
    %v3395 = vunpack.c.l.b16 %v3006
    %v3396 = vunpack.c.h.b16 %v3006
    %v3397 = vunpack.c.l.b16 %v3007
    %v3398 = vunpack.c.h.b16 %v3007
    %v3399 = vunpack.c.l.b16 %v3008
    %v3400 = vunpack.c.h.b16 %v3008
    %v3401 = vunpack.c.l.b16 %v3009
    %v3402 = vunpack.c.h.b16 %v3009
    %v3403 = vunpack.c.l.b16 %v3010
    %v3404 = vunpack.c.h.b16 %v3010
    %v3405 = vunpack.c.l.b16 %v3011
    %v3406 = vunpack.c.h.b16 %v3011
    %v3407 = vunpack.c.l.b16 %v3012
    %v3408 = vunpack.c.h.b16 %v3012
    %v3409 = vunpack.c.l.b16 %v3013
    %v3410 = vunpack.c.h.b16 %v3013
    %v3411 = vunpack.c.l.b16 %v3014
    %v3412 = vunpack.c.h.b16 %v3014
    %v3413 = vunpack.c.l.b16 %v3015
    %v3414 = vunpack.c.h.b16 %v3015
    %v3415 = vunpack.c.l.b16 %v3016
    %v3416 = vunpack.c.h.b16 %v3016
    %v3417 = vunpack.c.l.b16 %v3017
    %v3418 = vunpack.c.h.b16 %v3017
    %v3419 = vunpack.c.l.b16 %v3018
    %v3420 = vunpack.c.h.b16 %v3018
    %v3421 = vunpack.c.l.b16 %v3019
    %v3422 = vunpack.c.h.b16 %v3019
    %v3423 = vunpack.c.l.b16 %v3020
    %v3424 = vunpack.c.h.b16 %v3020
    %v3425 = vunpack.c.l.b16 %v3021
    %v3426 = vunpack.c.h.b16 %v3021
    %v3427 = vunpack.c.l.b16 %v3022
    %v3428 = vunpack.c.h.b16 %v3022
    %v3429 = vunpack.c.l.b16 %v3023
    %v3430 = vunpack.c.h.b16 %v3023
    %v3431 = vunpack.c.l.b16 %v3024
    %v3432 = vunpack.c.h.b16 %v3024
    %v3433 = vunpack.c.l.b16 %v3025
    %v3434 = vunpack.c.h.b16 %v3025
    %v3435 = vunpack.c.l.b16 %v3026
    %v3436 = vunpack.c.h.b16 %v3026
    %v3437 = vunpack.c.l.b16 %v3027
    %v3438 = vunpack.c.h.b16 %v3027
    %v3439 = vunpack.c.l.b16 %v3028
    %v3440 = vunpack.c.h.b16 %v3028
    %v3441 = vunpack.c.l.b16 %v3029
    %v3442 = vunpack.c.h.b16 %v3029
    %v3443 = vunpack.c.l.b16 %v3030
    %v3444 = vunpack.c.h.b16 %v3030
    %v3445 = vunpack.c.l.b16 %v3031
    %v3446 = vunpack.c.h.b16 %v3031
    %v3447 = vunpack.c.l.b16 %v3032
    %v3448 = vunpack.c.h.b16 %v3032
    %v3449 = vunpack.c.l.b16 %v3033
    %v3450 = vunpack.c.h.b16 %v3033
    %v3451 = vunpack.c.l.b16 %v3034
    %v3452 = vunpack.c.h.b16 %v3034
    %v3453 = vunpack.c.l.b16 %v3035
    %v3454 = vunpack.c.h.b16 %v3035
    %v3455 = vunpack.c.l.b16 %v3036
    %v3456 = vunpack.c.h.b16 %v3036
    %v3457 = vunpack.c.l.b16 %v3037
    %v3458 = vunpack.c.h.b16 %v3037
    %v3459 = vunpack.c.l.b16 %v3038
    %v3460 = vunpack.c.h.b16 %v3038
    %v3461 = vpack.c.b16 %v3221, %v3205
    %v3462 = vpack.c.b16 %v3222, %v3206
    %v3463 = vpack.c.b16 %v3223, %v3207
    %v3464 = vpack.c.b16 %v3224, %v3208
    %v3465 = vpack.c.b16 %v3225, %v3209
    %v3466 = vpack.c.b16 %v3226, %v3210
    %v3467 = vpack.c.b16 %v3227, %v3211
    %v3468 = vpack.c.b16 %v3228, %v3212
    %v3469 = vpack.c.b16 %v3229, %v3213
    %v3470 = vpack.c.b16 %v3230, %v3214
    %v3471 = vpack.c.b16 %v3231, %v3215
    %v3472 = vpack.c.b16 %v3232, %v3216
    %v3473 = vpack.c.b16 %v3233, %v3217
    %v3474 = vpack.c.b16 %v3234, %v3218
    %v3475 = vpack.c.b16 %v3235, %v3219
    %v3476 = vpack.c.b16 %v3236, %v3220
    %v3477 = vpack.c.b16 %v3253, %v3237
    %v3478 = vpack.c.b16 %v3254, %v3238
    %v3479 = vpack.c.b16 %v3255, %v3239
    %v3480 = vpack.c.b16 %v3256, %v3240
    %v3481 = vpack.c.b16 %v3257, %v3241
    %v3482 = vpack.c.b16 %v3258, %v3242
    %v3483 = vpack.c.b16 %v3259, %v3243
    %v3484 = vpack.c.b16 %v3260, %v3244
    %v3485 = vpack.c.b16 %v3261, %v3245
    %v3486 = vpack.c.b16 %v3262, %v3246
    %v3487 = vpack.c.b16 %v3263, %v3247
    %v3488 = vpack.c.b16 %v3264, %v3248
    %v3489 = vpack.c.b16 %v3265, %v3249
    %v3490 = vpack.c.b16 %v3266, %v3250
    %v3491 = vpack.c.b16 %v3267, %v3251
    %v3492 = vpack.c.b16 %v3268, %v3252
    %v3493 = vpack.c.b16 %v3285, %v3269
    %v3494 = vpack.c.b16 %v3286, %v3270
    %v3495 = vpack.c.b16 %v3287, %v3271
    %v3496 = vpack.c.b16 %v3288, %v3272
    %v3497 = vpack.c.b16 %v3289, %v3273
    %v3498 = vpack.c.b16 %v3290, %v3274
    %v3499 = vpack.c.b16 %v3291, %v3275
    %v3500 = vpack.c.b16 %v3292, %v3276
    %v3501 = vpack.c.b16 %v3293, %v3277
    %v3502 = vpack.c.b16 %v3294, %v3278
    %v3503 = vpack.c.b16 %v3295, %v3279
    %v3504 = vpack.c.b16 %v3296, %v3280
    %v3505 = vpack.c.b16 %v3297, %v3281
    %v3506 = vpack.c.b16 %v3298, %v3282
    %v3507 = vpack.c.b16 %v3299, %v3283
    %v3508 = vpack.c.b16 %v3300, %v3284
    %v3509 = vpack.c.b16 %v3317, %v3301
    %v3510 = vpack.c.b16 %v3318, %v3302
    %v3511 = vpack.c.b16 %v3319, %v3303
    %v3512 = vpack.c.b16 %v3320, %v3304
    %v3513 = vpack.c.b16 %v3321, %v3305
    %v3514 = vpack.c.b16 %v3322, %v3306
    %v3515 = vpack.c.b16 %v3323, %v3307
    %v3516 = vpack.c.b16 %v3324, %v3308
    %v3517 = vpack.c.b16 %v3325, %v3309
    %v3518 = vpack.c.b16 %v3326, %v3310
    %v3519 = vpack.c.b16 %v3327, %v3311
    %v3520 = vpack.c.b16 %v3328, %v3312
    %v3521 = vpack.c.b16 %v3329, %v3313
    %v3522 = vpack.c.b16 %v3330, %v3314
    %v3523 = vpack.c.b16 %v3331, %v3315
    %v3524 = vpack.c.b16 %v3332, %v3316
    %v3525 = vpack.c.b16 %v3349, %v3333
    %v3526 = vpack.c.b16 %v3350, %v3334
    %v3527 = vpack.c.b16 %v3351, %v3335
    %v3528 = vpack.c.b16 %v3352, %v3336
    %v3529 = vpack.c.b16 %v3353, %v3337
    %v3530 = vpack.c.b16 %v3354, %v3338
    %v3531 = vpack.c.b16 %v3355, %v3339
    %v3532 = vpack.c.b16 %v3356, %v3340
    %v3533 = vpack.c.b16 %v3357, %v3341
    %v3534 = vpack.c.b16 %v3358, %v3342
    %v3535 = vpack.c.b16 %v3359, %v3343
    %v3536 = vpack.c.b16 %v3360, %v3344
    %v3537 = vpack.c.b16 %v3361, %v3345
    %v3538 = vpack.c.b16 %v3362, %v3346
    %v3539 = vpack.c.b16 %v3363, %v3347
    %v3540 = vpack.c.b16 %v3364, %v3348
    %v3541 = vpack.c.b16 %v3381, %v3365
    %v3542 = vpack.c.b16 %v3382, %v3366
    %v3543 = vpack.c.b16 %v3383, %v3367
    %v3544 = vpack.c.b16 %v3384, %v3368
    %v3545 = vpack.c.b16 %v3385, %v3369
    %v3546 = vpack.c.b16 %v3386, %v3370
    %v3547 = vpack.c.b16 %v3387, %v3371
    %v3548 = vpack.c.b16 %v3388, %v3372
    %v3549 = vpack.c.b16 %v3389, %v3373
    %v3550 = vpack.c.b16 %v3390, %v3374
    %v3551 = vpack.c.b16 %v3391, %v3375
    %v3552 = vpack.c.b16 %v3392, %v3376
    %v3553 = vpack.c.b16 %v3393, %v3377
    %v3554 = vpack.c.b16 %v3394, %v3378
    %v3555 = vpack.c.b16 %v3395, %v3379
    %v3556 = vpack.c.b16 %v3396, %v3380
    %v3557 = vpack.c.b16 %v3413, %v3397
    %v3558 = vpack.c.b16 %v3414, %v3398
    %v3559 = vpack.c.b16 %v3415, %v3399
    %v3560 = vpack.c.b16 %v3416, %v3400
    %v3561 = vpack.c.b16 %v3417, %v3401
    %v3562 = vpack.c.b16 %v3418, %v3402
    %v3563 = vpack.c.b16 %v3419, %v3403
    %v3564 = vpack.c.b16 %v3420, %v3404
    %v3565 = vpack.c.b16 %v3421, %v3405
    %v3566 = vpack.c.b16 %v3422, %v3406
    %v3567 = vpack.c.b16 %v3423, %v3407
    %v3568 = vpack.c.b16 %v3424, %v3408
    %v3569 = vpack.c.b16 %v3425, %v3409
    %v3570 = vpack.c.b16 %v3426, %v3410
    %v3571 = vpack.c.b16 %v3427, %v3411
    %v3572 = vpack.c.b16 %v3428, %v3412
    %v3573 = vpack.c.b16 %v3445, %v3429
    %v3574 = vpack.c.b16 %v3446, %v3430
    %v3575 = vpack.c.b16 %v3447, %v3431
    %v3576 = vpack.c.b16 %v3448, %v3432
    %v3577 = vpack.c.b16 %v3449, %v3433
    %v3578 = vpack.c.b16 %v3450, %v3434
    %v3579 = vpack.c.b16 %v3451, %v3435
    %v3580 = vpack.c.b16 %v3452, %v3436
    %v3581 = vpack.c.b16 %v3453, %v3437
    %v3582 = vpack.c.b16 %v3454, %v3438
    %v3583 = vpack.c.b16 %v3455, %v3439
    %v3584 = vpack.c.b16 %v3456, %v3440
    %v3585 = vpack.c.b16 %v3457, %v3441
    %v3586 = vpack.c.b16 %v3458, %v3442
    %v3587 = vpack.c.b16 %v3459, %v3443
    %v3588 = vpack.c.b16 %v3460, %v3444
    %3717 = vmatpush.bf16.msra.mxu0 %v3573
    %3718 = vmatpush.bf16.msra.mxu0 %v3557
    %3719 = vmatpush.bf16.msra.mxu0 %v3541
    %3720 = vmatpush.bf16.msra.mxu0 %v3525
    %3721 = vmatpush.bf16.msra.mxu0 %v3509
    %3722 = vmatpush.bf16.msra.mxu0 %v3493
    %3723 = vmatpush.bf16.msra.mxu0 %v3477
    %3724 = vmatpush.bf16.msra.mxu0 %v3461
    %3725 = vmatmul.bf16.gmra.mxu0 %v3039
    %v3726 = vpop.f32.mrf.mxu0
    %v3727 = vadd.f32 %v3045, %v3726
    %v3728 = vpop.f32.mrf.mxu0
    %v3729 = vadd.f32 %v3045, %v3728
    %3730 = vdwg.mxu0
    %3731 = vmatpush.bf16.msra.mxu0 %v3574
    %3732 = vmatpush.bf16.msra.mxu0 %v3558
    %3733 = vmatpush.bf16.msra.mxu0 %v3542
    %3734 = vmatpush.bf16.msra.mxu0 %v3526
    %3735 = vmatpush.bf16.msra.mxu0 %v3510
    %3736 = vmatpush.bf16.msra.mxu0 %v3494
    %3737 = vmatpush.bf16.msra.mxu0 %v3478
    %3738 = vmatpush.bf16.msra.mxu0 %v3462
    %3739 = vmatmul.bf16.gmra.mxu0 %v3039
    %v3740 = vpop.f32.mrf.mxu0
    %v3741 = vadd.f32 %v3046, %v3740
    %v3742 = vpop.f32.mrf.mxu0
    %v3743 = vadd.f32 %v3046, %v3742
    %3744 = vdwg.mxu0
    %3745 = vmatpush.bf16.msra.mxu0 %v3575
    %3746 = vmatpush.bf16.msra.mxu0 %v3559
    %3747 = vmatpush.bf16.msra.mxu0 %v3543
    %3748 = vmatpush.bf16.msra.mxu0 %v3527
    %3749 = vmatpush.bf16.msra.mxu0 %v3511
    %3750 = vmatpush.bf16.msra.mxu0 %v3495
    %3751 = vmatpush.bf16.msra.mxu0 %v3479
    %3752 = vmatpush.bf16.msra.mxu0 %v3463
    %3753 = vmatmul.bf16.gmra.mxu0 %v3039
    %v3754 = vpop.f32.mrf.mxu0
    %v3755 = vadd.f32 %v3047, %v3754
    %v3756 = vpop.f32.mrf.mxu0
    %v3757 = vadd.f32 %v3047, %v3756
    %3758 = vdwg.mxu0
    %3759 = vmatpush.bf16.msra.mxu0 %v3576
    %3760 = vmatpush.bf16.msra.mxu0 %v3560
    %3761 = vmatpush.bf16.msra.mxu0 %v3544
    %3762 = vmatpush.bf16.msra.mxu0 %v3528
    %3763 = vmatpush.bf16.msra.mxu0 %v3512
    %3764 = vmatpush.bf16.msra.mxu0 %v3496
    %3765 = vmatpush.bf16.msra.mxu0 %v3480
    %3766 = vmatpush.bf16.msra.mxu0 %v3464
    %3767 = vmatmul.bf16.gmra.mxu0 %v3039
    %v3768 = vpop.f32.mrf.mxu0
    %v3769 = vadd.f32 %v3048, %v3768
    %v3770 = vpop.f32.mrf.mxu0
    %v3771 = vadd.f32 %v3048, %v3770
    %3772 = vdwg.mxu0
    %3773 = vmatpush.bf16.msra.mxu0 %v3577
    %3774 = vmatpush.bf16.msra.mxu0 %v3561
    %3775 = vmatpush.bf16.msra.mxu0 %v3545
    %3776 = vmatpush.bf16.msra.mxu0 %v3529
    %3777 = vmatpush.bf16.msra.mxu0 %v3513
    %3778 = vmatpush.bf16.msra.mxu0 %v3497
    %3779 = vmatpush.bf16.msra.mxu0 %v3481
    %3780 = vmatpush.bf16.msra.mxu0 %v3465
    %3781 = vmatmul.bf16.gmra.mxu0 %v3039
    %v3782 = vpop.f32.mrf.mxu0
    %v3783 = vadd.f32 %v3049, %v3782
    %v3784 = vpop.f32.mrf.mxu0
    %v3785 = vadd.f32 %v3049, %v3784
    %3786 = vdwg.mxu0
    %3787 = vmatpush.bf16.msra.mxu0 %v3578
    %3788 = vmatpush.bf16.msra.mxu0 %v3562
    %3789 = vmatpush.bf16.msra.mxu0 %v3546
    %3790 = vmatpush.bf16.msra.mxu0 %v3530
    %3791 = vmatpush.bf16.msra.mxu0 %v3514
    %3792 = vmatpush.bf16.msra.mxu0 %v3498
    %3793 = vmatpush.bf16.msra.mxu0 %v3482
    %3794 = vmatpush.bf16.msra.mxu0 %v3466
    %3795 = vmatmul.bf16.gmra.mxu0 %v3039
    %v3796 = vpop.f32.mrf.mxu0
    %v3797 = vadd.f32 %v3050, %v3796
    %v3798 = vpop.f32.mrf.mxu0
    %v3799 = vadd.f32 %v3050, %v3798
    %3800 = vdwg.mxu0
    %3801 = vmatpush.bf16.msra.mxu0 %v3579
    %3802 = vmatpush.bf16.msra.mxu0 %v3563
    %3803 = vmatpush.bf16.msra.mxu0 %v3547
    %3804 = vmatpush.bf16.msra.mxu0 %v3531
    %3805 = vmatpush.bf16.msra.mxu0 %v3515
    %3806 = vmatpush.bf16.msra.mxu0 %v3499
    %3807 = vmatpush.bf16.msra.mxu0 %v3483
    %3808 = vmatpush.bf16.msra.mxu0 %v3467
    %3809 = vmatmul.bf16.gmra.mxu0 %v3039
    %v3810 = vpop.f32.mrf.mxu0
    %v3811 = vadd.f32 %v3051, %v3810
    %v3812 = vpop.f32.mrf.mxu0
    %v3813 = vadd.f32 %v3051, %v3812
    %3814 = vdwg.mxu0
    %3815 = vmatpush.bf16.msra.mxu0 %v3580
    %3816 = vmatpush.bf16.msra.mxu0 %v3564
    %3817 = vmatpush.bf16.msra.mxu0 %v3548
    %3818 = vmatpush.bf16.msra.mxu0 %v3532
    %3819 = vmatpush.bf16.msra.mxu0 %v3516
    %3820 = vmatpush.bf16.msra.mxu0 %v3500
    %3821 = vmatpush.bf16.msra.mxu0 %v3484
    %3822 = vmatpush.bf16.msra.mxu0 %v3468
    %3823 = vmatmul.bf16.gmra.mxu0 %v3039
    %v3824 = vpop.f32.mrf.mxu0
    %v3825 = vadd.f32 %v3052, %v3824
    %v3826 = vpop.f32.mrf.mxu0
    %v3827 = vadd.f32 %v3052, %v3826
    %3828 = vdwg.mxu0
    %3829 = vmatpush.bf16.msra.mxu0 %v3581
    %3830 = vmatpush.bf16.msra.mxu0 %v3565
    %3831 = vmatpush.bf16.msra.mxu0 %v3549
    %3832 = vmatpush.bf16.msra.mxu0 %v3533
    %3833 = vmatpush.bf16.msra.mxu0 %v3517
    %3834 = vmatpush.bf16.msra.mxu0 %v3501
    %3835 = vmatpush.bf16.msra.mxu0 %v3485
    %3836 = vmatpush.bf16.msra.mxu0 %v3469
    %3837 = vmatmul.bf16.gmra.mxu0 %v3039
    %v3838 = vpop.f32.mrf.mxu0
    %v3839 = vadd.f32 %v3053, %v3838
    %v3840 = vpop.f32.mrf.mxu0
    %v3841 = vadd.f32 %v3053, %v3840
    %3842 = vdwg.mxu0
    %3843 = vmatpush.bf16.msra.mxu0 %v3582
    %3844 = vmatpush.bf16.msra.mxu0 %v3566
    %3845 = vmatpush.bf16.msra.mxu0 %v3550
    %3846 = vmatpush.bf16.msra.mxu0 %v3534
    %3847 = vmatpush.bf16.msra.mxu0 %v3518
    %3848 = vmatpush.bf16.msra.mxu0 %v3502
    %3849 = vmatpush.bf16.msra.mxu0 %v3486
    %3850 = vmatpush.bf16.msra.mxu0 %v3470
    %3851 = vmatmul.bf16.gmra.mxu0 %v3039
    %v3852 = vpop.f32.mrf.mxu0
    %v3853 = vadd.f32 %v3054, %v3852
    %v3854 = vpop.f32.mrf.mxu0
    %v3855 = vadd.f32 %v3054, %v3854
    %3856 = vdwg.mxu0
    %3857 = vmatpush.bf16.msra.mxu0 %v3583
    %3858 = vmatpush.bf16.msra.mxu0 %v3567
    %3859 = vmatpush.bf16.msra.mxu0 %v3551
    %3860 = vmatpush.bf16.msra.mxu0 %v3535
    %3861 = vmatpush.bf16.msra.mxu0 %v3519
    %3862 = vmatpush.bf16.msra.mxu0 %v3503
    %3863 = vmatpush.bf16.msra.mxu0 %v3487
    %3864 = vmatpush.bf16.msra.mxu0 %v3471
    %3865 = vmatmul.bf16.gmra.mxu0 %v3039
    %v3866 = vpop.f32.mrf.mxu0
    %v3867 = vadd.f32 %v3055, %v3866
    %v3868 = vpop.f32.mrf.mxu0
    %v3869 = vadd.f32 %v3055, %v3868
    %3870 = vdwg.mxu0
    %3871 = vmatpush.bf16.msra.mxu0 %v3584
    %3872 = vmatpush.bf16.msra.mxu0 %v3568
    %3873 = vmatpush.bf16.msra.mxu0 %v3552
    %3874 = vmatpush.bf16.msra.mxu0 %v3536
    %3875 = vmatpush.bf16.msra.mxu0 %v3520
    %3876 = vmatpush.bf16.msra.mxu0 %v3504
    %3877 = vmatpush.bf16.msra.mxu0 %v3488
    %3878 = vmatpush.bf16.msra.mxu0 %v3472
    %3879 = vmatmul.bf16.gmra.mxu0 %v3039
    %v3880 = vpop.f32.mrf.mxu0
    %v3881 = vadd.f32 %v3056, %v3880
    %v3882 = vpop.f32.mrf.mxu0
    %v3883 = vadd.f32 %v3056, %v3882
    %3884 = vdwg.mxu0
    %3885 = vmatpush.bf16.msra.mxu0 %v3585
    %3886 = vmatpush.bf16.msra.mxu0 %v3569
    %3887 = vmatpush.bf16.msra.mxu0 %v3553
    %3888 = vmatpush.bf16.msra.mxu0 %v3537
    %3889 = vmatpush.bf16.msra.mxu0 %v3521
    %3890 = vmatpush.bf16.msra.mxu0 %v3505
    %3891 = vmatpush.bf16.msra.mxu0 %v3489
    %3892 = vmatpush.bf16.msra.mxu0 %v3473
    %3893 = vmatmul.bf16.gmra.mxu0 %v3039
    %v3894 = vpop.f32.mrf.mxu0
    %v3895 = vadd.f32 %v3057, %v3894
    %v3896 = vpop.f32.mrf.mxu0
    %v3897 = vadd.f32 %v3057, %v3896
    %3898 = vdwg.mxu0
    %3899 = vmatpush.bf16.msra.mxu0 %v3586
    %3900 = vmatpush.bf16.msra.mxu0 %v3570
    %3901 = vmatpush.bf16.msra.mxu0 %v3554
    %3902 = vmatpush.bf16.msra.mxu0 %v3538
    %3903 = vmatpush.bf16.msra.mxu0 %v3522
    %3904 = vmatpush.bf16.msra.mxu0 %v3506
    %3905 = vmatpush.bf16.msra.mxu0 %v3490
    %3906 = vmatpush.bf16.msra.mxu0 %v3474
    %3907 = vmatmul.bf16.gmra.mxu0 %v3039
    %v3908 = vpop.f32.mrf.mxu0
    %v3909 = vadd.f32 %v3058, %v3908
    %v3910 = vpop.f32.mrf.mxu0
    %v3911 = vadd.f32 %v3058, %v3910
    %3912 = vdwg.mxu0
    %3913 = vmatpush.bf16.msra.mxu0 %v3587
    %3914 = vmatpush.bf16.msra.mxu0 %v3571
    %3915 = vmatpush.bf16.msra.mxu0 %v3555
    %3916 = vmatpush.bf16.msra.mxu0 %v3539
    %3917 = vmatpush.bf16.msra.mxu0 %v3523
    %3918 = vmatpush.bf16.msra.mxu0 %v3507
    %3919 = vmatpush.bf16.msra.mxu0 %v3491
    %3920 = vmatpush.bf16.msra.mxu0 %v3475
    %3921 = vmatmul.bf16.gmra.mxu0 %v3039
    %v3922 = vpop.f32.mrf.mxu0
    %v3923 = vadd.f32 %v3059, %v3922
    %v3924 = vpop.f32.mrf.mxu0
    %v3925 = vadd.f32 %v3059, %v3924
    %3926 = vdwg.mxu0
    %3927 = vmatpush.bf16.msra.mxu0 %v3588
    %3928 = vmatpush.bf16.msra.mxu0 %v3572
    %3929 = vmatpush.bf16.msra.mxu0 %v3556
    %3930 = vmatpush.bf16.msra.mxu0 %v3540
    %3931 = vmatpush.bf16.msra.mxu0 %v3524
    %3932 = vmatpush.bf16.msra.mxu0 %v3508
    %3933 = vmatpush.bf16.msra.mxu0 %v3492
    %3934 = vmatpush.bf16.msra.mxu0 %v3476
    %3935 = vmatmul.bf16.gmra.mxu0 %v3039
    %v3936 = vpop.f32.mrf.mxu0
    %v3937 = vadd.f32 %v3060, %v3936
    %v3938 = vpop.f32.mrf.mxu0
    %v3939 = vadd.f32 %v3060, %v3938
    %3940 = vdwg.mxu0
    %v3941 = vmax.f32 %v3727, 0.0
    %v3942 = vmax.f32 %v3741, 0.0
    %v3943 = vmax.f32 %v3755, 0.0
    %v3944 = vmax.f32 %v3769, 0.0
    %v3945 = vmax.f32 %v3783, 0.0
    %v3946 = vmax.f32 %v3797, 0.0
    %v3947 = vmax.f32 %v3811, 0.0
    %v3948 = vmax.f32 %v3825, 0.0
    %v3949 = vmax.f32 %v3839, 0.0
    %v3950 = vmax.f32 %v3853, 0.0
    %v3951 = vmax.f32 %v3867, 0.0
    %v3952 = vmax.f32 %v3881, 0.0
    %v3953 = vmax.f32 %v3895, 0.0
    %v3954 = vmax.f32 %v3909, 0.0
    %v3955 = vmax.f32 %v3923, 0.0
    %v3956 = vmax.f32 %v3937, 0.0
    %v3957 = vmax.f32 %v3729, 0.0
    %v3958 = vmax.f32 %v3743, 0.0
    %v3959 = vmax.f32 %v3757, 0.0
    %v3960 = vmax.f32 %v3771, 0.0
    %v3961 = vmax.f32 %v3785, 0.0
    %v3962 = vmax.f32 %v3799, 0.0
    %v3963 = vmax.f32 %v3813, 0.0
    %v3964 = vmax.f32 %v3827, 0.0
    %v3965 = vmax.f32 %v3841, 0.0
    %v3966 = vmax.f32 %v3855, 0.0
    %v3967 = vmax.f32 %v3869, 0.0
    %v3968 = vmax.f32 %v3883, 0.0
    %v3969 = vmax.f32 %v3897, 0.0
    %v3970 = vmax.f32 %v3911, 0.0
    %v3971 = vmax.f32 %v3925, 0.0
    %v3972 = vmax.f32 %v3939, 0.0
    %s3973 = scalar_lea.vmem [#allocation11], 1024
    %v3974 = vld [vmem:[%s3973] sm:$0xf]
    %v3975 = vld [vmem:[%s3973 + $0x4] sm:$0xf]
    %v3976 = vld [vmem:[%s3973 + $0x8] sm:$0xf]
    %v3977 = vld [vmem:[%s3973 + $0xc] sm:$0xf]
    %v3978 = vld [vmem:[%s3973 + $0x10] sm:$0xf]
    %v3979 = vld [vmem:[%s3973 + $0x14] sm:$0xf]
    %v3980 = vld [vmem:[%s3973 + $0x18] sm:$0xf]
    %v3981 = vld [vmem:[%s3973 + $0x1c] sm:$0xf]
    %v3982 = vld [vmem:[%s3973 + $0x20] sm:$0xf]
    %v3983 = vld [vmem:[%s3973 + $0x24] sm:$0xf]
    %v3984 = vld [vmem:[%s3973 + $0x28] sm:$0xf]
    %v3985 = vld [vmem:[%s3973 + $0x2c] sm:$0xf]
    %v3986 = vld [vmem:[%s3973 + $0x30] sm:$0xf]
    %v3987 = vld [vmem:[%s3973 + $0x34] sm:$0xf]
    %v3988 = vld [vmem:[%s3973 + $0x38] sm:$0xf]
    %v3989 = vld [vmem:[%s3973 + $0x3c] sm:$0xf]
    %v3990 = vld [vmem:[%s3973 + $0x40] sm:$0xf]
    %v3991 = vld [vmem:[%s3973 + $0x44] sm:$0xf]
    %v3992 = vld [vmem:[%s3973 + $0x48] sm:$0xf]
    %v3993 = vld [vmem:[%s3973 + $0x4c] sm:$0xf]
    %v3994 = vld [vmem:[%s3973 + $0x50] sm:$0xf]
    %v3995 = vld [vmem:[%s3973 + $0x54] sm:$0xf]
    %v3996 = vld [vmem:[%s3973 + $0x58] sm:$0xf]
    %v3997 = vld [vmem:[%s3973 + $0x5c] sm:$0xf]
    %v3998 = vld [vmem:[%s3973 + $0x60] sm:$0xf]
    %v3999 = vld [vmem:[%s3973 + $0x64] sm:$0xf]
    %v4000 = vld [vmem:[%s3973 + $0x68] sm:$0xf]
    %v4001 = vld [vmem:[%s3973 + $0x6c] sm:$0xf]
    %v4002 = vld [vmem:[%s3973 + $0x70] sm:$0xf]
    %v4003 = vld [vmem:[%s3973 + $0x74] sm:$0xf]
    %v4004 = vld [vmem:[%s3973 + $0x78] sm:$0xf]
    %v4005 = vld [vmem:[%s3973 + $0x7c] sm:$0xf]
    %v4006 = vld [vmem:[%s3973 + $0x80] sm:$0xf]
    %v4007 = vld [vmem:[%s3973 + $0x84] sm:$0xf]
    %v4008 = vld [vmem:[%s3973 + $0x88] sm:$0xf]
    %v4009 = vld [vmem:[%s3973 + $0x8c] sm:$0xf]
    %v4010 = vld [vmem:[%s3973 + $0x90] sm:$0xf]
    %v4011 = vld [vmem:[%s3973 + $0x94] sm:$0xf]
    %v4012 = vld [vmem:[%s3973 + $0x98] sm:$0xf]
    %v4013 = vld [vmem:[%s3973 + $0x9c] sm:$0xf]
    %v4014 = vld [vmem:[%s3973 + $0xa0] sm:$0xf]
    %v4015 = vld [vmem:[%s3973 + $0xa4] sm:$0xf]
    %v4016 = vld [vmem:[%s3973 + $0xa8] sm:$0xf]
    %v4017 = vld [vmem:[%s3973 + $0xac] sm:$0xf]
    %v4018 = vld [vmem:[%s3973 + $0xb0] sm:$0xf]
    %v4019 = vld [vmem:[%s3973 + $0xb4] sm:$0xf]
    %v4020 = vld [vmem:[%s3973 + $0xb8] sm:$0xf]
    %v4021 = vld [vmem:[%s3973 + $0xbc] sm:$0xf]
    %v4022 = vld [vmem:[%s3973 + $0xc0] sm:$0xf]
    %v4023 = vld [vmem:[%s3973 + $0xc4] sm:$0xf]
    %v4024 = vld [vmem:[%s3973 + $0xc8] sm:$0xf]
    %v4025 = vld [vmem:[%s3973 + $0xcc] sm:$0xf]
    %v4026 = vld [vmem:[%s3973 + $0xd0] sm:$0xf]
    %v4027 = vld [vmem:[%s3973 + $0xd4] sm:$0xf]
    %v4028 = vld [vmem:[%s3973 + $0xd8] sm:$0xf]
    %v4029 = vld [vmem:[%s3973 + $0xdc] sm:$0xf]
    %v4030 = vld [vmem:[%s3973 + $0xe0] sm:$0xf]
    %v4031 = vld [vmem:[%s3973 + $0xe4] sm:$0xf]
    %v4032 = vld [vmem:[%s3973 + $0xe8] sm:$0xf]
    %v4033 = vld [vmem:[%s3973 + $0xec] sm:$0xf]
    %v4034 = vld [vmem:[%s3973 + $0xf0] sm:$0xf]
    %v4035 = vld [vmem:[%s3973 + $0xf4] sm:$0xf]
    %v4036 = vld [vmem:[%s3973 + $0xf8] sm:$0xf]
    %v4037 = vld [vmem:[%s3973 + $0xfc] sm:$0xf]
    %v4038 = vld [vmem:[%s3973 + $0x100] sm:$0xf]
    %v4039 = vld [vmem:[%s3973 + $0x104] sm:$0xf]
    %v4040 = vld [vmem:[%s3973 + $0x108] sm:$0xf]
    %v4041 = vld [vmem:[%s3973 + $0x10c] sm:$0xf]
    %v4042 = vld [vmem:[%s3973 + $0x110] sm:$0xf]
    %v4043 = vld [vmem:[%s3973 + $0x114] sm:$0xf]
    %v4044 = vld [vmem:[%s3973 + $0x118] sm:$0xf]
    %v4045 = vld [vmem:[%s3973 + $0x11c] sm:$0xf]
    %v4046 = vld [vmem:[%s3973 + $0x120] sm:$0xf]
    %v4047 = vld [vmem:[%s3973 + $0x124] sm:$0xf]
    %v4048 = vld [vmem:[%s3973 + $0x128] sm:$0xf]
    %v4049 = vld [vmem:[%s3973 + $0x12c] sm:$0xf]
    %v4050 = vld [vmem:[%s3973 + $0x130] sm:$0xf]
    %v4051 = vld [vmem:[%s3973 + $0x134] sm:$0xf]
    %v4052 = vld [vmem:[%s3973 + $0x138] sm:$0xf]
    %v4053 = vld [vmem:[%s3973 + $0x13c] sm:$0xf]
    %v4054 = vld [vmem:[%s3973 + $0x140] sm:$0xf]
    %v4055 = vld [vmem:[%s3973 + $0x144] sm:$0xf]
    %v4056 = vld [vmem:[%s3973 + $0x148] sm:$0xf]
    %v4057 = vld [vmem:[%s3973 + $0x14c] sm:$0xf]
    %v4058 = vld [vmem:[%s3973 + $0x150] sm:$0xf]
    %v4059 = vld [vmem:[%s3973 + $0x154] sm:$0xf]
    %v4060 = vld [vmem:[%s3973 + $0x158] sm:$0xf]
    %v4061 = vld [vmem:[%s3973 + $0x15c] sm:$0xf]
    %v4062 = vld [vmem:[%s3973 + $0x160] sm:$0xf]
    %v4063 = vld [vmem:[%s3973 + $0x164] sm:$0xf]
    %v4064 = vld [vmem:[%s3973 + $0x168] sm:$0xf]
    %v4065 = vld [vmem:[%s3973 + $0x16c] sm:$0xf]
    %v4066 = vld [vmem:[%s3973 + $0x170] sm:$0xf]
    %v4067 = vld [vmem:[%s3973 + $0x174] sm:$0xf]
    %v4068 = vld [vmem:[%s3973 + $0x178] sm:$0xf]
    %v4069 = vld [vmem:[%s3973 + $0x17c] sm:$0xf]
    %v4070 = vld [vmem:[%s3973 + $0x180] sm:$0xf]
    %v4071 = vld [vmem:[%s3973 + $0x184] sm:$0xf]
    %v4072 = vld [vmem:[%s3973 + $0x188] sm:$0xf]
    %v4073 = vld [vmem:[%s3973 + $0x18c] sm:$0xf]
    %v4074 = vld [vmem:[%s3973 + $0x190] sm:$0xf]
    %v4075 = vld [vmem:[%s3973 + $0x194] sm:$0xf]
    %v4076 = vld [vmem:[%s3973 + $0x198] sm:$0xf]
    %v4077 = vld [vmem:[%s3973 + $0x19c] sm:$0xf]
    %v4078 = vld [vmem:[%s3973 + $0x1a0] sm:$0xf]
    %v4079 = vld [vmem:[%s3973 + $0x1a4] sm:$0xf]
    %v4080 = vld [vmem:[%s3973 + $0x1a8] sm:$0xf]
    %v4081 = vld [vmem:[%s3973 + $0x1ac] sm:$0xf]
    %v4082 = vld [vmem:[%s3973 + $0x1b0] sm:$0xf]
    %v4083 = vld [vmem:[%s3973 + $0x1b4] sm:$0xf]
    %v4084 = vld [vmem:[%s3973 + $0x1b8] sm:$0xf]
    %v4085 = vld [vmem:[%s3973 + $0x1bc] sm:$0xf]
    %v4086 = vld [vmem:[%s3973 + $0x1c0] sm:$0xf]
    %v4087 = vld [vmem:[%s3973 + $0x1c4] sm:$0xf]
    %v4088 = vld [vmem:[%s3973 + $0x1c8] sm:$0xf]
    %v4089 = vld [vmem:[%s3973 + $0x1cc] sm:$0xf]
    %v4090 = vld [vmem:[%s3973 + $0x1d0] sm:$0xf]
    %v4091 = vld [vmem:[%s3973 + $0x1d4] sm:$0xf]
    %v4092 = vld [vmem:[%s3973 + $0x1d8] sm:$0xf]
    %v4093 = vld [vmem:[%s3973 + $0x1dc] sm:$0xf]
    %v4094 = vld [vmem:[%s3973 + $0x1e0] sm:$0xf]
    %v4095 = vld [vmem:[%s3973 + $0x1e4] sm:$0xf]
    %v4096 = vld [vmem:[%s3973 + $0x1e8] sm:$0xf]
    %v4097 = vld [vmem:[%s3973 + $0x1ec] sm:$0xf]
    %v4098 = vld [vmem:[%s3973 + $0x1f0] sm:$0xf]
    %v4099 = vld [vmem:[%s3973 + $0x1f4] sm:$0xf]
    %v4100 = vld [vmem:[%s3973 + $0x1f8] sm:$0xf]
    %v4101 = vld [vmem:[%s3973 + $0x1fc] sm:$0xf]
    %v4102 = vld [vmem:[%s3973 + $0x200] sm:$0xf]
    %v4103 = vld [vmem:[%s3973 + $0x204] sm:$0xf]
    %v4104 = vld [vmem:[%s3973 + $0x208] sm:$0xf]
    %v4105 = vld [vmem:[%s3973 + $0x20c] sm:$0xf]
    %v4106 = vld [vmem:[%s3973 + $0x210] sm:$0xf]
    %v4107 = vld [vmem:[%s3973 + $0x214] sm:$0xf]
    %v4108 = vld [vmem:[%s3973 + $0x218] sm:$0xf]
    %v4109 = vld [vmem:[%s3973 + $0x21c] sm:$0xf]
    %v4110 = vld [vmem:[%s3973 + $0x220] sm:$0xf]
    %v4111 = vld [vmem:[%s3973 + $0x224] sm:$0xf]
    %v4112 = vld [vmem:[%s3973 + $0x228] sm:$0xf]
    %v4113 = vld [vmem:[%s3973 + $0x22c] sm:$0xf]
    %v4114 = vld [vmem:[%s3973 + $0x230] sm:$0xf]
    %v4115 = vld [vmem:[%s3973 + $0x234] sm:$0xf]
    %v4116 = vld [vmem:[%s3973 + $0x238] sm:$0xf]
    %v4117 = vld [vmem:[%s3973 + $0x23c] sm:$0xf]
    %v4118 = vld [vmem:[%s3973 + $0x240] sm:$0xf]
    %v4119 = vld [vmem:[%s3973 + $0x244] sm:$0xf]
    %v4120 = vld [vmem:[%s3973 + $0x248] sm:$0xf]
    %v4121 = vld [vmem:[%s3973 + $0x24c] sm:$0xf]
    %v4122 = vld [vmem:[%s3973 + $0x250] sm:$0xf]
    %v4123 = vld [vmem:[%s3973 + $0x254] sm:$0xf]
    %v4124 = vld [vmem:[%s3973 + $0x258] sm:$0xf]
    %v4125 = vld [vmem:[%s3973 + $0x25c] sm:$0xf]
    %v4126 = vld [vmem:[%s3973 + $0x260] sm:$0xf]
    %v4127 = vld [vmem:[%s3973 + $0x264] sm:$0xf]
    %v4128 = vld [vmem:[%s3973 + $0x268] sm:$0xf]
    %v4129 = vld [vmem:[%s3973 + $0x26c] sm:$0xf]
    %v4130 = vld [vmem:[%s3973 + $0x270] sm:$0xf]
    %v4131 = vld [vmem:[%s3973 + $0x274] sm:$0xf]
    %v4132 = vld [vmem:[%s3973 + $0x278] sm:$0xf]
    %v4133 = vld [vmem:[%s3973 + $0x27c] sm:$0xf]
    %v4134 = vld [vmem:[%s3973 + $0x280] sm:$0xf]
    %v4135 = vld [vmem:[%s3973 + $0x284] sm:$0xf]
    %v4136 = vld [vmem:[%s3973 + $0x288] sm:$0xf]
    %v4137 = vld [vmem:[%s3973 + $0x28c] sm:$0xf]
    %v4138 = vld [vmem:[%s3973 + $0x290] sm:$0xf]
    %v4139 = vld [vmem:[%s3973 + $0x294] sm:$0xf]
    %v4140 = vld [vmem:[%s3973 + $0x298] sm:$0xf]
    %v4141 = vld [vmem:[%s3973 + $0x29c] sm:$0xf]
    %v4142 = vld [vmem:[%s3973 + $0x2a0] sm:$0xf]
    %v4143 = vld [vmem:[%s3973 + $0x2a4] sm:$0xf]
    %v4144 = vld [vmem:[%s3973 + $0x2a8] sm:$0xf]
    %v4145 = vld [vmem:[%s3973 + $0x2ac] sm:$0xf]
    %v4146 = vld [vmem:[%s3973 + $0x2b0] sm:$0xf]
    %v4147 = vld [vmem:[%s3973 + $0x2b4] sm:$0xf]
    %v4148 = vld [vmem:[%s3973 + $0x2b8] sm:$0xf]
    %v4149 = vld [vmem:[%s3973 + $0x2bc] sm:$0xf]
    %v4150 = vld [vmem:[%s3973 + $0x2c0] sm:$0xf]
    %v4151 = vld [vmem:[%s3973 + $0x2c4] sm:$0xf]
    %v4152 = vld [vmem:[%s3973 + $0x2c8] sm:$0xf]
    %v4153 = vld [vmem:[%s3973 + $0x2cc] sm:$0xf]
    %v4154 = vld [vmem:[%s3973 + $0x2d0] sm:$0xf]
    %v4155 = vld [vmem:[%s3973 + $0x2d4] sm:$0xf]
    %v4156 = vld [vmem:[%s3973 + $0x2d8] sm:$0xf]
    %v4157 = vld [vmem:[%s3973 + $0x2dc] sm:$0xf]
    %v4158 = vld [vmem:[%s3973 + $0x2e0] sm:$0xf]
    %v4159 = vld [vmem:[%s3973 + $0x2e4] sm:$0xf]
    %v4160 = vld [vmem:[%s3973 + $0x2e8] sm:$0xf]
    %v4161 = vld [vmem:[%s3973 + $0x2ec] sm:$0xf]
    %v4162 = vld [vmem:[%s3973 + $0x2f0] sm:$0xf]
    %v4163 = vld [vmem:[%s3973 + $0x2f4] sm:$0xf]
    %v4164 = vld [vmem:[%s3973 + $0x2f8] sm:$0xf]
    %v4165 = vld [vmem:[%s3973 + $0x2fc] sm:$0xf]
    %v4166 = vld [vmem:[%s3973 + $0x300] sm:$0xf]
    %v4167 = vld [vmem:[%s3973 + $0x304] sm:$0xf]
    %v4168 = vld [vmem:[%s3973 + $0x308] sm:$0xf]
    %v4169 = vld [vmem:[%s3973 + $0x30c] sm:$0xf]
    %v4170 = vld [vmem:[%s3973 + $0x310] sm:$0xf]
    %v4171 = vld [vmem:[%s3973 + $0x314] sm:$0xf]
    %v4172 = vld [vmem:[%s3973 + $0x318] sm:$0xf]
    %v4173 = vld [vmem:[%s3973 + $0x31c] sm:$0xf]
    %v4174 = vld [vmem:[%s3973 + $0x320] sm:$0xf]
    %v4175 = vld [vmem:[%s3973 + $0x324] sm:$0xf]
    %v4176 = vld [vmem:[%s3973 + $0x328] sm:$0xf]
    %v4177 = vld [vmem:[%s3973 + $0x32c] sm:$0xf]
    %v4178 = vld [vmem:[%s3973 + $0x330] sm:$0xf]
    %v4179 = vld [vmem:[%s3973 + $0x334] sm:$0xf]
    %v4180 = vld [vmem:[%s3973 + $0x338] sm:$0xf]
    %v4181 = vld [vmem:[%s3973 + $0x33c] sm:$0xf]
    %v4182 = vld [vmem:[%s3973 + $0x340] sm:$0xf]
    %v4183 = vld [vmem:[%s3973 + $0x344] sm:$0xf]
    %v4184 = vld [vmem:[%s3973 + $0x348] sm:$0xf]
    %v4185 = vld [vmem:[%s3973 + $0x34c] sm:$0xf]
    %v4186 = vld [vmem:[%s3973 + $0x350] sm:$0xf]
    %v4187 = vld [vmem:[%s3973 + $0x354] sm:$0xf]
    %v4188 = vld [vmem:[%s3973 + $0x358] sm:$0xf]
    %v4189 = vld [vmem:[%s3973 + $0x35c] sm:$0xf]
    %v4190 = vld [vmem:[%s3973 + $0x360] sm:$0xf]
    %v4191 = vld [vmem:[%s3973 + $0x364] sm:$0xf]
    %v4192 = vld [vmem:[%s3973 + $0x368] sm:$0xf]
    %v4193 = vld [vmem:[%s3973 + $0x36c] sm:$0xf]
    %v4194 = vld [vmem:[%s3973 + $0x370] sm:$0xf]
    %v4195 = vld [vmem:[%s3973 + $0x374] sm:$0xf]
    %v4196 = vld [vmem:[%s3973 + $0x378] sm:$0xf]
    %v4197 = vld [vmem:[%s3973 + $0x37c] sm:$0xf]
    %v4198 = vld [vmem:[%s3973 + $0x380] sm:$0xf]
    %v4199 = vld [vmem:[%s3973 + $0x384] sm:$0xf]
    %v4200 = vld [vmem:[%s3973 + $0x388] sm:$0xf]
    %v4201 = vld [vmem:[%s3973 + $0x38c] sm:$0xf]
    %v4202 = vld [vmem:[%s3973 + $0x390] sm:$0xf]
    %v4203 = vld [vmem:[%s3973 + $0x394] sm:$0xf]
    %v4204 = vld [vmem:[%s3973 + $0x398] sm:$0xf]
    %v4205 = vld [vmem:[%s3973 + $0x39c] sm:$0xf]
    %v4206 = vld [vmem:[%s3973 + $0x3a0] sm:$0xf]
    %v4207 = vld [vmem:[%s3973 + $0x3a4] sm:$0xf]
    %v4208 = vld [vmem:[%s3973 + $0x3a8] sm:$0xf]
    %v4209 = vld [vmem:[%s3973 + $0x3ac] sm:$0xf]
    %v4210 = vld [vmem:[%s3973 + $0x3b0] sm:$0xf]
    %v4211 = vld [vmem:[%s3973 + $0x3b4] sm:$0xf]
    %v4212 = vld [vmem:[%s3973 + $0x3b8] sm:$0xf]
    %v4213 = vld [vmem:[%s3973 + $0x3bc] sm:$0xf]
    %v4214 = vld [vmem:[%s3973 + $0x3c0] sm:$0xf]
    %v4215 = vld [vmem:[%s3973 + $0x3c4] sm:$0xf]
    %v4216 = vld [vmem:[%s3973 + $0x3c8] sm:$0xf]
    %v4217 = vld [vmem:[%s3973 + $0x3cc] sm:$0xf]
    %v4218 = vld [vmem:[%s3973 + $0x3d0] sm:$0xf]
    %v4219 = vld [vmem:[%s3973 + $0x3d4] sm:$0xf]
    %v4220 = vld [vmem:[%s3973 + $0x3d8] sm:$0xf]
    %v4221 = vld [vmem:[%s3973 + $0x3dc] sm:$0xf]
    %v4222 = vld [vmem:[%s3973 + $0x3e0] sm:$0xf]
    %v4223 = vld [vmem:[%s3973 + $0x3e4] sm:$0xf]
    %v4224 = vld [vmem:[%s3973 + $0x3e8] sm:$0xf]
    %v4225 = vld [vmem:[%s3973 + $0x3ec] sm:$0xf]
    %v4226 = vld [vmem:[%s3973 + $0x3f0] sm:$0xf]
    %v4227 = vld [vmem:[%s3973 + $0x3f4] sm:$0xf]
    %v4228 = vld [vmem:[%s3973 + $0x3f8] sm:$0xf]
    %v4229 = vld [vmem:[%s3973 + $0x3fc] sm:$0xf]
    %v4230 = vpack.c.bf16 %v3957, %v3941
    %v4231 = vpack.c.bf16 %v3958, %v3942
    %v4232 = vpack.c.bf16 %v3959, %v3943
    %v4233 = vpack.c.bf16 %v3960, %v3944
    %v4234 = vpack.c.bf16 %v3961, %v3945
    %v4235 = vpack.c.bf16 %v3962, %v3946
    %v4236 = vpack.c.bf16 %v3963, %v3947
    %v4237 = vpack.c.bf16 %v3964, %v3948
    %v4238 = vpack.c.bf16 %v3965, %v3949
    %v4239 = vpack.c.bf16 %v3966, %v3950
    %v4240 = vpack.c.bf16 %v3967, %v3951
    %v4241 = vpack.c.bf16 %v3968, %v3952
    %v4242 = vpack.c.bf16 %v3969, %v3953
    %v4243 = vpack.c.bf16 %v3970, %v3954
    %v4244 = vpack.c.bf16 %v3971, %v3955
    %v4245 = vpack.c.bf16 %v3972, %v3956
    %v4246 = vld [vmem:[#allocation19 + $0xa] sm:$0x1]
    %v4247 = vperm.slane %v4246, 0
    %v4504 = vunpack.c.l.b16 %v3974
    %v4505 = vunpack.c.l.b16 %v3975
    %v4506 = vunpack.c.l.b16 %v3976
    %v4507 = vunpack.c.l.b16 %v3977
    %v4508 = vunpack.c.l.b16 %v3978
    %v4509 = vunpack.c.l.b16 %v3979
    %v4510 = vunpack.c.l.b16 %v3980
    %v4511 = vunpack.c.l.b16 %v3981
    %v4512 = vunpack.c.l.b16 %v3982
    %v4513 = vunpack.c.l.b16 %v3983
    %v4514 = vunpack.c.l.b16 %v3984
    %v4515 = vunpack.c.l.b16 %v3985
    %v4516 = vunpack.c.l.b16 %v3986
    %v4517 = vunpack.c.l.b16 %v3987
    %v4518 = vunpack.c.l.b16 %v3988
    %v4519 = vunpack.c.l.b16 %v3989
    %v4520 = vunpack.c.l.b16 %v3990
    %v4521 = vunpack.c.l.b16 %v3991
    %v4522 = vunpack.c.l.b16 %v3992
    %v4523 = vunpack.c.l.b16 %v3993
    %v4524 = vunpack.c.l.b16 %v3994
    %v4525 = vunpack.c.l.b16 %v3995
    %v4526 = vunpack.c.l.b16 %v3996
    %v4527 = vunpack.c.l.b16 %v3997
    %v4528 = vunpack.c.l.b16 %v3998
    %v4529 = vunpack.c.l.b16 %v3999
    %v4530 = vunpack.c.l.b16 %v4000
    %v4531 = vunpack.c.l.b16 %v4001
    %v4532 = vunpack.c.l.b16 %v4002
    %v4533 = vunpack.c.l.b16 %v4003
    %v4534 = vunpack.c.l.b16 %v4004
    %v4535 = vunpack.c.l.b16 %v4005
    %v4536 = vunpack.c.l.b16 %v4006
    %v4537 = vunpack.c.l.b16 %v4007
    %v4538 = vunpack.c.l.b16 %v4008
    %v4539 = vunpack.c.l.b16 %v4009
    %v4540 = vunpack.c.l.b16 %v4010
    %v4541 = vunpack.c.l.b16 %v4011
    %v4542 = vunpack.c.l.b16 %v4012
    %v4543 = vunpack.c.l.b16 %v4013
    %v4544 = vunpack.c.l.b16 %v4014
    %v4545 = vunpack.c.l.b16 %v4015
    %v4546 = vunpack.c.l.b16 %v4016
    %v4547 = vunpack.c.l.b16 %v4017
    %v4548 = vunpack.c.l.b16 %v4018
    %v4549 = vunpack.c.l.b16 %v4019
    %v4550 = vunpack.c.l.b16 %v4020
    %v4551 = vunpack.c.l.b16 %v4021
    %v4552 = vunpack.c.l.b16 %v4022
    %v4553 = vunpack.c.l.b16 %v4023
    %v4554 = vunpack.c.l.b16 %v4024
    %v4555 = vunpack.c.l.b16 %v4025
    %v4556 = vunpack.c.l.b16 %v4026
    %v4557 = vunpack.c.l.b16 %v4027
    %v4558 = vunpack.c.l.b16 %v4028
    %v4559 = vunpack.c.l.b16 %v4029
    %v4560 = vunpack.c.l.b16 %v4030
    %v4561 = vunpack.c.l.b16 %v4031
    %v4562 = vunpack.c.l.b16 %v4032
    %v4563 = vunpack.c.l.b16 %v4033
    %v4564 = vunpack.c.l.b16 %v4034
    %v4565 = vunpack.c.l.b16 %v4035
    %v4566 = vunpack.c.l.b16 %v4036
    %v4567 = vunpack.c.l.b16 %v4037
    %v4568 = vunpack.c.l.b16 %v4038
    %v4569 = vunpack.c.l.b16 %v4039
    %v4570 = vunpack.c.l.b16 %v4040
    %v4571 = vunpack.c.l.b16 %v4041
    %v4572 = vunpack.c.l.b16 %v4042
    %v4573 = vunpack.c.l.b16 %v4043
    %v4574 = vunpack.c.l.b16 %v4044
    %v4575 = vunpack.c.l.b16 %v4045
    %v4576 = vunpack.c.l.b16 %v4046
    %v4577 = vunpack.c.l.b16 %v4047
    %v4578 = vunpack.c.l.b16 %v4048
    %v4579 = vunpack.c.l.b16 %v4049
    %v4580 = vunpack.c.l.b16 %v4050
    %v4581 = vunpack.c.l.b16 %v4051
    %v4582 = vunpack.c.l.b16 %v4052
    %v4583 = vunpack.c.l.b16 %v4053
    %v4584 = vunpack.c.l.b16 %v4054
    %v4585 = vunpack.c.l.b16 %v4055
    %v4586 = vunpack.c.l.b16 %v4056
    %v4587 = vunpack.c.l.b16 %v4057
    %v4588 = vunpack.c.l.b16 %v4058
    %v4589 = vunpack.c.l.b16 %v4059
    %v4590 = vunpack.c.l.b16 %v4060
    %v4591 = vunpack.c.l.b16 %v4061
    %v4592 = vunpack.c.l.b16 %v4062
    %v4593 = vunpack.c.l.b16 %v4063
    %v4594 = vunpack.c.l.b16 %v4064
    %v4595 = vunpack.c.l.b16 %v4065
    %v4596 = vunpack.c.l.b16 %v4066
    %v4597 = vunpack.c.l.b16 %v4067
    %v4598 = vunpack.c.l.b16 %v4068
    %v4599 = vunpack.c.l.b16 %v4069
    %v4600 = vunpack.c.l.b16 %v4070
    %v4601 = vunpack.c.l.b16 %v4071
    %v4602 = vunpack.c.l.b16 %v4072
    %v4603 = vunpack.c.l.b16 %v4073
    %v4604 = vunpack.c.l.b16 %v4074
    %v4605 = vunpack.c.l.b16 %v4075
    %v4606 = vunpack.c.l.b16 %v4076
    %v4607 = vunpack.c.l.b16 %v4077
    %v4608 = vunpack.c.l.b16 %v4078
    %v4609 = vunpack.c.l.b16 %v4079
    %v4610 = vunpack.c.l.b16 %v4080
    %v4611 = vunpack.c.l.b16 %v4081
    %v4612 = vunpack.c.l.b16 %v4082
    %v4613 = vunpack.c.l.b16 %v4083
    %v4614 = vunpack.c.l.b16 %v4084
    %v4615 = vunpack.c.l.b16 %v4085
    %v4616 = vunpack.c.l.b16 %v4086
    %v4617 = vunpack.c.l.b16 %v4087
    %v4618 = vunpack.c.l.b16 %v4088
    %v4619 = vunpack.c.l.b16 %v4089
    %v4620 = vunpack.c.l.b16 %v4090
    %v4621 = vunpack.c.l.b16 %v4091
    %v4622 = vunpack.c.l.b16 %v4092
    %v4623 = vunpack.c.l.b16 %v4093
    %v4624 = vunpack.c.l.b16 %v4094
    %v4625 = vunpack.c.l.b16 %v4095
    %v4626 = vunpack.c.l.b16 %v4096
    %v4627 = vunpack.c.l.b16 %v4097
    %v4628 = vunpack.c.l.b16 %v4098
    %v4629 = vunpack.c.l.b16 %v4099
    %v4630 = vunpack.c.l.b16 %v4100
    %v4631 = vunpack.c.l.b16 %v4101
    %v4632 = vunpack.c.l.b16 %v4102
    %v4633 = vunpack.c.l.b16 %v4103
    %v4634 = vunpack.c.l.b16 %v4104
    %v4635 = vunpack.c.l.b16 %v4105
    %v4636 = vunpack.c.l.b16 %v4106
    %v4637 = vunpack.c.l.b16 %v4107
    %v4638 = vunpack.c.l.b16 %v4108
    %v4639 = vunpack.c.l.b16 %v4109
    %v4640 = vunpack.c.l.b16 %v4110
    %v4641 = vunpack.c.l.b16 %v4111
    %v4642 = vunpack.c.l.b16 %v4112
    %v4643 = vunpack.c.l.b16 %v4113
    %v4644 = vunpack.c.l.b16 %v4114
    %v4645 = vunpack.c.l.b16 %v4115
    %v4646 = vunpack.c.l.b16 %v4116
    %v4647 = vunpack.c.l.b16 %v4117
    %v4648 = vunpack.c.l.b16 %v4118
    %v4649 = vunpack.c.l.b16 %v4119
    %v4650 = vunpack.c.l.b16 %v4120
    %v4651 = vunpack.c.l.b16 %v4121
    %v4652 = vunpack.c.l.b16 %v4122
    %v4653 = vunpack.c.l.b16 %v4123
    %v4654 = vunpack.c.l.b16 %v4124
    %v4655 = vunpack.c.l.b16 %v4125
    %v4656 = vunpack.c.l.b16 %v4126
    %v4657 = vunpack.c.l.b16 %v4127
    %v4658 = vunpack.c.l.b16 %v4128
    %v4659 = vunpack.c.l.b16 %v4129
    %v4660 = vunpack.c.l.b16 %v4130
    %v4661 = vunpack.c.l.b16 %v4131
    %v4662 = vunpack.c.l.b16 %v4132
    %v4663 = vunpack.c.l.b16 %v4133
    %v4664 = vunpack.c.l.b16 %v4134
    %v4665 = vunpack.c.l.b16 %v4135
    %v4666 = vunpack.c.l.b16 %v4136
    %v4667 = vunpack.c.l.b16 %v4137
    %v4668 = vunpack.c.l.b16 %v4138
    %v4669 = vunpack.c.l.b16 %v4139
    %v4670 = vunpack.c.l.b16 %v4140
    %v4671 = vunpack.c.l.b16 %v4141
    %v4672 = vunpack.c.l.b16 %v4142
    %v4673 = vunpack.c.l.b16 %v4143
    %v4674 = vunpack.c.l.b16 %v4144
    %v4675 = vunpack.c.l.b16 %v4145
    %v4676 = vunpack.c.l.b16 %v4146
    %v4677 = vunpack.c.l.b16 %v4147
    %v4678 = vunpack.c.l.b16 %v4148
    %v4679 = vunpack.c.l.b16 %v4149
    %v4680 = vunpack.c.l.b16 %v4150
    %v4681 = vunpack.c.l.b16 %v4151
    %v4682 = vunpack.c.l.b16 %v4152
    %v4683 = vunpack.c.l.b16 %v4153
    %v4684 = vunpack.c.l.b16 %v4154
    %v4685 = vunpack.c.l.b16 %v4155
    %v4686 = vunpack.c.l.b16 %v4156
    %v4687 = vunpack.c.l.b16 %v4157
    %v4688 = vunpack.c.l.b16 %v4158
    %v4689 = vunpack.c.l.b16 %v4159
    %v4690 = vunpack.c.l.b16 %v4160
    %v4691 = vunpack.c.l.b16 %v4161
    %v4692 = vunpack.c.l.b16 %v4162
    %v4693 = vunpack.c.l.b16 %v4163
    %v4694 = vunpack.c.l.b16 %v4164
    %v4695 = vunpack.c.l.b16 %v4165
    %v4696 = vunpack.c.l.b16 %v4166
    %v4697 = vunpack.c.l.b16 %v4167
    %v4698 = vunpack.c.l.b16 %v4168
    %v4699 = vunpack.c.l.b16 %v4169
    %v4700 = vunpack.c.l.b16 %v4170
    %v4701 = vunpack.c.l.b16 %v4171
    %v4702 = vunpack.c.l.b16 %v4172
    %v4703 = vunpack.c.l.b16 %v4173
    %v4704 = vunpack.c.l.b16 %v4174
    %v4705 = vunpack.c.l.b16 %v4175
    %v4706 = vunpack.c.l.b16 %v4176
    %v4707 = vunpack.c.l.b16 %v4177
    %v4708 = vunpack.c.l.b16 %v4178
    %v4709 = vunpack.c.l.b16 %v4179
    %v4710 = vunpack.c.l.b16 %v4180
    %v4711 = vunpack.c.l.b16 %v4181
    %v4712 = vunpack.c.l.b16 %v4182
    %v4713 = vunpack.c.l.b16 %v4183
    %v4714 = vunpack.c.l.b16 %v4184
    %v4715 = vunpack.c.l.b16 %v4185
    %v4716 = vunpack.c.l.b16 %v4186
    %v4717 = vunpack.c.l.b16 %v4187
    %v4718 = vunpack.c.l.b16 %v4188
    %v4719 = vunpack.c.l.b16 %v4189
    %v4720 = vunpack.c.l.b16 %v4190
    %v4721 = vunpack.c.l.b16 %v4191
    %v4722 = vunpack.c.l.b16 %v4192
    %v4723 = vunpack.c.l.b16 %v4193
    %v4724 = vunpack.c.l.b16 %v4194
    %v4725 = vunpack.c.l.b16 %v4195
    %v4726 = vunpack.c.l.b16 %v4196
    %v4727 = vunpack.c.l.b16 %v4197
    %v4728 = vunpack.c.l.b16 %v4198
    %v4729 = vunpack.c.l.b16 %v4199
    %v4730 = vunpack.c.l.b16 %v4200
    %v4731 = vunpack.c.l.b16 %v4201
    %v4732 = vunpack.c.l.b16 %v4202
    %v4733 = vunpack.c.l.b16 %v4203
    %v4734 = vunpack.c.l.b16 %v4204
    %v4735 = vunpack.c.l.b16 %v4205
    %v4736 = vunpack.c.l.b16 %v4206
    %v4737 = vunpack.c.l.b16 %v4207
    %v4738 = vunpack.c.l.b16 %v4208
    %v4739 = vunpack.c.l.b16 %v4209
    %v4740 = vunpack.c.l.b16 %v4210
    %v4741 = vunpack.c.l.b16 %v4211
    %v4742 = vunpack.c.l.b16 %v4212
    %v4743 = vunpack.c.l.b16 %v4213
    %v4744 = vunpack.c.l.b16 %v4214
    %v4745 = vunpack.c.l.b16 %v4215
    %v4746 = vunpack.c.l.b16 %v4216
    %v4747 = vunpack.c.l.b16 %v4217
    %v4748 = vunpack.c.l.b16 %v4218
    %v4749 = vunpack.c.l.b16 %v4219
    %v4750 = vunpack.c.l.b16 %v4220
    %v4751 = vunpack.c.l.b16 %v4221
    %v4752 = vunpack.c.l.b16 %v4222
    %v4753 = vunpack.c.l.b16 %v4223
    %v4754 = vunpack.c.l.b16 %v4224
    %v4755 = vunpack.c.l.b16 %v4225
    %v4756 = vunpack.c.l.b16 %v4226
    %v4757 = vunpack.c.l.b16 %v4227
    %v4758 = vunpack.c.l.b16 %v4228
    %v4759 = vunpack.c.l.b16 %v4229
    %v4760 = vpack.c.b16 %v4505, %v4504
    %v4761 = vpack.c.b16 %v4507, %v4506
    %v4762 = vpack.c.b16 %v4509, %v4508
    %v4763 = vpack.c.b16 %v4511, %v4510
    %v4764 = vpack.c.b16 %v4513, %v4512
    %v4765 = vpack.c.b16 %v4515, %v4514
    %v4766 = vpack.c.b16 %v4517, %v4516
    %v4767 = vpack.c.b16 %v4519, %v4518
    %v4768 = vpack.c.b16 %v4521, %v4520
    %v4769 = vpack.c.b16 %v4523, %v4522
    %v4770 = vpack.c.b16 %v4525, %v4524
    %v4771 = vpack.c.b16 %v4527, %v4526
    %v4772 = vpack.c.b16 %v4529, %v4528
    %v4773 = vpack.c.b16 %v4531, %v4530
    %v4774 = vpack.c.b16 %v4533, %v4532
    %v4775 = vpack.c.b16 %v4535, %v4534
    %v4776 = vpack.c.b16 %v4537, %v4536
    %v4777 = vpack.c.b16 %v4539, %v4538
    %v4778 = vpack.c.b16 %v4541, %v4540
    %v4779 = vpack.c.b16 %v4543, %v4542
    %v4780 = vpack.c.b16 %v4545, %v4544
    %v4781 = vpack.c.b16 %v4547, %v4546
    %v4782 = vpack.c.b16 %v4549, %v4548
    %v4783 = vpack.c.b16 %v4551, %v4550
    %v4784 = vpack.c.b16 %v4553, %v4552
    %v4785 = vpack.c.b16 %v4555, %v4554
    %v4786 = vpack.c.b16 %v4557, %v4556
    %v4787 = vpack.c.b16 %v4559, %v4558
    %v4788 = vpack.c.b16 %v4561, %v4560
    %v4789 = vpack.c.b16 %v4563, %v4562
    %v4790 = vpack.c.b16 %v4565, %v4564
    %v4791 = vpack.c.b16 %v4567, %v4566
    %v4792 = vpack.c.b16 %v4569, %v4568
    %v4793 = vpack.c.b16 %v4571, %v4570
    %v4794 = vpack.c.b16 %v4573, %v4572
    %v4795 = vpack.c.b16 %v4575, %v4574
    %v4796 = vpack.c.b16 %v4577, %v4576
    %v4797 = vpack.c.b16 %v4579, %v4578
    %v4798 = vpack.c.b16 %v4581, %v4580
    %v4799 = vpack.c.b16 %v4583, %v4582
    %v4800 = vpack.c.b16 %v4585, %v4584
    %v4801 = vpack.c.b16 %v4587, %v4586
    %v4802 = vpack.c.b16 %v4589, %v4588
    %v4803 = vpack.c.b16 %v4591, %v4590
    %v4804 = vpack.c.b16 %v4593, %v4592
    %v4805 = vpack.c.b16 %v4595, %v4594
    %v4806 = vpack.c.b16 %v4597, %v4596
    %v4807 = vpack.c.b16 %v4599, %v4598
    %v4808 = vpack.c.b16 %v4601, %v4600
    %v4809 = vpack.c.b16 %v4603, %v4602
    %v4810 = vpack.c.b16 %v4605, %v4604
    %v4811 = vpack.c.b16 %v4607, %v4606
    %v4812 = vpack.c.b16 %v4609, %v4608
    %v4813 = vpack.c.b16 %v4611, %v4610
    %v4814 = vpack.c.b16 %v4613, %v4612
    %v4815 = vpack.c.b16 %v4615, %v4614
    %v4816 = vpack.c.b16 %v4617, %v4616
    %v4817 = vpack.c.b16 %v4619, %v4618
    %v4818 = vpack.c.b16 %v4621, %v4620
    %v4819 = vpack.c.b16 %v4623, %v4622
    %v4820 = vpack.c.b16 %v4625, %v4624
    %v4821 = vpack.c.b16 %v4627, %v4626
    %v4822 = vpack.c.b16 %v4629, %v4628
    %v4823 = vpack.c.b16 %v4631, %v4630
    %v4824 = vpack.c.b16 %v4633, %v4632
    %v4825 = vpack.c.b16 %v4635, %v4634
    %v4826 = vpack.c.b16 %v4637, %v4636
    %v4827 = vpack.c.b16 %v4639, %v4638
    %v4828 = vpack.c.b16 %v4641, %v4640
    %v4829 = vpack.c.b16 %v4643, %v4642
    %v4830 = vpack.c.b16 %v4645, %v4644
    %v4831 = vpack.c.b16 %v4647, %v4646
    %v4832 = vpack.c.b16 %v4649, %v4648
    %v4833 = vpack.c.b16 %v4651, %v4650
    %v4834 = vpack.c.b16 %v4653, %v4652
    %v4835 = vpack.c.b16 %v4655, %v4654
    %v4836 = vpack.c.b16 %v4657, %v4656
    %v4837 = vpack.c.b16 %v4659, %v4658
    %v4838 = vpack.c.b16 %v4661, %v4660
    %v4839 = vpack.c.b16 %v4663, %v4662
    %v4840 = vpack.c.b16 %v4665, %v4664
    %v4841 = vpack.c.b16 %v4667, %v4666
    %v4842 = vpack.c.b16 %v4669, %v4668
    %v4843 = vpack.c.b16 %v4671, %v4670
    %v4844 = vpack.c.b16 %v4673, %v4672
    %v4845 = vpack.c.b16 %v4675, %v4674
    %v4846 = vpack.c.b16 %v4677, %v4676
    %v4847 = vpack.c.b16 %v4679, %v4678
    %v4848 = vpack.c.b16 %v4681, %v4680
    %v4849 = vpack.c.b16 %v4683, %v4682
    %v4850 = vpack.c.b16 %v4685, %v4684
    %v4851 = vpack.c.b16 %v4687, %v4686
    %v4852 = vpack.c.b16 %v4689, %v4688
    %v4853 = vpack.c.b16 %v4691, %v4690
    %v4854 = vpack.c.b16 %v4693, %v4692
    %v4855 = vpack.c.b16 %v4695, %v4694
    %v4856 = vpack.c.b16 %v4697, %v4696
    %v4857 = vpack.c.b16 %v4699, %v4698
    %v4858 = vpack.c.b16 %v4701, %v4700
    %v4859 = vpack.c.b16 %v4703, %v4702
    %v4860 = vpack.c.b16 %v4705, %v4704
    %v4861 = vpack.c.b16 %v4707, %v4706
    %v4862 = vpack.c.b16 %v4709, %v4708
    %v4863 = vpack.c.b16 %v4711, %v4710
    %v4864 = vpack.c.b16 %v4713, %v4712
    %v4865 = vpack.c.b16 %v4715, %v4714
    %v4866 = vpack.c.b16 %v4717, %v4716
    %v4867 = vpack.c.b16 %v4719, %v4718
    %v4868 = vpack.c.b16 %v4721, %v4720
    %v4869 = vpack.c.b16 %v4723, %v4722
    %v4870 = vpack.c.b16 %v4725, %v4724
    %v4871 = vpack.c.b16 %v4727, %v4726
    %v4872 = vpack.c.b16 %v4729, %v4728
    %v4873 = vpack.c.b16 %v4731, %v4730
    %v4874 = vpack.c.b16 %v4733, %v4732
    %v4875 = vpack.c.b16 %v4735, %v4734
    %v4876 = vpack.c.b16 %v4737, %v4736
    %v4877 = vpack.c.b16 %v4739, %v4738
    %v4878 = vpack.c.b16 %v4741, %v4740
    %v4879 = vpack.c.b16 %v4743, %v4742
    %v4880 = vpack.c.b16 %v4745, %v4744
    %v4881 = vpack.c.b16 %v4747, %v4746
    %v4882 = vpack.c.b16 %v4749, %v4748
    %v4883 = vpack.c.b16 %v4751, %v4750
    %v4884 = vpack.c.b16 %v4753, %v4752
    %v4885 = vpack.c.b16 %v4755, %v4754
    %v4886 = vpack.c.b16 %v4757, %v4756
    %v4887 = vpack.c.b16 %v4759, %v4758
    %5016 = vmatpush.bf16.msra.mxu0 %v4767
    %5017 = vmatpush.bf16.msra.mxu0 %v4766
    %5018 = vmatpush.bf16.msra.mxu0 %v4765
    %5019 = vmatpush.bf16.msra.mxu0 %v4764
    %5020 = vmatpush.bf16.msra.mxu0 %v4763
    %5021 = vmatpush.bf16.msra.mxu0 %v4762
    %5022 = vmatpush.bf16.msra.mxu0 %v4761
    %5023 = vmatpush.bf16.msra.mxu0 %v4760
    %5024 = vmatmul.bf16.gmra.mxu0 %v4230
    %v5025 = vpop.f32.mrf.mxu0
    %v5026 = vadd.f32 %v4247, %v5025
    %v5027 = vpop.f32.mrf.mxu0
    %v5028 = vadd.f32 %v4247, %v5027
    %5029 = vdwg.mxu0
    %5030 = vmatpush.bf16.msra.mxu0 %v4775
    %5031 = vmatpush.bf16.msra.mxu0 %v4774
    %5032 = vmatpush.bf16.msra.mxu0 %v4773
    %5033 = vmatpush.bf16.msra.mxu0 %v4772
    %5034 = vmatpush.bf16.msra.mxu0 %v4771
    %5035 = vmatpush.bf16.msra.mxu0 %v4770
    %5036 = vmatpush.bf16.msra.mxu0 %v4769
    %5037 = vmatpush.bf16.msra.mxu0 %v4768
    %5038 = vmatmul.bf16.gmra.mxu0 %v4231
    %v5039 = vpop.f32.mrf.mxu0
    %v5040 = vadd.f32 %v5026, %v5039
    %v5041 = vpop.f32.mrf.mxu0
    %v5042 = vadd.f32 %v5028, %v5041
    %5043 = vdwg.mxu0
    %5044 = vmatpush.bf16.msra.mxu0 %v4783
    %5045 = vmatpush.bf16.msra.mxu0 %v4782
    %5046 = vmatpush.bf16.msra.mxu0 %v4781
    %5047 = vmatpush.bf16.msra.mxu0 %v4780
    %5048 = vmatpush.bf16.msra.mxu0 %v4779
    %5049 = vmatpush.bf16.msra.mxu0 %v4778
    %5050 = vmatpush.bf16.msra.mxu0 %v4777
    %5051 = vmatpush.bf16.msra.mxu0 %v4776
    %5052 = vmatmul.bf16.gmra.mxu0 %v4232
    %v5053 = vpop.f32.mrf.mxu0
    %v5054 = vadd.f32 %v5040, %v5053
    %v5055 = vpop.f32.mrf.mxu0
    %v5056 = vadd.f32 %v5042, %v5055
    %5057 = vdwg.mxu0
    %5058 = vmatpush.bf16.msra.mxu0 %v4791
    %5059 = vmatpush.bf16.msra.mxu0 %v4790
    %5060 = vmatpush.bf16.msra.mxu0 %v4789
    %5061 = vmatpush.bf16.msra.mxu0 %v4788
    %5062 = vmatpush.bf16.msra.mxu0 %v4787
    %5063 = vmatpush.bf16.msra.mxu0 %v4786
    %5064 = vmatpush.bf16.msra.mxu0 %v4785
    %5065 = vmatpush.bf16.msra.mxu0 %v4784
    %5066 = vmatmul.bf16.gmra.mxu0 %v4233
    %v5067 = vpop.f32.mrf.mxu0
    %v5068 = vadd.f32 %v5054, %v5067
    %v5069 = vpop.f32.mrf.mxu0
    %v5070 = vadd.f32 %v5056, %v5069
    %5071 = vdwg.mxu0
    %5072 = vmatpush.bf16.msra.mxu0 %v4799
    %5073 = vmatpush.bf16.msra.mxu0 %v4798
    %5074 = vmatpush.bf16.msra.mxu0 %v4797
    %5075 = vmatpush.bf16.msra.mxu0 %v4796
    %5076 = vmatpush.bf16.msra.mxu0 %v4795
    %5077 = vmatpush.bf16.msra.mxu0 %v4794
    %5078 = vmatpush.bf16.msra.mxu0 %v4793
    %5079 = vmatpush.bf16.msra.mxu0 %v4792
    %5080 = vmatmul.bf16.gmra.mxu0 %v4234
    %v5081 = vpop.f32.mrf.mxu0
    %v5082 = vadd.f32 %v5068, %v5081
    %v5083 = vpop.f32.mrf.mxu0
    %v5084 = vadd.f32 %v5070, %v5083
    %5085 = vdwg.mxu0
    %5086 = vmatpush.bf16.msra.mxu0 %v4807
    %5087 = vmatpush.bf16.msra.mxu0 %v4806
    %5088 = vmatpush.bf16.msra.mxu0 %v4805
    %5089 = vmatpush.bf16.msra.mxu0 %v4804
    %5090 = vmatpush.bf16.msra.mxu0 %v4803
    %5091 = vmatpush.bf16.msra.mxu0 %v4802
    %5092 = vmatpush.bf16.msra.mxu0 %v4801
    %5093 = vmatpush.bf16.msra.mxu0 %v4800
    %5094 = vmatmul.bf16.gmra.mxu0 %v4235
    %v5095 = vpop.f32.mrf.mxu0
    %v5096 = vadd.f32 %v5082, %v5095
    %v5097 = vpop.f32.mrf.mxu0
    %v5098 = vadd.f32 %v5084, %v5097
    %5099 = vdwg.mxu0
    %5100 = vmatpush.bf16.msra.mxu0 %v4815
    %5101 = vmatpush.bf16.msra.mxu0 %v4814
    %5102 = vmatpush.bf16.msra.mxu0 %v4813
    %5103 = vmatpush.bf16.msra.mxu0 %v4812
    %5104 = vmatpush.bf16.msra.mxu0 %v4811
    %5105 = vmatpush.bf16.msra.mxu0 %v4810
    %5106 = vmatpush.bf16.msra.mxu0 %v4809
    %5107 = vmatpush.bf16.msra.mxu0 %v4808
    %5108 = vmatmul.bf16.gmra.mxu0 %v4236
    %v5109 = vpop.f32.mrf.mxu0
    %v5110 = vadd.f32 %v5096, %v5109
    %v5111 = vpop.f32.mrf.mxu0
    %v5112 = vadd.f32 %v5098, %v5111
    %5113 = vdwg.mxu0
    %5114 = vmatpush.bf16.msra.mxu0 %v4823
    %5115 = vmatpush.bf16.msra.mxu0 %v4822
    %5116 = vmatpush.bf16.msra.mxu0 %v4821
    %5117 = vmatpush.bf16.msra.mxu0 %v4820
    %5118 = vmatpush.bf16.msra.mxu0 %v4819
    %5119 = vmatpush.bf16.msra.mxu0 %v4818
    %5120 = vmatpush.bf16.msra.mxu0 %v4817
    %5121 = vmatpush.bf16.msra.mxu0 %v4816
    %5122 = vmatmul.bf16.gmra.mxu0 %v4237
    %v5123 = vpop.f32.mrf.mxu0
    %v5124 = vadd.f32 %v5110, %v5123
    %v5125 = vpop.f32.mrf.mxu0
    %v5126 = vadd.f32 %v5112, %v5125
    %5127 = vdwg.mxu0
    %5128 = vmatpush.bf16.msra.mxu0 %v4831
    %5129 = vmatpush.bf16.msra.mxu0 %v4830
    %5130 = vmatpush.bf16.msra.mxu0 %v4829
    %5131 = vmatpush.bf16.msra.mxu0 %v4828
    %5132 = vmatpush.bf16.msra.mxu0 %v4827
    %5133 = vmatpush.bf16.msra.mxu0 %v4826
    %5134 = vmatpush.bf16.msra.mxu0 %v4825
    %5135 = vmatpush.bf16.msra.mxu0 %v4824
    %5136 = vmatmul.bf16.gmra.mxu0 %v4238
    %v5137 = vpop.f32.mrf.mxu0
    %v5138 = vadd.f32 %v5124, %v5137
    %v5139 = vpop.f32.mrf.mxu0
    %v5140 = vadd.f32 %v5126, %v5139
    %5141 = vdwg.mxu0
    %5142 = vmatpush.bf16.msra.mxu0 %v4839
    %5143 = vmatpush.bf16.msra.mxu0 %v4838
    %5144 = vmatpush.bf16.msra.mxu0 %v4837
    %5145 = vmatpush.bf16.msra.mxu0 %v4836
    %5146 = vmatpush.bf16.msra.mxu0 %v4835
    %5147 = vmatpush.bf16.msra.mxu0 %v4834
    %5148 = vmatpush.bf16.msra.mxu0 %v4833
    %5149 = vmatpush.bf16.msra.mxu0 %v4832
    %5150 = vmatmul.bf16.gmra.mxu0 %v4239
    %v5151 = vpop.f32.mrf.mxu0
    %v5152 = vadd.f32 %v5138, %v5151
    %v5153 = vpop.f32.mrf.mxu0
    %v5154 = vadd.f32 %v5140, %v5153
    %5155 = vdwg.mxu0
    %5156 = vmatpush.bf16.msra.mxu0 %v4847
    %5157 = vmatpush.bf16.msra.mxu0 %v4846
    %5158 = vmatpush.bf16.msra.mxu0 %v4845
    %5159 = vmatpush.bf16.msra.mxu0 %v4844
    %5160 = vmatpush.bf16.msra.mxu0 %v4843
    %5161 = vmatpush.bf16.msra.mxu0 %v4842
    %5162 = vmatpush.bf16.msra.mxu0 %v4841
    %5163 = vmatpush.bf16.msra.mxu0 %v4840
    %5164 = vmatmul.bf16.gmra.mxu0 %v4240
    %v5165 = vpop.f32.mrf.mxu0
    %v5166 = vadd.f32 %v5152, %v5165
    %v5167 = vpop.f32.mrf.mxu0
    %v5168 = vadd.f32 %v5154, %v5167
    %5169 = vdwg.mxu0
    %5170 = vmatpush.bf16.msra.mxu0 %v4855
    %5171 = vmatpush.bf16.msra.mxu0 %v4854
    %5172 = vmatpush.bf16.msra.mxu0 %v4853
    %5173 = vmatpush.bf16.msra.mxu0 %v4852
    %5174 = vmatpush.bf16.msra.mxu0 %v4851
    %5175 = vmatpush.bf16.msra.mxu0 %v4850
    %5176 = vmatpush.bf16.msra.mxu0 %v4849
    %5177 = vmatpush.bf16.msra.mxu0 %v4848
    %5178 = vmatmul.bf16.gmra.mxu0 %v4241
    %v5179 = vpop.f32.mrf.mxu0
    %v5180 = vadd.f32 %v5166, %v5179
    %v5181 = vpop.f32.mrf.mxu0
    %v5182 = vadd.f32 %v5168, %v5181
    %5183 = vdwg.mxu0
    %5184 = vmatpush.bf16.msra.mxu0 %v4863
    %5185 = vmatpush.bf16.msra.mxu0 %v4862
    %5186 = vmatpush.bf16.msra.mxu0 %v4861
    %5187 = vmatpush.bf16.msra.mxu0 %v4860
    %5188 = vmatpush.bf16.msra.mxu0 %v4859
    %5189 = vmatpush.bf16.msra.mxu0 %v4858
    %5190 = vmatpush.bf16.msra.mxu0 %v4857
    %5191 = vmatpush.bf16.msra.mxu0 %v4856
    %5192 = vmatmul.bf16.gmra.mxu0 %v4242
    %v5193 = vpop.f32.mrf.mxu0
    %v5194 = vadd.f32 %v5180, %v5193
    %v5195 = vpop.f32.mrf.mxu0
    %v5196 = vadd.f32 %v5182, %v5195
    %5197 = vdwg.mxu0
    %5198 = vmatpush.bf16.msra.mxu0 %v4871
    %5199 = vmatpush.bf16.msra.mxu0 %v4870
    %5200 = vmatpush.bf16.msra.mxu0 %v4869
    %5201 = vmatpush.bf16.msra.mxu0 %v4868
    %5202 = vmatpush.bf16.msra.mxu0 %v4867
    %5203 = vmatpush.bf16.msra.mxu0 %v4866
    %5204 = vmatpush.bf16.msra.mxu0 %v4865
    %5205 = vmatpush.bf16.msra.mxu0 %v4864
    %5206 = vmatmul.bf16.gmra.mxu0 %v4243
    %v5207 = vpop.f32.mrf.mxu0
    %v5208 = vadd.f32 %v5194, %v5207
    %v5209 = vpop.f32.mrf.mxu0
    %v5210 = vadd.f32 %v5196, %v5209
    %5211 = vdwg.mxu0
    %5212 = vmatpush.bf16.msra.mxu0 %v4879
    %5213 = vmatpush.bf16.msra.mxu0 %v4878
    %5214 = vmatpush.bf16.msra.mxu0 %v4877
    %5215 = vmatpush.bf16.msra.mxu0 %v4876
    %5216 = vmatpush.bf16.msra.mxu0 %v4875
    %5217 = vmatpush.bf16.msra.mxu0 %v4874
    %5218 = vmatpush.bf16.msra.mxu0 %v4873
    %5219 = vmatpush.bf16.msra.mxu0 %v4872
    %5220 = vmatmul.bf16.gmra.mxu0 %v4244
    %v5221 = vpop.f32.mrf.mxu0
    %v5222 = vadd.f32 %v5208, %v5221
    %v5223 = vpop.f32.mrf.mxu0
    %v5224 = vadd.f32 %v5210, %v5223
    %5225 = vdwg.mxu0
    %5226 = vmatpush.bf16.msra.mxu0 %v4887
    %5227 = vmatpush.bf16.msra.mxu0 %v4886
    %5228 = vmatpush.bf16.msra.mxu0 %v4885
    %5229 = vmatpush.bf16.msra.mxu0 %v4884
    %5230 = vmatpush.bf16.msra.mxu0 %v4883
    %5231 = vmatpush.bf16.msra.mxu0 %v4882
    %5232 = vmatpush.bf16.msra.mxu0 %v4881
    %5233 = vmatpush.bf16.msra.mxu0 %v4880
    %5234 = vmatmul.bf16.gmra.mxu0 %v4245
    %v5235 = vpop.f32.mrf.mxu0
    %v5236 = vadd.f32 %v5222, %v5235
    %v5237 = vpop.f32.mrf.mxu0
    %v5238 = vadd.f32 %v5224, %v5237
    %5239 = vdwg.mxu0
    %v5240 = vadd.f32 %v2908, %v5236
    %v5241 = vadd.f32 %v2909, %v5238
    %v5242 = vld [vmem:[#allocation19 + $0xb] sm:$0x1]
    %v5243 = vld [vmem:[#allocation19 + $0xc] sm:$0x1]
    %5244 = vadd.xlane.f32.xlu0 %v5240
    %v5245 = vpop.xlane.xlu0 %5244
    %5246 = vadd.xlane.f32.xlu0 %v5241
    %v5247 = vpop.xlane.xlu0 %5246
    %v5248 = vmul.f32 %v5245, 0.010416667
    %v5249 = vmul.f32 %v5247, 0.010416667
    %v5250 = vsub.f32 %v5240, %v5248
    %v5251 = vsub.f32 %v5241, %v5249
    %v5252 = vmul.f32 %v5250, %v230
    %v5253 = vmul.f32 %v5251, %v230
    %v5254 = vmul.f32 %v5252, %v5252
    %v5255 = vmul.f32 %v5253, %v5253
    %5256 = vadd.xlane.f32.xlu0 %v5254
    %v5257 = vpop.xlane.xlu0 %5256
    %5258 = vadd.xlane.f32.xlu0 %v5255
    %v5259 = vpop.xlane.xlu0 %5258
    %v5260 = vmul.f32 %v5257, 0.010416667
    %v5261 = vmul.f32 %v5259, 0.010416667
    %v5262 = vadd.f32 %v5260, 1e-05
    %v5263 = vadd.f32 %v5261, 1e-05
    %v5264 = vrsqrt.pop %v5262
    %v5265 = vmul.f32 %v5264, %v5262
    %v5266 = vmul.f32 %v5265, %v5264
    %v5267 = vmul.f32 0.5, %v5266
    %v5268 = vsub.f32 1.5, %v5267
    %v5269 = vmul.f32 %v5264, %v5268
    %vm5270 = vweird.f32 %v5262
    %vm5271 = vweird.f32 %v5264
    %vm5272 = vmor %vm5270, %vm5271
    %v5273 = vsel %vm5272, %v5264, %v5269
    %v5274 = vrsqrt.pop %v5263
    %v5275 = vmul.f32 %v5274, %v5263
    %v5276 = vmul.f32 %v5275, %v5274
    %v5277 = vmul.f32 0.5, %v5276
    %v5278 = vsub.f32 1.5, %v5277
    %v5279 = vmul.f32 %v5274, %v5278
    %vm5280 = vweird.f32 %v5263
    %vm5281 = vweird.f32 %v5274
    %vm5282 = vmor %vm5280, %vm5281
    %v5283 = vsel %vm5282, %v5274, %v5279
    %v5284 = vmul.f32 %v5252, %v5273
    %v5285 = vmul.f32 %v5253, %v5283
    %v5286 = vperm.slane %v5242, 0
    %v5287 = vmul.f32 %v5284, %v5286
    %v5288 = vmul.f32 %v5285, %v5286
    %v5289 = vperm.slane %v5243, 0
    %v5290 = vadd.f32 %v5287, %v5289
    %v5291 = vadd.f32 %v5288, %v5289
    %v5292 = vld [vmem:[#allocation13] sm:$0xf]
    %v5293 = vld [vmem:[#allocation13 + $0x4] sm:$0xf]
    %v5294 = vld [vmem:[#allocation13 + $0x8] sm:$0xf]
    %v5295 = vld [vmem:[#allocation13 + $0xc] sm:$0xf]
    %v5296 = vld [vmem:[#allocation13 + $0x10] sm:$0xf]
    %v5297 = vld [vmem:[#allocation13 + $0x14] sm:$0xf]
    %v5298 = vld [vmem:[#allocation13 + $0x18] sm:$0xf]
    %v5299 = vld [vmem:[#allocation13 + $0x1c] sm:$0xf]
    %v5300 = vld [vmem:[#allocation13 + $0x20] sm:$0xf]
    %v5301 = vld [vmem:[#allocation13 + $0x24] sm:$0xf]
    %v5302 = vld [vmem:[#allocation13 + $0x28] sm:$0xf]
    %v5303 = vld [vmem:[#allocation13 + $0x2c] sm:$0xf]
    %v5304 = vld [vmem:[#allocation13 + $0x30] sm:$0xf]
    %v5305 = vld [vmem:[#allocation13 + $0x34] sm:$0xf]
    %v5306 = vld [vmem:[#allocation13 + $0x38] sm:$0xf]
    %v5307 = vld [vmem:[#allocation13 + $0x3c] sm:$0xf]
    %v5308 = vpack.c.bf16 %v5290, %v5290
    %v5309 = vld [vmem:[#allocation14] sm:$0xf]
    %v5310 = vld [vmem:[#allocation14 + $0x4] sm:$0xf]
    %v5311 = vld [vmem:[#allocation14 + $0x8] sm:$0xf]
    %v5312 = vld [vmem:[#allocation14 + $0xc] sm:$0xf]
    %v5313 = vld [vmem:[#allocation14 + $0x10] sm:$0xf]
    %v5314 = vld [vmem:[#allocation14 + $0x14] sm:$0xf]
    %v5315 = vld [vmem:[#allocation14 + $0x18] sm:$0xf]
    %v5316 = vld [vmem:[#allocation14 + $0x1c] sm:$0xf]
    %v5317 = vld [vmem:[#allocation14 + $0x20] sm:$0xf]
    %v5318 = vld [vmem:[#allocation14 + $0x24] sm:$0xf]
    %v5319 = vld [vmem:[#allocation14 + $0x28] sm:$0xf]
    %v5320 = vld [vmem:[#allocation14 + $0x2c] sm:$0xf]
    %v5321 = vld [vmem:[#allocation14 + $0x30] sm:$0xf]
    %v5322 = vld [vmem:[#allocation14 + $0x34] sm:$0xf]
    %v5323 = vld [vmem:[#allocation14 + $0x38] sm:$0xf]
    %v5324 = vld [vmem:[#allocation14 + $0x3c] sm:$0xf]
    %v5325 = vpack.c.bf16 %v5291, %v5291
    %v5342 = vunpack.c.l.b16 %v5309
    %v5343 = vunpack.c.l.b16 %v5310
    %v5344 = vunpack.c.l.b16 %v5311
    %v5345 = vunpack.c.l.b16 %v5312
    %v5346 = vunpack.c.l.b16 %v5313
    %v5347 = vunpack.c.l.b16 %v5314
    %v5348 = vunpack.c.l.b16 %v5315
    %v5349 = vunpack.c.l.b16 %v5316
    %v5350 = vunpack.c.l.b16 %v5317
    %v5351 = vunpack.c.l.b16 %v5318
    %v5352 = vunpack.c.l.b16 %v5319
    %v5353 = vunpack.c.l.b16 %v5320
    %v5354 = vunpack.c.l.b16 %v5321
    %v5355 = vunpack.c.l.b16 %v5322
    %v5356 = vunpack.c.l.b16 %v5323
    %v5357 = vunpack.c.l.b16 %v5324
    %v5358 = vpack.c.b16 %v5343, %v5342
    %v5359 = vpack.c.b16 %v5345, %v5344
    %v5360 = vpack.c.b16 %v5347, %v5346
    %v5361 = vpack.c.b16 %v5349, %v5348
    %v5362 = vpack.c.b16 %v5351, %v5350
    %v5363 = vpack.c.b16 %v5353, %v5352
    %v5364 = vpack.c.b16 %v5355, %v5354
    %v5365 = vpack.c.b16 %v5357, %v5356
    %5374 = vmatpush.bf16.msra.mxu0 %v5365
    %5375 = vmatpush.bf16.msra.mxu0 %v5364
    %5376 = vmatpush.bf16.msra.mxu0 %v5363
    %5377 = vmatpush.bf16.msra.mxu0 %v5362
    %5378 = vmatpush.bf16.msra.mxu0 %v5361
    %5379 = vmatpush.bf16.msra.mxu0 %v5360
    %5380 = vmatpush.bf16.msra.mxu0 %v5359
    %5381 = vmatpush.bf16.msra.mxu0 %v5358
    %5382 = vmatmul.bf16.gmra.mxu0 %v5325
    %v5383 = vpop.f32.mrf.mxu0
    %v5384 = vadd.f32 0.0, %v5383
    %v5385 = vpop.f32.mrf.mxu0
    %5386 = vdwg.mxu0
    %v5403 = vunpack.c.l.b16 %v5292
    %v5404 = vunpack.c.l.b16 %v5293
    %v5405 = vunpack.c.l.b16 %v5294
    %v5406 = vunpack.c.l.b16 %v5295
    %v5407 = vunpack.c.l.b16 %v5296
    %v5408 = vunpack.c.l.b16 %v5297
    %v5409 = vunpack.c.l.b16 %v5298
    %v5410 = vunpack.c.l.b16 %v5299
    %v5411 = vunpack.c.l.b16 %v5300
    %v5412 = vunpack.c.l.b16 %v5301
    %v5413 = vunpack.c.l.b16 %v5302
    %v5414 = vunpack.c.l.b16 %v5303
    %v5415 = vunpack.c.l.b16 %v5304
    %v5416 = vunpack.c.l.b16 %v5305
    %v5417 = vunpack.c.l.b16 %v5306
    %v5418 = vunpack.c.l.b16 %v5307
    %v5419 = vpack.c.b16 %v5404, %v5403
    %v5420 = vpack.c.b16 %v5406, %v5405
    %v5421 = vpack.c.b16 %v5408, %v5407
    %v5422 = vpack.c.b16 %v5410, %v5409
    %v5423 = vpack.c.b16 %v5412, %v5411
    %v5424 = vpack.c.b16 %v5414, %v5413
    %v5425 = vpack.c.b16 %v5416, %v5415
    %v5426 = vpack.c.b16 %v5418, %v5417
    %5435 = vmatpush.bf16.msra.mxu0 %v5426
    %5436 = vmatpush.bf16.msra.mxu0 %v5425
    %5437 = vmatpush.bf16.msra.mxu0 %v5424
    %5438 = vmatpush.bf16.msra.mxu0 %v5423
    %5439 = vmatpush.bf16.msra.mxu0 %v5422
    %5440 = vmatpush.bf16.msra.mxu0 %v5421
    %5441 = vmatpush.bf16.msra.mxu0 %v5420
    %5442 = vmatpush.bf16.msra.mxu0 %v5419
    %5443 = vmatmul.bf16.gmra.mxu0 %v5308
    %v5444 = vpop.f32.mrf.mxu0
    %v5445 = vadd.f32 %v5384, %v5444
    %v5446 = vpop.f32.mrf.mxu0
    %5447 = vdwg.mxu0
    %v5448 = vld [vmem:[#allocation19 + $0xd] sm:$0x1]
    %v5449 = vperm.slane %v5448, 0
    %v5450 = vadd.f32 %v5445, %v5449
    %v5451 = vmax.f32 %v5450, 0.0
    %v5452 = vld [vmem:[#allocation16] sm:$0xf]
    %v5453 = vld [vmem:[#allocation16 + $0x4] sm:$0xf]
    %v5454 = vld [vmem:[#allocation16 + $0x8] sm:$0xf]
    %v5455 = vld [vmem:[#allocation16 + $0xc] sm:$0xf]
    %v5456 = vld [vmem:[#allocation16 + $0x10] sm:$0xf]
    %v5457 = vld [vmem:[#allocation16 + $0x14] sm:$0xf]
    %v5458 = vld [vmem:[#allocation16 + $0x18] sm:$0xf]
    %v5459 = vld [vmem:[#allocation16 + $0x1c] sm:$0xf]
    %v5460 = vld [vmem:[#allocation16 + $0x20] sm:$0xf]
    %v5461 = vld [vmem:[#allocation16 + $0x24] sm:$0xf]
    %v5462 = vld [vmem:[#allocation16 + $0x28] sm:$0xf]
    %v5463 = vld [vmem:[#allocation16 + $0x2c] sm:$0xf]
    %v5464 = vld [vmem:[#allocation16 + $0x30] sm:$0xf]
    %v5465 = vld [vmem:[#allocation16 + $0x34] sm:$0xf]
    %v5466 = vld [vmem:[#allocation16 + $0x38] sm:$0xf]
    %v5467 = vld [vmem:[#allocation16 + $0x3c] sm:$0xf]
    %v5468 = vpack.c.bf16 %v5451, %v5451
    %v5469 = vld [vmem:[#allocation19 + $0xe] sm:$0x1]
    %v5470 = vperm.slane %v5469, 0
    %v5487 = vunpack.c.l.b16 %v5452
    %v5488 = vunpack.c.l.b16 %v5453
    %v5489 = vunpack.c.l.b16 %v5454
    %v5490 = vunpack.c.l.b16 %v5455
    %v5491 = vunpack.c.l.b16 %v5456
    %v5492 = vunpack.c.l.b16 %v5457
    %v5493 = vunpack.c.l.b16 %v5458
    %v5494 = vunpack.c.l.b16 %v5459
    %v5495 = vunpack.c.l.b16 %v5460
    %v5496 = vunpack.c.l.b16 %v5461
    %v5497 = vunpack.c.l.b16 %v5462
    %v5498 = vunpack.c.l.b16 %v5463
    %v5499 = vunpack.c.l.b16 %v5464
    %v5500 = vunpack.c.l.b16 %v5465
    %v5501 = vunpack.c.l.b16 %v5466
    %v5502 = vunpack.c.l.b16 %v5467
    %v5503 = vpack.c.b16 %v5488, %v5487
    %v5504 = vpack.c.b16 %v5490, %v5489
    %v5505 = vpack.c.b16 %v5492, %v5491
    %v5506 = vpack.c.b16 %v5494, %v5493
    %v5507 = vpack.c.b16 %v5496, %v5495
    %v5508 = vpack.c.b16 %v5498, %v5497
    %v5509 = vpack.c.b16 %v5500, %v5499
    %v5510 = vpack.c.b16 %v5502, %v5501
    %5519 = vmatpush.bf16.msra.mxu0 %v5510
    %5520 = vmatpush.bf16.msra.mxu0 %v5509
    %5521 = vmatpush.bf16.msra.mxu0 %v5508
    %5522 = vmatpush.bf16.msra.mxu0 %v5507
    %5523 = vmatpush.bf16.msra.mxu0 %v5506
    %5524 = vmatpush.bf16.msra.mxu0 %v5505
    %5525 = vmatpush.bf16.msra.mxu0 %v5504
    %5526 = vmatpush.bf16.msra.mxu0 %v5503
    %5527 = vmatmul.bf16.gmra.mxu0 %v5468
    %v5528 = vpop.f32.mrf.mxu0
    %v5529 = vadd.f32 %v5470, %v5528
    %v5530 = vpop.f32.mrf.mxu0
    %5531 = vdwg.mxu0
    %v5532 = vmax.f32 %v5529, 0.0
    %v5533 = vld [vmem:[#allocation17] sm:$0xf]
    %v5534 = vld [vmem:[#allocation17 + $0x4] sm:$0xf]
    %v5535 = vld [vmem:[#allocation17 + $0x8] sm:$0xf]
    %v5536 = vld [vmem:[#allocation17 + $0xc] sm:$0xf]
    %v5537 = vld [vmem:[#allocation17 + $0x10] sm:$0xf]
    %v5538 = vld [vmem:[#allocation17 + $0x14] sm:$0xf]
    %v5539 = vld [vmem:[#allocation17 + $0x18] sm:$0xf]
    %v5540 = vld [vmem:[#allocation17 + $0x1c] sm:$0xf]
    %v5541 = vld [vmem:[#allocation17 + $0x20] sm:$0xf]
    %v5542 = vld [vmem:[#allocation17 + $0x24] sm:$0xf]
    %v5543 = vld [vmem:[#allocation17 + $0x28] sm:$0xf]
    %v5544 = vld [vmem:[#allocation17 + $0x2c] sm:$0xf]
    %v5545 = vld [vmem:[#allocation17 + $0x30] sm:$0xf]
    %v5546 = vld [vmem:[#allocation17 + $0x34] sm:$0xf]
    %v5547 = vld [vmem:[#allocation17 + $0x38] sm:$0xf]
    %v5548 = vld [vmem:[#allocation17 + $0x3c] sm:$0xf]
    %v5549 = vpack.c.bf16 %v5532, %v5532
    %v5550 = vld [vmem:[#allocation19 + $0xf] sm:$0x1]
    %v5551 = vperm.slane %v5550, 0
    %v5568 = vunpack.c.l.b16 %v5533
    %v5569 = vunpack.c.l.b16 %v5534
    %v5570 = vunpack.c.l.b16 %v5535
    %v5571 = vunpack.c.l.b16 %v5536
    %v5572 = vunpack.c.l.b16 %v5537
    %v5573 = vunpack.c.l.b16 %v5538
    %v5574 = vunpack.c.l.b16 %v5539
    %v5575 = vunpack.c.l.b16 %v5540
    %v5576 = vunpack.c.l.b16 %v5541
    %v5577 = vunpack.c.l.b16 %v5542
    %v5578 = vunpack.c.l.b16 %v5543
    %v5579 = vunpack.c.l.b16 %v5544
    %v5580 = vunpack.c.l.b16 %v5545
    %v5581 = vunpack.c.l.b16 %v5546
    %v5582 = vunpack.c.l.b16 %v5547
    %v5583 = vunpack.c.l.b16 %v5548
    %v5584 = vpack.c.b16 %v5569, %v5568
    %v5585 = vpack.c.b16 %v5571, %v5570
    %v5586 = vpack.c.b16 %v5573, %v5572
    %v5587 = vpack.c.b16 %v5575, %v5574
    %v5588 = vpack.c.b16 %v5577, %v5576
    %v5589 = vpack.c.b16 %v5579, %v5578
    %v5590 = vpack.c.b16 %v5581, %v5580
    %v5591 = vpack.c.b16 %v5583, %v5582
    %5600 = vmatpush.bf16.msra.mxu0 %v5591
    %5601 = vmatpush.bf16.msra.mxu0 %v5590
    %5602 = vmatpush.bf16.msra.mxu0 %v5589
    %5603 = vmatpush.bf16.msra.mxu0 %v5588
    %5604 = vmatpush.bf16.msra.mxu0 %v5587
    %5605 = vmatpush.bf16.msra.mxu0 %v5586
    %5606 = vmatpush.bf16.msra.mxu0 %v5585
    %5607 = vmatpush.bf16.msra.mxu0 %v5584
    %5608 = vmatmul.bf16.gmra.mxu0 %v5549
    %v5609 = vpop.f32.mrf.mxu0
    %v5610 = vadd.f32 %v5551, %v5609
    %v5611 = vpop.f32.mrf.mxu0
    %5612 = vdwg.mxu0
    %5613 = vst [vmem:[#allocation22] sm:$0xff] %v5610
    // Predicated region
    $region98: #{tpu_custom_call.1} parent=1 // pred_check
      _
    $region99: #{tpu_custom_call.1} parent=1 // pred_check_branch
      %5615 = sbr.rel (0) target = $region101
    $region100: #{tpu_custom_call.1} parent=1 // pred_region
      %5617 = vsyncadd [#allocation4], 0
      %s5619 = sshll.u32 [#allocation22], 4
      %s5620 = int_to_ptr.vmem [resolvable:$true] %s5619
      %s5621 = sshll.u32 %s12, 4
      %s5622 = int_to_ptr.hbm [resolvable:$true] %s5621
      %5624 = dma.vmem_to_hbm [thread:$0]  %s5620, 128, %s5622, [#allocation4]
    $region101: #{tpu_custom_call.1} parent=1 // pred_fallthru
      _
    // Predicated region
    $region102: #{tpu_custom_call.1} parent=1 // pred_check
      _
    $region103: #{tpu_custom_call.1} parent=1 // pred_check_branch
      %5626 = sbr.rel (0) target = $region105
    $region104: #{tpu_custom_call.1} parent=1 // pred_region
      %5628 = dma.done [#allocation4], 128
    $region105: #{tpu_custom_call.1} parent=1 // pred_fallthru
      _
    %5629 = vsyncpa [#allocation3], 1
    %5630 = vsyncpa [#allocation6], 1
    %5631 = vsyncpa [#allocation9], 1
    %5632 = vsyncpa [#allocation12], 1
    %5633 = vsyncpa [#allocation15], 1
    %5634 = vsyncpa [#allocation18], 1
    %5635 = vsyncpa [#allocation21], 1
    %5636 = vsyncpa [#allocation4], 1

</llo_original>
